<compile_context>
chip_gen: v7x
topology: tpu7x:2x2x1
jax: 0.10.0
libtpu: 0.0.40
codegen_flags: <defaults>
</compile_context>

<pallas_src>
import functools

import numpy as np
import jax
import jax.numpy as jnp
from jax.experimental import pallas as pl
from jax.experimental.pallas import tpu as pltpu

LAYERS = [3, 32, 32, 2]
N_RES_BLOCKS = 3
BN_EPS = 1e-5
IN_DIM = LAYERS[0]
OUT_PAD = 8  # pad head output rows to a full sublane group
FREQS = tuple(float(v) for v in np.linspace(0.0, 10.0, IN_DIM))  # (0, 5, 10)


# ----------------------------------------------------------------------------
# Pallas kernel: positional encoding + whole MLP, one batch tile per grid step
# ----------------------------------------------------------------------------
def make_npinn_kernel(compute_dtype):
    """compute_dtype: dtype for elementwise (GELU / residual) math.
    bf16 on v6e/v7x (bf16 VPU/EUP), f32 on v5-class chips."""
    cdt = compute_dtype

    def npinn_kernel(coords_ref, w0_ref, b0_ref, ws_ref, bs_ref, wo_ref,
                     bo_ref, out_ref):
        f32 = jnp.float32
        bf16 = jnp.bfloat16

        coords = coords_ref[...]                      # (3, TM) f32, lane-dense
        x_row = coords[0:1, :]
        y_row = coords[1:2, :]
        t_row = coords[2:3, :]

        def gelu(v):
            # tanh-approximate GELU (EUP push); ~1e-3 off torch's exact-erf.
            c = 0.7978845608028654  # sqrt(2/pi)
            return 0.5 * v * (1.0 + jnp.tanh(c * (v + 0.044715 * v * v * v)))

        def linear(w_bf16, b, h):
            # feature-major linear: (out,in)@(in,TM) + (out,1); bf16 MXU,
            # f32 accumulation.  h may already be bf16 (no-op cast then).
            return jnp.dot(w_bf16, h.astype(bf16),
                           preferred_element_type=f32) + b

        # --- positional encoding (freq = (0, 5, 10) baked in) ----------------
        # pos[:, c] = (sin(f_c*x) + sin(f_c*y) + sin(f_c*t)) / 3; the f=0
        # column is identically zero, so only two sins over the whole (3, TM)
        # block are needed (vs nine single-row sins).
        third = 1.0 / 3.0
        s1 = jnp.sin(coords * FREQS[1])               # (3, TM)
        s2 = jnp.sin(coords * FREQS[2])               # (3, TM)
        pos1 = (s1[0:1, :] + s1[1:2, :] + s1[2:3, :]) * third
        pos2 = (s2[0:1, :] + s2[1:2, :] + s2[2:3, :]) * third
        inp0 = x_row                                  # + 0 (f=0 column)
        inp1 = y_row + pos1
        inp2 = t_row + pos2

        # --- stem: Linear(3->H) [BN folded] + GELU ---------------------------
        # Degenerate K=3 matmul done as 3 outer-product FMAs on the VPU.
        w0 = w0_ref[...]                              # (H, 3) f32
        h = (b0_ref[...]
             + w0[:, 0:1] * inp0
             + w0[:, 1:2] * inp1
             + w0[:, 2:3] * inp2)                     # (H, TM) f32
        h = gelu(h.astype(cdt))

        # --- 3 ResBlocks (weights stacked in slots 0..5) ---------------------
        for r in range(N_RES_BLOCKS):
            z = gelu(linear(ws_ref[2 * r], bs_ref[2 * r], h).astype(cdt))
            z = linear(ws_ref[2 * r + 1], bs_ref[2 * r + 1], z).astype(cdt)
            h = gelu(h + z)

        # --- mid: Linear(H->H) [BN folded] + GELU (slot 6) -------------------
        h = gelu(linear(ws_ref[2 * N_RES_BLOCKS],
                        bs_ref[2 * N_RES_BLOCKS], h).astype(cdt))

        # --- head: Linear(H->2) zero-padded to 8 rows -> unmasked stores -----
        out_ref[...] = linear(wo_ref[...], bo_ref[...], h).astype(out_ref.dtype)

    return npinn_kernel


# ----------------------------------------------------------------------------
# Parameter construction (deterministic, mirrors torch init; (out, in) layout)
# ----------------------------------------------------------------------------
def init_params(key, layers=LAYERS):
    in_dim, H, H2, out_dim = layers
    assert H == H2, "ResBlock dim must match layers[1]==layers[2]"

    def xavier(k, fan_in, fan_out):
        bound = float(np.sqrt(6.0 / (fan_in + fan_out)))
        return jax.random.uniform(k, (fan_out, fan_in), jnp.float32,
                                  -bound, bound)               # (out, in)

    bn_scale = jnp.float32(1.0 / np.sqrt(1.0 + BN_EPS))  # eval-mode BN fold

    keys = jax.random.split(key, 2 + 2 * N_RES_BLOCKS + 2)
    ki = 0

    w0 = xavier(keys[ki], in_dim, H) * bn_scale; ki += 1        # (H, 3) f32
    b0 = jnp.zeros((H, 1), jnp.float32)

    ws, bs = [], []
    for _ in range(N_RES_BLOCKS):
        for _ in range(2):
            ws.append(xavier(keys[ki], H, H) * bn_scale); ki += 1
            bs.append(jnp.zeros((H, 1), jnp.float32))
    # mid layer (loop `for i in range(1, len(layers)-2)` -> one Linear(H->H))
    ws.append(xavier(keys[ki], H, H) * bn_scale); ki += 1
    bs.append(jnp.zeros((H, 1), jnp.float32))

    wo = xavier(keys[ki], H, out_dim); ki += 1                  # (2, H), no BN
    bo = jnp.zeros((out_dim, 1), jnp.float32)

    return dict(
        w0=w0,                                    # f32 (VPU stem path)
        b0=b0,                                    # (H, 1) f32
        ws=jnp.stack(ws).astype(jnp.bfloat16),    # (7, H, H) bf16 MXU weights
        bs=jnp.stack(bs),                         # (7, H, 1) f32
        wo=wo.astype(jnp.bfloat16),               # (2, H) bf16
        bo=bo,                                    # (2, 1) f32
    )


# ----------------------------------------------------------------------------
# Generation-aware configuration
# ----------------------------------------------------------------------------
def _device_info():
    kind = ""
    try:
        kind = jax.devices()[0].device_kind.lower()
    except Exception:
        pass
    # v5-and-older VPUs/EUPs lack packed bf16 -> keep elementwise math in f32.
    no_bf16_vpu = any(tag in kind for tag in ("v2", "v3", "v4", "v5"))
    # v7x has 2 TensorCores per chip; v5e/v6e have 1 (grid is a serial loop).
    num_tc = 2 if "v7" in kind else 1
    return no_bf16_vpu, num_tc


def _pick_tile_m(N, tile_m, num_tc):
    assert N % 128 == 0, "batch must be a multiple of 128"
    if num_tc <= 1:
        # Single TC: grid is a serial loop -> take the largest tile (fewest
        # per-step overheads).  VMEM is not a constraint for this network.
        cap = N
    else:
        # Multi-TC: keep >= 2 blocks per core so both cores are busy and the
        # input/output double-buffering has something to pipeline.
        min_blocks = 2 * num_tc if N >= 2 * num_tc * 128 else num_tc
        cap = max(128, ((N // min_blocks) // 128) * 128)
    tile = max(128, min(tile_m, cap, N))
    while N % tile:
        tile -= 128
    return tile


# ----------------------------------------------------------------------------
# pallas_call wrapper
# ----------------------------------------------------------------------------
def npinn_forward(params, x, y, t, tile_m=4096):
    N = x.shape[0]
    no_bf16_vpu, num_tc = _device_info()
    tm = _pick_tile_m(N, tile_m, num_tc)
    compute_dtype = jnp.float32 if no_bf16_vpu else jnp.bfloat16

    H = params["w0"].shape[0]
    out_dim = params["wo"].shape[0]

    # Lane-dense packed coordinates without a strided transpose:
    # (N,1)->(1,N) reshapes are free, axis-0 concat is contiguous copies.
    coords = jnp.concatenate(
        [x.reshape(1, -1), y.reshape(1, -1), t.reshape(1, -1)],
        axis=0).astype(jnp.float32)                             # (3, N)

    # Zero-pad the head to 8 output rows -> full-sublane (unmasked) stores.
    wo_pad = jnp.zeros((OUT_PAD, H), jnp.bfloat16).at[:out_dim].set(params["wo"])
    bo_pad = jnp.zeros((OUT_PAD, 1), jnp.float32).at[:out_dim].set(params["bo"])

    kernel = make_npinn_kernel(compute_dtype)

    out = pl.pallas_call(
        kernel,
        out_shape=jax.ShapeDtypeStruct((OUT_PAD, N), jnp.float32),
        grid_spec=pltpu.PrefetchScalarGridSpec(
            num_scalar_prefetch=0,
            grid=(N // tm,),
            in_specs=[
                pl.BlockSpec((3, tm), lambda i: (0, i)),            # coords
                pl.BlockSpec(params["w0"].shape, lambda i: (0, 0)),
                pl.BlockSpec(params["b0"].shape, lambda i: (0, 0)),
                pl.BlockSpec(params["ws"].shape, lambda i: (0, 0, 0)),
                pl.BlockSpec(params["bs"].shape, lambda i: (0, 0, 0)),
                pl.BlockSpec(wo_pad.shape, lambda i: (0, 0)),
                pl.BlockSpec(bo_pad.shape, lambda i: (0, 0)),
            ],
            out_specs=pl.BlockSpec((OUT_PAD, tm), lambda i: (0, i)),
        ),
        compiler_params=pltpu.CompilerParams(
            dimension_semantics=("parallel",)),
    )(coords, params["w0"], params["b0"], params["ws"], params["bs"],
      wo_pad, bo_pad)

    # net_A interface: (A_r, A_i), each (N, 1).
    return out[0:1, :].T, out[1:2, :].T


# ----------------------------------------------------------------------------
# Pure-JAX reference (exact-erf GELU, f32 matmuls) = PyTorch eval-mode math
# ----------------------------------------------------------------------------
def npinn_forward_ref(params, x, y, t):
    f32 = jnp.float32
    freq = jnp.asarray(FREQS, f32)[None, :]                     # (1, 3)
    gelu = lambda v: 0.5 * v * (1.0 + jax.lax.erf(v / np.sqrt(2.0)))

    pos = (jnp.sin(x * freq) + jnp.sin(y * freq) + jnp.sin(t * freq)) / 3.0
    h = jnp.concatenate([x, y, t], axis=1) + pos                # (N, 3)

    def lin(w, b, v):   # row-major mirror of torch: v @ W.T + b
        return v @ w.astype(f32).T + b[:, 0][None, :]

    h = gelu(lin(params["w0"], params["b0"], h))
    for r in range(N_RES_BLOCKS):
        z = gelu(lin(params["ws"][2 * r], params["bs"][2 * r], h))
        z = lin(params["ws"][2 * r + 1], params["bs"][2 * r + 1], z)
        h = gelu(h + z)
    h = gelu(lin(params["ws"][2 * N_RES_BLOCKS],
                 params["bs"][2 * N_RES_BLOCKS], h))
    out = lin(params["wo"], params["bo"], h)
    return out[:, 0:1], out[:, 1:2]


if __name__ == "__main__":
    key = jax.random.PRNGKey(0)
    kp, kx, ky, kt = jax.random.split(key, 4)

    params = init_params(kp)

    N = 1024   # collocation / data batch (train_model uses batch_size=1024)
    x = jax.random.uniform(kx, (N, 1), jnp.float32, 0.0, 1.0)
    y = jax.random.uniform(ky, (N, 1), jnp.float32, 0.0, 1.0)
    t = jax.random.uniform(kt, (N, 1), jnp.float32, 0.0, 1.0)

    A_r, A_i = npinn_forward(params, x, y, t)
    jax.block_until_ready(A_r)
    jax.block_until_ready(A_i)

    A_r_ref, A_i_ref = npinn_forward_ref(params, x, y, t)
    # Tolerance budget: bf16 MXU inputs (f32 accumulation), bf16 elementwise
    # activations on v6e/v7x, and tanh-GELU vs the exact-erf f32 reference;
    # observed deviation is ~1e-3..1e-2 scale.
    np.testing.assert_allclose(np.asarray(A_r), np.asarray(A_r_ref),
                               rtol=2e-2, atol=3e-2)
    np.testing.assert_allclose(np.asarray(A_i), np.asarray(A_i_ref),
                               rtol=2e-2, atol=3e-2)

    print("KERNEL_OK")
</pallas_src>

<mosaic_0001>
module attributes {stable_mosaic.version = 11 : i64} {
  func.func @npinn_kernel(%arg0: i32, %arg1: memref<3x1024xf32, #tpu.memory_space<vmem>>, %arg2: memref<32x3xf32, #tpu.memory_space<vmem>>, %arg3: memref<32x1xf32, #tpu.memory_space<vmem>>, %arg4: memref<7x32x32xbf16, #tpu.memory_space<vmem>>, %arg5: memref<7x32x1xf32, #tpu.memory_space<vmem>>, %arg6: memref<8x32xbf16, #tpu.memory_space<vmem>>, %arg7: memref<8x1xf32, #tpu.memory_space<vmem>>, %arg8: memref<8x1024xf32, #tpu.memory_space<vmem>>) attributes {dimension_semantics = [#tpu.dimension_semantics<parallel>], iteration_bounds = array<i64: 1>, scalar_prefetch = 0 : i64, scratch_operands = 0 : i64, tpu.core_type = #tpu.core_type<tc>, window_params = [{transform_indices = @transform_0, window_bounds = array<i64: 3, 1024>}, {pipeline_mode = #tpu.pipeline_mode<synchronous>, transform_indices = @transform_1, window_bounds = array<i64: 32, 3>}, {pipeline_mode = #tpu.pipeline_mode<synchronous>, transform_indices = @transform_2, window_bounds = array<i64: 32, 1>}, {pipeline_mode = #tpu.pipeline_mode<synchronous>, transform_indices = @transform_3, window_bounds = array<i64: 7, 32, 32>}, {pipeline_mode = #tpu.pipeline_mode<synchronous>, transform_indices = @transform_4, window_bounds = array<i64: 7, 32, 1>}, {pipeline_mode = #tpu.pipeline_mode<synchronous>, transform_indices = @transform_5, window_bounds = array<i64: 8, 32>}, {pipeline_mode = #tpu.pipeline_mode<synchronous>, transform_indices = @transform_6, window_bounds = array<i64: 8, 1>}, {transform_indices = @transform_7, window_bounds = array<i64: 8, 1024>}]} {
    %c0 = arith.constant 0 : index
    %c0_0 = arith.constant 0 : index
    %0 = vector.load %arg1[%c0, %c0_0] : memref<3x1024xf32, #tpu.memory_space<vmem>>, vector<3x1024xf32>
    %1 = vector.extract_strided_slice %0 {offsets = [0, 0], sizes = [1, 1024], strides = [1, 1]} : vector<3x1024xf32> to vector<1x1024xf32>
    %2 = vector.extract_strided_slice %0 {offsets = [1, 0], sizes = [1, 1024], strides = [1, 1]} : vector<3x1024xf32> to vector<1x1024xf32>
    %3 = vector.extract_strided_slice %0 {offsets = [2, 0], sizes = [1, 1024], strides = [1, 1]} : vector<3x1024xf32> to vector<1x1024xf32>
    %cst = arith.constant 5.000000e+00 : f32
    %4 = vector.broadcast %cst : f32 to vector<3x1024xf32>
    %5 = arith.mulf %0, %4 : vector<3x1024xf32>
    %6 = math.sin %5 : vector<3x1024xf32>
    %cst_1 = arith.constant 1.000000e+01 : f32
    %7 = vector.broadcast %cst_1 : f32 to vector<3x1024xf32>
    %8 = arith.mulf %0, %7 : vector<3x1024xf32>
    %9 = math.sin %8 : vector<3x1024xf32>
    %10 = vector.extract_strided_slice %6 {offsets = [0, 0], sizes = [1, 1024], strides = [1, 1]} : vector<3x1024xf32> to vector<1x1024xf32>
    %11 = vector.extract_strided_slice %6 {offsets = [1, 0], sizes = [1, 1024], strides = [1, 1]} : vector<3x1024xf32> to vector<1x1024xf32>
    %12 = arith.addf %10, %11 : vector<1x1024xf32>
    %13 = vector.extract_strided_slice %6 {offsets = [2, 0], sizes = [1, 1024], strides = [1, 1]} : vector<3x1024xf32> to vector<1x1024xf32>
    %14 = arith.addf %12, %13 : vector<1x1024xf32>
    %cst_2 = arith.constant 0.333333343 : f32
    %15 = vector.broadcast %cst_2 : f32 to vector<1x1024xf32>
    %16 = arith.mulf %14, %15 : vector<1x1024xf32>
    %17 = vector.extract_strided_slice %9 {offsets = [0, 0], sizes = [1, 1024], strides = [1, 1]} : vector<3x1024xf32> to vector<1x1024xf32>
    %18 = vector.extract_strided_slice %9 {offsets = [1, 0], sizes = [1, 1024], strides = [1, 1]} : vector<3x1024xf32> to vector<1x1024xf32>
    %19 = arith.addf %17, %18 : vector<1x1024xf32>
    %20 = vector.extract_strided_slice %9 {offsets = [2, 0], sizes = [1, 1024], strides = [1, 1]} : vector<3x1024xf32> to vector<1x1024xf32>
    %21 = arith.addf %19, %20 : vector<1x1024xf32>
    %cst_3 = arith.constant 0.333333343 : f32
    %22 = vector.broadcast %cst_3 : f32 to vector<1x1024xf32>
    %23 = arith.mulf %21, %22 : vector<1x1024xf32>
    %24 = arith.addf %2, %16 : vector<1x1024xf32>
    %25 = arith.addf %3, %23 : vector<1x1024xf32>
    %c0_4 = arith.constant 0 : index
    %c0_5 = arith.constant 0 : index
    %26 = vector.load %arg2[%c0_4, %c0_5] : memref<32x3xf32, #tpu.memory_space<vmem>>, vector<32x3xf32>
    %c0_6 = arith.constant 0 : index
    %c0_7 = arith.constant 0 : index
    %27 = vector.load %arg3[%c0_6, %c0_7] : memref<32x1xf32, #tpu.memory_space<vmem>>, vector<32x1xf32>
    %28 = vector.extract_strided_slice %26 {offsets = [0, 0], sizes = [32, 1], strides = [1, 1]} : vector<32x3xf32> to vector<32x1xf32>
    %29 = vector.broadcast %28 : vector<32x1xf32> to vector<32x1024xf32>
    %30 = vector.broadcast %1 : vector<1x1024xf32> to vector<32x1024xf32>
    %31 = arith.mulf %29, %30 : vector<32x1024xf32>
    %32 = vector.broadcast %27 : vector<32x1xf32> to vector<32x1024xf32>
    %33 = arith.addf %32, %31 : vector<32x1024xf32>
    %34 = vector.extract_strided_slice %26 {offsets = [0, 1], sizes = [32, 1], strides = [1, 1]} : vector<32x3xf32> to vector<32x1xf32>
    %35 = vector.broadcast %34 : vector<32x1xf32> to vector<32x1024xf32>
    %36 = vector.broadcast %24 : vector<1x1024xf32> to vector<32x1024xf32>
    %37 = arith.mulf %35, %36 : vector<32x1024xf32>
    %38 = arith.addf %33, %37 : vector<32x1024xf32>
    %39 = vector.extract_strided_slice %26 {offsets = [0, 2], sizes = [32, 1], strides = [1, 1]} : vector<32x3xf32> to vector<32x1xf32>
    %40 = vector.broadcast %39 : vector<32x1xf32> to vector<32x1024xf32>
    %41 = vector.broadcast %25 : vector<1x1024xf32> to vector<32x1024xf32>
    %42 = arith.mulf %40, %41 : vector<32x1024xf32>
    %43 = arith.addf %38, %42 : vector<32x1024xf32>
    %44 = arith.truncf %43 : vector<32x1024xf32> to vector<32x1024xbf16>
    %cst_8 = arith.constant 5.000000e-01 : bf16
    %45 = vector.broadcast %cst_8 : bf16 to vector<32x1024xbf16>
    %46 = arith.mulf %45, %44 : vector<32x1024xbf16>
    %cst_9 = arith.constant 4.467770e-02 : bf16
    %47 = vector.broadcast %cst_9 : bf16 to vector<32x1024xbf16>
    %48 = arith.mulf %47, %44 : vector<32x1024xbf16>
    %49 = arith.mulf %48, %44 : vector<32x1024xbf16>
    %50 = arith.mulf %49, %44 : vector<32x1024xbf16>
    %51 = arith.addf %44, %50 : vector<32x1024xbf16>
    %cst_10 = arith.constant 7.968750e-01 : bf16
    %52 = vector.broadcast %cst_10 : bf16 to vector<32x1024xbf16>
    %53 = arith.mulf %52, %51 : vector<32x1024xbf16>
    %54 = math.tanh %53 : vector<32x1024xbf16>
    %cst_11 = arith.constant 1.000000e+00 : bf16
    %55 = vector.broadcast %cst_11 : bf16 to vector<32x1024xbf16>
    %56 = arith.addf %55, %54 : vector<32x1024xbf16>
    %57 = arith.mulf %46, %56 : vector<32x1024xbf16>
    %c0_12 = arith.constant 0 : index
    %c0_13 = arith.constant 0 : index
    %c0_14 = arith.constant 0 : index
    %58 = vector.load %arg4[%c0_12, %c0_13, %c0_14] : memref<7x32x32xbf16, #tpu.memory_space<vmem>>, vector<1x32x32xbf16>
    %59 = vector.shape_cast %58 : vector<1x32x32xbf16> to vector<32x32xbf16>
    %c0_15 = arith.constant 0 : index
    %c0_16 = arith.constant 0 : index
    %c0_17 = arith.constant 0 : index
    %60 = vector.load %arg5[%c0_15, %c0_16, %c0_17] : memref<7x32x1xf32, #tpu.memory_space<vmem>>, vector<1x32x1xf32>
    %61 = vector.shape_cast %60 : vector<1x32x1xf32> to vector<32x1xf32>
    %cst_18 = arith.constant dense<0.000000e+00> : vector<32x1024xf32>
    %62 = tpu.matmul %59, %57, %cst_18 {dimension_numbers = #tpu.dot_dimension_numbers<[1], [0], [0], [1], [0, 0, 1, 1], [], []>} : vector<32x32xbf16>, vector<32x1024xbf16>, vector<32x1024xf32> -> vector<32x1024xf32>
    %63 = vector.broadcast %61 : vector<32x1xf32> to vector<32x1024xf32>
    %64 = arith.addf %62, %63 : vector<32x1024xf32>
    %65 = arith.truncf %64 : vector<32x1024xf32> to vector<32x1024xbf16>
    %cst_19 = arith.constant 5.000000e-01 : bf16
    %66 = vector.broadcast %cst_19 : bf16 to vector<32x1024xbf16>
    %67 = arith.mulf %66, %65 : vector<32x1024xbf16>
    %cst_20 = arith.constant 4.467770e-02 : bf16
    %68 = vector.broadcast %cst_20 : bf16 to vector<32x1024xbf16>
    %69 = arith.mulf %68, %65 : vector<32x1024xbf16>
    %70 = arith.mulf %69, %65 : vector<32x1024xbf16>
    %71 = arith.mulf %70, %65 : vector<32x1024xbf16>
    %72 = arith.addf %65, %71 : vector<32x1024xbf16>
    %cst_21 = arith.constant 7.968750e-01 : bf16
    %73 = vector.broadcast %cst_21 : bf16 to vector<32x1024xbf16>
    %74 = arith.mulf %73, %72 : vector<32x1024xbf16>
    %75 = math.tanh %74 : vector<32x1024xbf16>
    %cst_22 = arith.constant 1.000000e+00 : bf16
    %76 = vector.broadcast %cst_22 : bf16 to vector<32x1024xbf16>
    %77 = arith.addf %76, %75 : vector<32x1024xbf16>
    %78 = arith.mulf %67, %77 : vector<32x1024xbf16>
    %c1 = arith.constant 1 : index
    %c0_23 = arith.constant 0 : index
    %c0_24 = arith.constant 0 : index
    %79 = vector.load %arg4[%c1, %c0_23, %c0_24] : memref<7x32x32xbf16, #tpu.memory_space<vmem>>, vector<1x32x32xbf16>
    %80 = vector.shape_cast %79 : vector<1x32x32xbf16> to vector<32x32xbf16>
    %c1_25 = arith.constant 1 : index
    %c0_26 = arith.constant 0 : index
    %c0_27 = arith.constant 0 : index
    %81 = vector.load %arg5[%c1_25, %c0_26, %c0_27] : memref<7x32x1xf32, #tpu.memory_space<vmem>>, vector<1x32x1xf32>
    %82 = vector.shape_cast %81 : vector<1x32x1xf32> to vector<32x1xf32>
    %cst_28 = arith.constant dense<0.000000e+00> : vector<32x1024xf32>
    %83 = tpu.matmul %80, %78, %cst_28 {dimension_numbers = #tpu.dot_dimension_numbers<[1], [0], [0], [1], [0, 0, 1, 1], [], []>} : vector<32x32xbf16>, vector<32x1024xbf16>, vector<32x1024xf32> -> vector<32x1024xf32>
    %84 = vector.broadcast %82 : vector<32x1xf32> to vector<32x1024xf32>
    %85 = arith.addf %83, %84 : vector<32x1024xf32>
    %86 = arith.truncf %85 : vector<32x1024xf32> to vector<32x1024xbf16>
    %87 = arith.addf %57, %86 : vector<32x1024xbf16>
    %cst_29 = arith.constant 5.000000e-01 : bf16
    %88 = vector.broadcast %cst_29 : bf16 to vector<32x1024xbf16>
    %89 = arith.mulf %88, %87 : vector<32x1024xbf16>
    %cst_30 = arith.constant 4.467770e-02 : bf16
    %90 = vector.broadcast %cst_30 : bf16 to vector<32x1024xbf16>
    %91 = arith.mulf %90, %87 : vector<32x1024xbf16>
    %92 = arith.mulf %91, %87 : vector<32x1024xbf16>
    %93 = arith.mulf %92, %87 : vector<32x1024xbf16>
    %94 = arith.addf %87, %93 : vector<32x1024xbf16>
    %cst_31 = arith.constant 7.968750e-01 : bf16
    %95 = vector.broadcast %cst_31 : bf16 to vector<32x1024xbf16>
    %96 = arith.mulf %95, %94 : vector<32x1024xbf16>
    %97 = math.tanh %96 : vector<32x1024xbf16>
    %cst_32 = arith.constant 1.000000e+00 : bf16
    %98 = vector.broadcast %cst_32 : bf16 to vector<32x1024xbf16>
    %99 = arith.addf %98, %97 : vector<32x1024xbf16>
    %100 = arith.mulf %89, %99 : vector<32x1024xbf16>
    %c2 = arith.constant 2 : index
    %c0_33 = arith.constant 0 : index
    %c0_34 = arith.constant 0 : index
    %101 = vector.load %arg4[%c2, %c0_33, %c0_34] : memref<7x32x32xbf16, #tpu.memory_space<vmem>>, vector<1x32x32xbf16>
    %102 = vector.shape_cast %101 : vector<1x32x32xbf16> to vector<32x32xbf16>
    %c2_35 = arith.constant 2 : index
    %c0_36 = arith.constant 0 : index
    %c0_37 = arith.constant 0 : index
    %103 = vector.load %arg5[%c2_35, %c0_36, %c0_37] : memref<7x32x1xf32, #tpu.memory_space<vmem>>, vector<1x32x1xf32>
    %104 = vector.shape_cast %103 : vector<1x32x1xf32> to vector<32x1xf32>
    %cst_38 = arith.constant dense<0.000000e+00> : vector<32x1024xf32>
    %105 = tpu.matmul %102, %100, %cst_38 {dimension_numbers = #tpu.dot_dimension_numbers<[1], [0], [0], [1], [0, 0, 1, 1], [], []>} : vector<32x32xbf16>, vector<32x1024xbf16>, vector<32x1024xf32> -> vector<32x1024xf32>
    %106 = vector.broadcast %104 : vector<32x1xf32> to vector<32x1024xf32>
    %107 = arith.addf %105, %106 : vector<32x1024xf32>
    %108 = arith.truncf %107 : vector<32x1024xf32> to vector<32x1024xbf16>
    %cst_39 = arith.constant 5.000000e-01 : bf16
    %109 = vector.broadcast %cst_39 : bf16 to vector<32x1024xbf16>
    %110 = arith.mulf %109, %108 : vector<32x1024xbf16>
    %cst_40 = arith.constant 4.467770e-02 : bf16
    %111 = vector.broadcast %cst_40 : bf16 to vector<32x1024xbf16>
    %112 = arith.mulf %111, %108 : vector<32x1024xbf16>
    %113 = arith.mulf %112, %108 : vector<32x1024xbf16>
    %114 = arith.mulf %113, %108 : vector<32x1024xbf16>
    %115 = arith.addf %108, %114 : vector<32x1024xbf16>
    %cst_41 = arith.constant 7.968750e-01 : bf16
    %116 = vector.broadcast %cst_41 : bf16 to vector<32x1024xbf16>
    %117 = arith.mulf %116, %115 : vector<32x1024xbf16>
    %118 = math.tanh %117 : vector<32x1024xbf16>
    %cst_42 = arith.constant 1.000000e+00 : bf16
    %119 = vector.broadcast %cst_42 : bf16 to vector<32x1024xbf16>
    %120 = arith.addf %119, %118 : vector<32x1024xbf16>
    %121 = arith.mulf %110, %120 : vector<32x1024xbf16>
    %c3 = arith.constant 3 : index
    %c0_43 = arith.constant 0 : index
    %c0_44 = arith.constant 0 : index
    %122 = vector.load %arg4[%c3, %c0_43, %c0_44] : memref<7x32x32xbf16, #tpu.memory_space<vmem>>, vector<1x32x32xbf16>
    %123 = vector.shape_cast %122 : vector<1x32x32xbf16> to vector<32x32xbf16>
    %c3_45 = arith.constant 3 : index
    %c0_46 = arith.constant 0 : index
    %c0_47 = arith.constant 0 : index
    %124 = vector.load %arg5[%c3_45, %c0_46, %c0_47] : memref<7x32x1xf32, #tpu.memory_space<vmem>>, vector<1x32x1xf32>
    %125 = vector.shape_cast %124 : vector<1x32x1xf32> to vector<32x1xf32>
    %cst_48 = arith.constant dense<0.000000e+00> : vector<32x1024xf32>
    %126 = tpu.matmul %123, %121, %cst_48 {dimension_numbers = #tpu.dot_dimension_numbers<[1], [0], [0], [1], [0, 0, 1, 1], [], []>} : vector<32x32xbf16>, vector<32x1024xbf16>, vector<32x1024xf32> -> vector<32x1024xf32>
    %127 = vector.broadcast %125 : vector<32x1xf32> to vector<32x1024xf32>
    %128 = arith.addf %126, %127 : vector<32x1024xf32>
    %129 = arith.truncf %128 : vector<32x1024xf32> to vector<32x1024xbf16>
    %130 = arith.addf %100, %129 : vector<32x1024xbf16>
    %cst_49 = arith.constant 5.000000e-01 : bf16
    %131 = vector.broadcast %cst_49 : bf16 to vector<32x1024xbf16>
    %132 = arith.mulf %131, %130 : vector<32x1024xbf16>
    %cst_50 = arith.constant 4.467770e-02 : bf16
    %133 = vector.broadcast %cst_50 : bf16 to vector<32x1024xbf16>
    %134 = arith.mulf %133, %130 : vector<32x1024xbf16>
    %135 = arith.mulf %134, %130 : vector<32x1024xbf16>
    %136 = arith.mulf %135, %130 : vector<32x1024xbf16>
    %137 = arith.addf %130, %136 : vector<32x1024xbf16>
    %cst_51 = arith.constant 7.968750e-01 : bf16
    %138 = vector.broadcast %cst_51 : bf16 to vector<32x1024xbf16>
    %139 = arith.mulf %138, %137 : vector<32x1024xbf16>
    %140 = math.tanh %139 : vector<32x1024xbf16>
    %cst_52 = arith.constant 1.000000e+00 : bf16
    %141 = vector.broadcast %cst_52 : bf16 to vector<32x1024xbf16>
    %142 = arith.addf %141, %140 : vector<32x1024xbf16>
    %143 = arith.mulf %132, %142 : vector<32x1024xbf16>
    %c4 = arith.constant 4 : index
    %c0_53 = arith.constant 0 : index
    %c0_54 = arith.constant 0 : index
    %144 = vector.load %arg4[%c4, %c0_53, %c0_54] : memref<7x32x32xbf16, #tpu.memory_space<vmem>>, vector<1x32x32xbf16>
    %145 = vector.shape_cast %144 : vector<1x32x32xbf16> to vector<32x32xbf16>
    %c4_55 = arith.constant 4 : index
    %c0_56 = arith.constant 0 : index
    %c0_57 = arith.constant 0 : index
    %146 = vector.load %arg5[%c4_55, %c0_56, %c0_57] : memref<7x32x1xf32, #tpu.memory_space<vmem>>, vector<1x32x1xf32>
    %147 = vector.shape_cast %146 : vector<1x32x1xf32> to vector<32x1xf32>
    %cst_58 = arith.constant dense<0.000000e+00> : vector<32x1024xf32>
    %148 = tpu.matmul %145, %143, %cst_58 {dimension_numbers = #tpu.dot_dimension_numbers<[1], [0], [0], [1], [0, 0, 1, 1], [], []>} : vector<32x32xbf16>, vector<32x1024xbf16>, vector<32x1024xf32> -> vector<32x1024xf32>
    %149 = vector.broadcast %147 : vector<32x1xf32> to vector<32x1024xf32>
    %150 = arith.addf %148, %149 : vector<32x1024xf32>
    %151 = arith.truncf %150 : vector<32x1024xf32> to vector<32x1024xbf16>
    %cst_59 = arith.constant 5.000000e-01 : bf16
    %152 = vector.broadcast %cst_59 : bf16 to vector<32x1024xbf16>
    %153 = arith.mulf %152, %151 : vector<32x1024xbf16>
    %cst_60 = arith.constant 4.467770e-02 : bf16
    %154 = vector.broadcast %cst_60 : bf16 to vector<32x1024xbf16>
    %155 = arith.mulf %154, %151 : vector<32x1024xbf16>
    %156 = arith.mulf %155, %151 : vector<32x1024xbf16>
    %157 = arith.mulf %156, %151 : vector<32x1024xbf16>
    %158 = arith.addf %151, %157 : vector<32x1024xbf16>
    %cst_61 = arith.constant 7.968750e-01 : bf16
    %159 = vector.broadcast %cst_61 : bf16 to vector<32x1024xbf16>
    %160 = arith.mulf %159, %158 : vector<32x1024xbf16>
    %161 = math.tanh %160 : vector<32x1024xbf16>
    %cst_62 = arith.constant 1.000000e+00 : bf16
    %162 = vector.broadcast %cst_62 : bf16 to vector<32x1024xbf16>
    %163 = arith.addf %162, %161 : vector<32x1024xbf16>
    %164 = arith.mulf %153, %163 : vector<32x1024xbf16>
    %c5 = arith.constant 5 : index
    %c0_63 = arith.constant 0 : index
    %c0_64 = arith.constant 0 : index
    %165 = vector.load %arg4[%c5, %c0_63, %c0_64] : memref<7x32x32xbf16, #tpu.memory_space<vmem>>, vector<1x32x32xbf16>
    %166 = vector.shape_cast %165 : vector<1x32x32xbf16> to vector<32x32xbf16>
    %c5_65 = arith.constant 5 : index
    %c0_66 = arith.constant 0 : index
    %c0_67 = arith.constant 0 : index
    %167 = vector.load %arg5[%c5_65, %c0_66, %c0_67] : memref<7x32x1xf32, #tpu.memory_space<vmem>>, vector<1x32x1xf32>
    %168 = vector.shape_cast %167 : vector<1x32x1xf32> to vector<32x1xf32>
    %cst_68 = arith.constant dense<0.000000e+00> : vector<32x1024xf32>
    %169 = tpu.matmul %166, %164, %cst_68 {dimension_numbers = #tpu.dot_dimension_numbers<[1], [0], [0], [1], [0, 0, 1, 1], [], []>} : vector<32x32xbf16>, vector<32x1024xbf16>, vector<32x1024xf32> -> vector<32x1024xf32>
    %170 = vector.broadcast %168 : vector<32x1xf32> to vector<32x1024xf32>
    %171 = arith.addf %169, %170 : vector<32x1024xf32>
    %172 = arith.truncf %171 : vector<32x1024xf32> to vector<32x1024xbf16>
    %173 = arith.addf %143, %172 : vector<32x1024xbf16>
    %cst_69 = arith.constant 5.000000e-01 : bf16
    %174 = vector.broadcast %cst_69 : bf16 to vector<32x1024xbf16>
    %175 = arith.mulf %174, %173 : vector<32x1024xbf16>
    %cst_70 = arith.constant 4.467770e-02 : bf16
    %176 = vector.broadcast %cst_70 : bf16 to vector<32x1024xbf16>
    %177 = arith.mulf %176, %173 : vector<32x1024xbf16>
    %178 = arith.mulf %177, %173 : vector<32x1024xbf16>
    %179 = arith.mulf %178, %173 : vector<32x1024xbf16>
    %180 = arith.addf %173, %179 : vector<32x1024xbf16>
    %cst_71 = arith.constant 7.968750e-01 : bf16
    %181 = vector.broadcast %cst_71 : bf16 to vector<32x1024xbf16>
    %182 = arith.mulf %181, %180 : vector<32x1024xbf16>
    %183 = math.tanh %182 : vector<32x1024xbf16>
    %cst_72 = arith.constant 1.000000e+00 : bf16
    %184 = vector.broadcast %cst_72 : bf16 to vector<32x1024xbf16>
    %185 = arith.addf %184, %183 : vector<32x1024xbf16>
    %186 = arith.mulf %175, %185 : vector<32x1024xbf16>
    %c6 = arith.constant 6 : index
    %c0_73 = arith.constant 0 : index
    %c0_74 = arith.constant 0 : index
    %187 = vector.load %arg4[%c6, %c0_73, %c0_74] : memref<7x32x32xbf16, #tpu.memory_space<vmem>>, vector<1x32x32xbf16>
    %188 = vector.shape_cast %187 : vector<1x32x32xbf16> to vector<32x32xbf16>
    %c6_75 = arith.constant 6 : index
    %c0_76 = arith.constant 0 : index
    %c0_77 = arith.constant 0 : index
    %189 = vector.load %arg5[%c6_75, %c0_76, %c0_77] : memref<7x32x1xf32, #tpu.memory_space<vmem>>, vector<1x32x1xf32>
    %190 = vector.shape_cast %189 : vector<1x32x1xf32> to vector<32x1xf32>
    %cst_78 = arith.constant dense<0.000000e+00> : vector<32x1024xf32>
    %191 = tpu.matmul %188, %186, %cst_78 {dimension_numbers = #tpu.dot_dimension_numbers<[1], [0], [0], [1], [0, 0, 1, 1], [], []>} : vector<32x32xbf16>, vector<32x1024xbf16>, vector<32x1024xf32> -> vector<32x1024xf32>
    %192 = vector.broadcast %190 : vector<32x1xf32> to vector<32x1024xf32>
    %193 = arith.addf %191, %192 : vector<32x1024xf32>
    %194 = arith.truncf %193 : vector<32x1024xf32> to vector<32x1024xbf16>
    %cst_79 = arith.constant 5.000000e-01 : bf16
    %195 = vector.broadcast %cst_79 : bf16 to vector<32x1024xbf16>
    %196 = arith.mulf %195, %194 : vector<32x1024xbf16>
    %cst_80 = arith.constant 4.467770e-02 : bf16
    %197 = vector.broadcast %cst_80 : bf16 to vector<32x1024xbf16>
    %198 = arith.mulf %197, %194 : vector<32x1024xbf16>
    %199 = arith.mulf %198, %194 : vector<32x1024xbf16>
    %200 = arith.mulf %199, %194 : vector<32x1024xbf16>
    %201 = arith.addf %194, %200 : vector<32x1024xbf16>
    %cst_81 = arith.constant 7.968750e-01 : bf16
    %202 = vector.broadcast %cst_81 : bf16 to vector<32x1024xbf16>
    %203 = arith.mulf %202, %201 : vector<32x1024xbf16>
    %204 = math.tanh %203 : vector<32x1024xbf16>
    %cst_82 = arith.constant 1.000000e+00 : bf16
    %205 = vector.broadcast %cst_82 : bf16 to vector<32x1024xbf16>
    %206 = arith.addf %205, %204 : vector<32x1024xbf16>
    %207 = arith.mulf %196, %206 : vector<32x1024xbf16>
    %c0_83 = arith.constant 0 : index
    %c0_84 = arith.constant 0 : index
    %208 = vector.load %arg6[%c0_83, %c0_84] : memref<8x32xbf16, #tpu.memory_space<vmem>>, vector<8x32xbf16>
    %c0_85 = arith.constant 0 : index
    %c0_86 = arith.constant 0 : index
    %209 = vector.load %arg7[%c0_85, %c0_86] : memref<8x1xf32, #tpu.memory_space<vmem>>, vector<8x1xf32>
    %cst_87 = arith.constant dense<0.000000e+00> : vector<8x1024xf32>
    %210 = tpu.matmul %208, %207, %cst_87 {dimension_numbers = #tpu.dot_dimension_numbers<[1], [0], [0], [1], [0, 0, 1, 1], [], []>} : vector<8x32xbf16>, vector<32x1024xbf16>, vector<8x1024xf32> -> vector<8x1024xf32>
    %211 = vector.broadcast %209 : vector<8x1xf32> to vector<8x1024xf32>
    %212 = arith.addf %210, %211 : vector<8x1024xf32>
    %c0_88 = arith.constant 0 : index
    %c0_89 = arith.constant 0 : index
    %213 = vector.load %arg8[%c0_88, %c0_89] : memref<8x1024xf32, #tpu.memory_space<vmem>>, vector<8x1024xf32>
    tpu.vector_store %arg8[%c0_88, %c0_89], %212 {strides = array<i32>} : memref<8x1024xf32, #tpu.memory_space<vmem>>, vector<8x1024xf32>,
    return
  }
  func.func @transform_0(%arg0: i32) -> (i32, i32) {
    %c0_i32 = arith.constant 0 : i32
    %c0_i32_0 = arith.constant 0 : i32
    return %c0_i32, %arg0 : i32, i32
  }
  func.func @transform_1(%arg0: i32) -> (i32, i32) {
    %c0_i32 = arith.constant 0 : i32
    %c0_i32_0 = arith.constant 0 : i32
    %c0_i32_1 = arith.constant 0 : i32
    return %c0_i32, %c0_i32_0 : i32, i32
  }
  func.func @transform_2(%arg0: i32) -> (i32, i32) {
    %c0_i32 = arith.constant 0 : i32
    %c0_i32_0 = arith.constant 0 : i32
    %c0_i32_1 = arith.constant 0 : i32
    return %c0_i32, %c0_i32_0 : i32, i32
  }
  func.func @transform_3(%arg0: i32) -> (i32, i32, i32) {
    %c0_i32 = arith.constant 0 : i32
    %c0_i32_0 = arith.constant 0 : i32
    %c0_i32_1 = arith.constant 0 : i32
    %c0_i32_2 = arith.constant 0 : i32
    return %c0_i32, %c0_i32_0, %c0_i32_1 : i32, i32, i32
  }
  func.func @transform_4(%arg0: i32) -> (i32, i32, i32) {
    %c0_i32 = arith.constant 0 : i32
    %c0_i32_0 = arith.constant 0 : i32
    %c0_i32_1 = arith.constant 0 : i32
    %c0_i32_2 = arith.constant 0 : i32
    return %c0_i32, %c0_i32_0, %c0_i32_1 : i32, i32, i32
  }
  func.func @transform_5(%arg0: i32) -> (i32, i32) {
    %c0_i32 = arith.constant 0 : i32
    %c0_i32_0 = arith.constant 0 : i32
    %c0_i32_1 = arith.constant 0 : i32
    return %c0_i32, %c0_i32_0 : i32, i32
  }
  func.func @transform_6(%arg0: i32) -> (i32, i32) {
    %c0_i32 = arith.constant 0 : i32
    %c0_i32_0 = arith.constant 0 : i32
    %c0_i32_1 = arith.constant 0 : i32
    return %c0_i32, %c0_i32_0 : i32, i32
  }
  func.func @transform_7(%arg0: i32) -> (i32, i32) {
    %c0_i32 = arith.constant 0 : i32
    %c0_i32_0 = arith.constant 0 : i32
    return %c0_i32, %arg0 : i32, i32
  }
}

</mosaic_0001>

<llo_original>
// kernel: tpu_custom_call.1
$region0: #{tpu_custom_call.1}
  #allocation0 [shape = 'u32[]', space=smem, size = 0x4, offset = 0x4, fixed_abs, tag = 'smem constant byte address 0x4 - core index']
  #allocation1 [shape = 'u32[144,128]{1,0:T(1,128)}', space=vmem, size = 0x12000, scoped, tag = 'internal scratch']
  %s0 = inlined_call_operand.vmem [shape: f32[3,1024], index: 0, kind: input, shape index: {}]
  %s1 = inlined_call_operand.vmem [shape: f32[32,3], index: 1, kind: input, shape index: {}]
  %s2 = inlined_call_operand.vmem [shape: f32[32,1], index: 2, kind: input, shape index: {}]
  %s3 = inlined_call_operand.vmem [shape: bf16[7,32,32], index: 3, kind: input, shape index: {}]
  %s4 = inlined_call_operand.vmem [shape: f32[7,32,1], index: 4, kind: input, shape index: {}]
  %s5 = inlined_call_operand.vmem [shape: bf16[8,32], index: 5, kind: input, shape index: {}]
  %s6 = inlined_call_operand.vmem [shape: f32[8,1], index: 6, kind: input, shape index: {}]
  %s7 = inlined_call_operand.hbm [shape: f32[8,1024], index: 7, kind: output, shape index: {}]
  %s8 = sld [smem:[#allocation0]]
  $region38: #{tpu_custom_call.1} parent=0
    _
  %s10 = ssub.s32 1, %s8
  %s11 = scalar_select 0, %s10, %s8
  $region1: #{tpu_custom_call.1} parent=0
    #allocation2 [shape = 'u8[32768]{0}', space=vmem, size = 0x8000, scoped, tag = 'output window, operand 0, single buffered']
    #allocation3 [shape = 's32[1]{0}', space=sflag, size = 0x4, scoped, tag = 'scoped memory for tpu_custom_call.1']
    %12 = vsyncpa [#allocation3], 0
    // Predicated region
    $region2: #{tpu_custom_call.1} parent=1 // pred_check
      _
    $region3: #{tpu_custom_call.1} parent=1 // pred_check_branch
      %14 = sbr.rel (0) target = $region5
    $region4: #{tpu_custom_call.1} parent=1 // pred_region
      _
    $region5: #{tpu_custom_call.1} parent=1 // pred_fallthru
      _
    // Predicated region
    $region6: #{tpu_custom_call.1} parent=1 // pred_check
      _
    $region7: #{tpu_custom_call.1} parent=1 // pred_check_branch
      %16 = sbr.rel (0) target = $region9
    $region8: #{tpu_custom_call.1} parent=1 // pred_region
      _
    $region9: #{tpu_custom_call.1} parent=1 // pred_fallthru
      _
    // Predicated region
    $region10: #{tpu_custom_call.1} parent=1 // pred_check
      _
    $region11: #{tpu_custom_call.1} parent=1 // pred_check_branch
      %18 = sbr.rel (0) target = $region13
    $region12: #{tpu_custom_call.1} parent=1 // pred_region
      _
    $region13: #{tpu_custom_call.1} parent=1 // pred_fallthru
      _
    // Predicated region
    $region14: #{tpu_custom_call.1} parent=1 // pred_check
      _
    $region15: #{tpu_custom_call.1} parent=1 // pred_check_branch
      %20 = sbr.rel (0) target = $region17
    $region16: #{tpu_custom_call.1} parent=1 // pred_region
      _
    $region17: #{tpu_custom_call.1} parent=1 // pred_fallthru
      _
    // Predicated region
    $region18: #{tpu_custom_call.1} parent=1 // pred_check
      _
    $region19: #{tpu_custom_call.1} parent=1 // pred_check_branch
      %22 = sbr.rel (0) target = $region21
    $region20: #{tpu_custom_call.1} parent=1 // pred_region
      _
    $region21: #{tpu_custom_call.1} parent=1 // pred_fallthru
      _
    // Predicated region
    $region22: #{tpu_custom_call.1} parent=1 // pred_check
      _
    $region23: #{tpu_custom_call.1} parent=1 // pred_check_branch
      %24 = sbr.rel (0) target = $region25
    $region24: #{tpu_custom_call.1} parent=1 // pred_region
      _
    $region25: #{tpu_custom_call.1} parent=1 // pred_fallthru
      _
    // Predicated region
    $region26: #{tpu_custom_call.1} parent=1 // pred_check
      _
    $region27: #{tpu_custom_call.1} parent=1 // pred_check_branch
      %26 = sbr.rel (0) target = $region29
    $region28: #{tpu_custom_call.1} parent=1 // pred_region
      _
    $region29: #{tpu_custom_call.1} parent=1 // pred_fallthru
      _
    %v32 = vld [vmem:[%s0] sm:$0x77]
    %v33 = vld [vmem:[%s0 + $0x8] sm:$0x77]
    %v34 = vld [vmem:[%s0 + $0x10] sm:$0x77]
    %v35 = vld [vmem:[%s0 + $0x18] sm:$0x77]
    %v36 = vmul.f32 %v32, 5.0
    %v37 = vmul.f32 %v33, 5.0
    %v38 = vmul.f32 %v34, 5.0
    %v39 = vmul.f32 %v35, 5.0
    %v40 = vand.u32 2147483647, %v36
    %vm41 = vcmp.le.f32.partialorder %v40, 0.7853982
    %vm42 = vcmp.lt.s32.totalorder %v36, 0
    %v43 = vand.u32 %v36, 2139095040
    %v44 = vshrl.u32 %v43, 23
    %v45 = vsub.s32 %v44, 127
    %v46 = vand.u32 2147483647, %v36
    %v47 = vand.u32 %v46, 8388607
    %v48 = vor.u32 %v47, 8388608
    %v49 = vsub.s32 0, %v48
    %v50 = vadd.s32 %v45, 1
    %vm51 = vcmp.gt.s32.totalorder %v50, 0
    %v52 = vsel %vm51, %v50, 0
    %v53 = vshrl.u32 %v52, 5
    %v54 = vand.u32 %v52, 31
    %v55 = vsub.s32 32, %v54
    %v56 = vshrl.u32 683565275, %v55
    %v57 = vshll.u32 683565275, %v54
    %v58 = vshrl.u32 2475754826, %v55
    %v59 = vor.u32 %v57, %v58
    %v60 = vshll.u32 2475754826, %v54
    %v61 = vshrl.u32 2131351028, %v55
    %v62 = vor.u32 %v60, %v61
    %v63 = vshll.u32 2131351028, %v54
    %v64 = vshrl.u32 2102212464, %v55
    %v65 = vor.u32 %v63, %v64
    %v66 = vshll.u32 2102212464, %v54
    %v67 = vshrl.u32 920167782, %v55
    %v68 = vor.u32 %v66, %v67
    %v69 = vshll.u32 920167782, %v54
    %v70 = vshrl.u32 1326507024, %v55
    %v71 = vor.u32 %v69, %v70
    %vm72 = vcmp.lt.s32.totalorder %v53, 1
    %vm73 = vcmp.lt.s32.totalorder %v53, 2
    %vm74 = vcmp.lt.s32.totalorder %v53, 3
    %vm75 = vcmp.lt.s32.totalorder %v53, 4
    %v76 = vsel %vm72, %v56, %v59
    %v77 = vsel %vm75, %v65, 2102212464
    %v78 = vsel %vm74, %v62, %v77
    %v79 = vsel %vm73, %v76, %v78
    %v80 = vsel %vm72, %v59, %v62
    %v81 = vsel %vm75, %v68, 920167782
    %v82 = vsel %vm74, %v65, %v81
    %v83 = vsel %vm73, %v80, %v82
    %v84 = vsel %vm72, %v62, %v65
    %v85 = vsel %vm75, %v71, 1326507024
    %v86 = vsel %vm74, %v68, %v85
    %v87 = vsel %vm73, %v84, %v86
    %v88 = vshll.u32 %v48, 8
    %v89 = vmul.u32.u64.compose %v88, %v87
    %v90 = vextract.low.u32 %v89
    %v91 = vextract.high.u32 %v89
    %v92 = vmul.u32.u64.compose %v88, %v83
    %v93 = vextract.low.u32 %v92
    %v94 = vextract.high.u32 %v92
    %v95 = vmul.u32 %v88, %v79
    %v96 = vadd.s32 %v91, %v93
    %vm97 = vc.u32 %v91, %v93
    %v98 = vadd.s32 %v94, 1
    %v99 = vsel %vm97, %v98, %v94
    %v100 = vadd.s32 %v95, %v99
    %v101 = vadd.s32 %v100, 536870912
    %v102 = vshrl.u32 %v101, 30
    %v103 = vshll.u32 %v102, 30
    %v104 = vsub.s32 %v100, %v103
    %vm105 = vcmp.lt.s32.totalorder %v104, 0
    %v106 = vsub.s32 0, %v104
    %v107 = vsel %vm105, %v106, %v104
    %v108 = vclz %v107
    %v109 = vsub.s32 %v108, 2
    %vm110 = vcmp.gt.s32.totalorder 0, %v109
    %v111 = vsel %vm110, 0, %v109
    %v112 = vsub.s32 32, %v111
    %v113 = vshll.u32 %v104, %v111
    %v114 = vshrl.u32 %v96, %v112
    %v115 = vor.u32 %v113, %v114
    %v116 = vsub.s32 4294967266, %v111
    %v117 = vadd.s32 %v116, 127
    %v118 = vshll.u32 %v117, 23
    %v119 = vor.u32 4788187, %v118
    %v120 = vand.u32 2147483647, %v119
    %v122 = vcvt.s32.f32 %v115
    %v123 = vmul.f32 %v122, %v120
    %v124 = vxor.u32 %v123, 2147483648
    %v125 = vsel %vm42, %v124, %v123
    %v126 = vsub.s32 4, %v102
    %v127 = vsel %vm42, %v126, %v102
    %v128 = vsel %vm41, %v36, %v125
    %v129 = vsel %vm41, 0, %v127
    %v130 = vcosq.f32.pop %v128
    %v131 = vsinq.f32.pop %v128
    %vm132 = vweird.f32 %v36
    %v133 = vadd.s32 %v129, 3
    %v134 = vand.u32 %v133, 3
    %vm135 = vcmp.lt.s32.totalorder %v134, 2
    %vm136 = vcmp.eq.s32.totalorder %v134, 0
    %v137 = vxor.u32 %v131, 2147483648
    %v138 = vsel %vm136, %v130, %v137
    %vm139 = vcmp.eq.s32.totalorder %v134, 2
    %v140 = vxor.u32 %v130, 2147483648
    %v141 = vsel %vm139, %v140, %v131
    %v142 = vsel %vm135, %v138, %v141
    %v143 = vsel %vm132, nan, %v142
    %v144 = vand.u32 2147483647, %v37
    %vm145 = vcmp.le.f32.partialorder %v144, 0.7853982
    %vm146 = vcmp.lt.s32.totalorder %v37, 0
    %v147 = vand.u32 %v37, 2139095040
    %v148 = vshrl.u32 %v147, 23
    %v149 = vsub.s32 %v148, 127
    %v150 = vand.u32 2147483647, %v37
    %v151 = vand.u32 %v150, 8388607
    %v152 = vor.u32 %v151, 8388608
    %v153 = vsub.s32 0, %v152
    %v154 = vadd.s32 %v149, 1
    %vm155 = vcmp.gt.s32.totalorder %v154, 0
    %v156 = vsel %vm155, %v154, 0
    %v157 = vshrl.u32 %v156, 5
    %v158 = vand.u32 %v156, 31
    %v159 = vsub.s32 32, %v158
    %v160 = vshrl.u32 683565275, %v159
    %v161 = vshll.u32 683565275, %v158
    %v162 = vshrl.u32 2475754826, %v159
    %v163 = vor.u32 %v161, %v162
    %v164 = vshll.u32 2475754826, %v158
    %v165 = vshrl.u32 2131351028, %v159
    %v166 = vor.u32 %v164, %v165
    %v167 = vshll.u32 2131351028, %v158
    %v168 = vshrl.u32 2102212464, %v159
    %v169 = vor.u32 %v167, %v168
    %v170 = vshll.u32 2102212464, %v158
    %v171 = vshrl.u32 920167782, %v159
    %v172 = vor.u32 %v170, %v171
    %v173 = vshll.u32 920167782, %v158
    %v174 = vshrl.u32 1326507024, %v159
    %v175 = vor.u32 %v173, %v174
    %vm176 = vcmp.lt.s32.totalorder %v157, 1
    %vm177 = vcmp.lt.s32.totalorder %v157, 2
    %vm178 = vcmp.lt.s32.totalorder %v157, 3
    %vm179 = vcmp.lt.s32.totalorder %v157, 4
    %v180 = vsel %vm176, %v160, %v163
    %v181 = vsel %vm179, %v169, 2102212464
    %v182 = vsel %vm178, %v166, %v181
    %v183 = vsel %vm177, %v180, %v182
    %v184 = vsel %vm176, %v163, %v166
    %v185 = vsel %vm179, %v172, 920167782
    %v186 = vsel %vm178, %v169, %v185
    %v187 = vsel %vm177, %v184, %v186
    %v188 = vsel %vm176, %v166, %v169
    %v189 = vsel %vm179, %v175, 1326507024
    %v190 = vsel %vm178, %v172, %v189
    %v191 = vsel %vm177, %v188, %v190
    %v192 = vshll.u32 %v152, 8
    %v193 = vmul.u32.u64.compose %v192, %v191
    %v194 = vextract.low.u32 %v193
    %v195 = vextract.high.u32 %v193
    %v196 = vmul.u32.u64.compose %v192, %v187
    %v197 = vextract.low.u32 %v196
    %v198 = vextract.high.u32 %v196
    %v199 = vmul.u32 %v192, %v183
    %v200 = vadd.s32 %v195, %v197
    %vm201 = vc.u32 %v195, %v197
    %v202 = vadd.s32 %v198, 1
    %v203 = vsel %vm201, %v202, %v198
    %v204 = vadd.s32 %v199, %v203
    %v205 = vadd.s32 %v204, 536870912
    %v206 = vshrl.u32 %v205, 30
    %v207 = vshll.u32 %v206, 30
    %v208 = vsub.s32 %v204, %v207
    %vm209 = vcmp.lt.s32.totalorder %v208, 0
    %v210 = vsub.s32 0, %v208
    %v211 = vsel %vm209, %v210, %v208
    %v212 = vclz %v211
    %v213 = vsub.s32 %v212, 2
    %vm214 = vcmp.gt.s32.totalorder 0, %v213
    %v215 = vsel %vm214, 0, %v213
    %v216 = vsub.s32 32, %v215
    %v217 = vshll.u32 %v208, %v215
    %v218 = vshrl.u32 %v200, %v216
    %v219 = vor.u32 %v217, %v218
    %v220 = vsub.s32 4294967266, %v215
    %v221 = vadd.s32 %v220, 127
    %v222 = vshll.u32 %v221, 23
    %v223 = vor.u32 4788187, %v222
    %v224 = vand.u32 2147483647, %v223
    %v226 = vcvt.s32.f32 %v219
    %v227 = vmul.f32 %v226, %v224
    %v228 = vxor.u32 %v227, 2147483648
    %v229 = vsel %vm146, %v228, %v227
    %v230 = vsub.s32 4, %v206
    %v231 = vsel %vm146, %v230, %v206
    %v232 = vsel %vm145, %v37, %v229
    %v233 = vsel %vm145, 0, %v231
    %v234 = vcosq.f32.pop %v232
    %v235 = vsinq.f32.pop %v232
    %vm236 = vweird.f32 %v37
    %v237 = vadd.s32 %v233, 3
    %v238 = vand.u32 %v237, 3
    %vm239 = vcmp.lt.s32.totalorder %v238, 2
    %vm240 = vcmp.eq.s32.totalorder %v238, 0
    %v241 = vxor.u32 %v235, 2147483648
    %v242 = vsel %vm240, %v234, %v241
    %vm243 = vcmp.eq.s32.totalorder %v238, 2
    %v244 = vxor.u32 %v234, 2147483648
    %v245 = vsel %vm243, %v244, %v235
    %v246 = vsel %vm239, %v242, %v245
    %v247 = vsel %vm236, nan, %v246
    %v248 = vand.u32 2147483647, %v38
    %vm249 = vcmp.le.f32.partialorder %v248, 0.7853982
    %vm250 = vcmp.lt.s32.totalorder %v38, 0
    %v251 = vand.u32 %v38, 2139095040
    %v252 = vshrl.u32 %v251, 23
    %v253 = vsub.s32 %v252, 127
    %v254 = vand.u32 2147483647, %v38
    %v255 = vand.u32 %v254, 8388607
    %v256 = vor.u32 %v255, 8388608
    %v257 = vsub.s32 0, %v256
    %v258 = vadd.s32 %v253, 1
    %vm259 = vcmp.gt.s32.totalorder %v258, 0
    %v260 = vsel %vm259, %v258, 0
    %v261 = vshrl.u32 %v260, 5
    %v262 = vand.u32 %v260, 31
    %v263 = vsub.s32 32, %v262
    %v264 = vshrl.u32 683565275, %v263
    %v265 = vshll.u32 683565275, %v262
    %v266 = vshrl.u32 2475754826, %v263
    %v267 = vor.u32 %v265, %v266
    %v268 = vshll.u32 2475754826, %v262
    %v269 = vshrl.u32 2131351028, %v263
    %v270 = vor.u32 %v268, %v269
    %v271 = vshll.u32 2131351028, %v262
    %v272 = vshrl.u32 2102212464, %v263
    %v273 = vor.u32 %v271, %v272
    %v274 = vshll.u32 2102212464, %v262
    %v275 = vshrl.u32 920167782, %v263
    %v276 = vor.u32 %v274, %v275
    %v277 = vshll.u32 920167782, %v262
    %v278 = vshrl.u32 1326507024, %v263
    %v279 = vor.u32 %v277, %v278
    %vm280 = vcmp.lt.s32.totalorder %v261, 1
    %vm281 = vcmp.lt.s32.totalorder %v261, 2
    %vm282 = vcmp.lt.s32.totalorder %v261, 3
    %vm283 = vcmp.lt.s32.totalorder %v261, 4
    %v284 = vsel %vm280, %v264, %v267
    %v285 = vsel %vm283, %v273, 2102212464
    %v286 = vsel %vm282, %v270, %v285
    %v287 = vsel %vm281, %v284, %v286
    %v288 = vsel %vm280, %v267, %v270
    %v289 = vsel %vm283, %v276, 920167782
    %v290 = vsel %vm282, %v273, %v289
    %v291 = vsel %vm281, %v288, %v290
    %v292 = vsel %vm280, %v270, %v273
    %v293 = vsel %vm283, %v279, 1326507024
    %v294 = vsel %vm282, %v276, %v293
    %v295 = vsel %vm281, %v292, %v294
    %v296 = vshll.u32 %v256, 8
    %v297 = vmul.u32.u64.compose %v296, %v295
    %v298 = vextract.low.u32 %v297
    %v299 = vextract.high.u32 %v297
    %v300 = vmul.u32.u64.compose %v296, %v291
    %v301 = vextract.low.u32 %v300
    %v302 = vextract.high.u32 %v300
    %v303 = vmul.u32 %v296, %v287
    %v304 = vadd.s32 %v299, %v301
    %vm305 = vc.u32 %v299, %v301
    %v306 = vadd.s32 %v302, 1
    %v307 = vsel %vm305, %v306, %v302
    %v308 = vadd.s32 %v303, %v307
    %v309 = vadd.s32 %v308, 536870912
    %v310 = vshrl.u32 %v309, 30
    %v311 = vshll.u32 %v310, 30
    %v312 = vsub.s32 %v308, %v311
    %vm313 = vcmp.lt.s32.totalorder %v312, 0
    %v314 = vsub.s32 0, %v312
    %v315 = vsel %vm313, %v314, %v312
    %v316 = vclz %v315
    %v317 = vsub.s32 %v316, 2
    %vm318 = vcmp.gt.s32.totalorder 0, %v317
    %v319 = vsel %vm318, 0, %v317
    %v320 = vsub.s32 32, %v319
    %v321 = vshll.u32 %v312, %v319
    %v322 = vshrl.u32 %v304, %v320
    %v323 = vor.u32 %v321, %v322
    %v324 = vsub.s32 4294967266, %v319
    %v325 = vadd.s32 %v324, 127
    %v326 = vshll.u32 %v325, 23
    %v327 = vor.u32 4788187, %v326
    %v328 = vand.u32 2147483647, %v327
    %v330 = vcvt.s32.f32 %v323
    %v331 = vmul.f32 %v330, %v328
    %v332 = vxor.u32 %v331, 2147483648
    %v333 = vsel %vm250, %v332, %v331
    %v334 = vsub.s32 4, %v310
    %v335 = vsel %vm250, %v334, %v310
    %v336 = vsel %vm249, %v38, %v333
    %v337 = vsel %vm249, 0, %v335
    %v338 = vcosq.f32.pop %v336
    %v339 = vsinq.f32.pop %v336
    %vm340 = vweird.f32 %v38
    %v341 = vadd.s32 %v337, 3
    %v342 = vand.u32 %v341, 3
    %vm343 = vcmp.lt.s32.totalorder %v342, 2
    %vm344 = vcmp.eq.s32.totalorder %v342, 0
    %v345 = vxor.u32 %v339, 2147483648
    %v346 = vsel %vm344, %v338, %v345
    %vm347 = vcmp.eq.s32.totalorder %v342, 2
    %v348 = vxor.u32 %v338, 2147483648
    %v349 = vsel %vm347, %v348, %v339
    %v350 = vsel %vm343, %v346, %v349
    %v351 = vsel %vm340, nan, %v350
    %v352 = vand.u32 2147483647, %v39
    %vm353 = vcmp.le.f32.partialorder %v352, 0.7853982
    %vm354 = vcmp.lt.s32.totalorder %v39, 0
    %v355 = vand.u32 %v39, 2139095040
    %v356 = vshrl.u32 %v355, 23
    %v357 = vsub.s32 %v356, 127
    %v358 = vand.u32 2147483647, %v39
    %v359 = vand.u32 %v358, 8388607
    %v360 = vor.u32 %v359, 8388608
    %v361 = vsub.s32 0, %v360
    %v362 = vadd.s32 %v357, 1
    %vm363 = vcmp.gt.s32.totalorder %v362, 0
    %v364 = vsel %vm363, %v362, 0
    %v365 = vshrl.u32 %v364, 5
    %v366 = vand.u32 %v364, 31
    %v367 = vsub.s32 32, %v366
    %v368 = vshrl.u32 683565275, %v367
    %v369 = vshll.u32 683565275, %v366
    %v370 = vshrl.u32 2475754826, %v367
    %v371 = vor.u32 %v369, %v370
    %v372 = vshll.u32 2475754826, %v366
    %v373 = vshrl.u32 2131351028, %v367
    %v374 = vor.u32 %v372, %v373
    %v375 = vshll.u32 2131351028, %v366
    %v376 = vshrl.u32 2102212464, %v367
    %v377 = vor.u32 %v375, %v376
    %v378 = vshll.u32 2102212464, %v366
    %v379 = vshrl.u32 920167782, %v367
    %v380 = vor.u32 %v378, %v379
    %v381 = vshll.u32 920167782, %v366
    %v382 = vshrl.u32 1326507024, %v367
    %v383 = vor.u32 %v381, %v382
    %vm384 = vcmp.lt.s32.totalorder %v365, 1
    %vm385 = vcmp.lt.s32.totalorder %v365, 2
    %vm386 = vcmp.lt.s32.totalorder %v365, 3
    %vm387 = vcmp.lt.s32.totalorder %v365, 4
    %v388 = vsel %vm384, %v368, %v371
    %v389 = vsel %vm387, %v377, 2102212464
    %v390 = vsel %vm386, %v374, %v389
    %v391 = vsel %vm385, %v388, %v390
    %v392 = vsel %vm384, %v371, %v374
    %v393 = vsel %vm387, %v380, 920167782
    %v394 = vsel %vm386, %v377, %v393
    %v395 = vsel %vm385, %v392, %v394
    %v396 = vsel %vm384, %v374, %v377
    %v397 = vsel %vm387, %v383, 1326507024
    %v398 = vsel %vm386, %v380, %v397
    %v399 = vsel %vm385, %v396, %v398
    %v400 = vshll.u32 %v360, 8
    %v401 = vmul.u32.u64.compose %v400, %v399
    %v402 = vextract.low.u32 %v401
    %v403 = vextract.high.u32 %v401
    %v404 = vmul.u32.u64.compose %v400, %v395
    %v405 = vextract.low.u32 %v404
    %v406 = vextract.high.u32 %v404
    %v407 = vmul.u32 %v400, %v391
    %v408 = vadd.s32 %v403, %v405
    %vm409 = vc.u32 %v403, %v405
    %v410 = vadd.s32 %v406, 1
    %v411 = vsel %vm409, %v410, %v406
    %v412 = vadd.s32 %v407, %v411
    %v413 = vadd.s32 %v412, 536870912
    %v414 = vshrl.u32 %v413, 30
    %v415 = vshll.u32 %v414, 30
    %v416 = vsub.s32 %v412, %v415
    %vm417 = vcmp.lt.s32.totalorder %v416, 0
    %v418 = vsub.s32 0, %v416
    %v419 = vsel %vm417, %v418, %v416
    %v420 = vclz %v419
    %v421 = vsub.s32 %v420, 2
    %vm422 = vcmp.gt.s32.totalorder 0, %v421
    %v423 = vsel %vm422, 0, %v421
    %v424 = vsub.s32 32, %v423
    %v425 = vshll.u32 %v416, %v423
    %v426 = vshrl.u32 %v408, %v424
    %v427 = vor.u32 %v425, %v426
    %v428 = vsub.s32 4294967266, %v423
    %v429 = vadd.s32 %v428, 127
    %v430 = vshll.u32 %v429, 23
    %v431 = vor.u32 4788187, %v430
    %v432 = vand.u32 2147483647, %v431
    %v434 = vcvt.s32.f32 %v427
    %v435 = vmul.f32 %v434, %v432
    %v436 = vxor.u32 %v435, 2147483648
    %v437 = vsel %vm354, %v436, %v435
    %v438 = vsub.s32 4, %v414
    %v439 = vsel %vm354, %v438, %v414
    %v440 = vsel %vm353, %v39, %v437
    %v441 = vsel %vm353, 0, %v439
    %v442 = vcosq.f32.pop %v440
    %v443 = vsinq.f32.pop %v440
    %vm444 = vweird.f32 %v39
    %v445 = vadd.s32 %v441, 3
    %v446 = vand.u32 %v445, 3
    %vm447 = vcmp.lt.s32.totalorder %v446, 2
    %vm448 = vcmp.eq.s32.totalorder %v446, 0
    %v449 = vxor.u32 %v443, 2147483648
    %v450 = vsel %vm448, %v442, %v449
    %vm451 = vcmp.eq.s32.totalorder %v446, 2
    %v452 = vxor.u32 %v442, 2147483648
    %v453 = vsel %vm451, %v452, %v443
    %v454 = vsel %vm447, %v450, %v453
    %v455 = vsel %vm444, nan, %v454
    %v456 = vmul.f32 %v32, 10.0
    %v457 = vmul.f32 %v33, 10.0
    %v458 = vmul.f32 %v34, 10.0
    %v459 = vmul.f32 %v35, 10.0
    %v460 = vand.u32 2147483647, %v456
    %vm461 = vcmp.le.f32.partialorder %v460, 0.7853982
    %vm462 = vcmp.lt.s32.totalorder %v456, 0
    %v463 = vand.u32 %v456, 2139095040
    %v464 = vshrl.u32 %v463, 23
    %v465 = vsub.s32 %v464, 127
    %v466 = vand.u32 2147483647, %v456
    %v467 = vand.u32 %v466, 8388607
    %v468 = vor.u32 %v467, 8388608
    %v469 = vsub.s32 0, %v468
    %v470 = vadd.s32 %v465, 1
    %vm471 = vcmp.gt.s32.totalorder %v470, 0
    %v472 = vsel %vm471, %v470, 0
    %v473 = vshrl.u32 %v472, 5
    %v474 = vand.u32 %v472, 31
    %v475 = vsub.s32 32, %v474
    %v476 = vshrl.u32 683565275, %v475
    %v477 = vshll.u32 683565275, %v474
    %v478 = vshrl.u32 2475754826, %v475
    %v479 = vor.u32 %v477, %v478
    %v480 = vshll.u32 2475754826, %v474
    %v481 = vshrl.u32 2131351028, %v475
    %v482 = vor.u32 %v480, %v481
    %v483 = vshll.u32 2131351028, %v474
    %v484 = vshrl.u32 2102212464, %v475
    %v485 = vor.u32 %v483, %v484
    %v486 = vshll.u32 2102212464, %v474
    %v487 = vshrl.u32 920167782, %v475
    %v488 = vor.u32 %v486, %v487
    %v489 = vshll.u32 920167782, %v474
    %v490 = vshrl.u32 1326507024, %v475
    %v491 = vor.u32 %v489, %v490
    %vm492 = vcmp.lt.s32.totalorder %v473, 1
    %vm493 = vcmp.lt.s32.totalorder %v473, 2
    %vm494 = vcmp.lt.s32.totalorder %v473, 3
    %vm495 = vcmp.lt.s32.totalorder %v473, 4
    %v496 = vsel %vm492, %v476, %v479
    %v497 = vsel %vm495, %v485, 2102212464
    %v498 = vsel %vm494, %v482, %v497
    %v499 = vsel %vm493, %v496, %v498
    %v500 = vsel %vm492, %v479, %v482
    %v501 = vsel %vm495, %v488, 920167782
    %v502 = vsel %vm494, %v485, %v501
    %v503 = vsel %vm493, %v500, %v502
    %v504 = vsel %vm492, %v482, %v485
    %v505 = vsel %vm495, %v491, 1326507024
    %v506 = vsel %vm494, %v488, %v505
    %v507 = vsel %vm493, %v504, %v506
    %v508 = vshll.u32 %v468, 8
    %v509 = vmul.u32.u64.compose %v508, %v507
    %v510 = vextract.low.u32 %v509
    %v511 = vextract.high.u32 %v509
    %v512 = vmul.u32.u64.compose %v508, %v503
    %v513 = vextract.low.u32 %v512
    %v514 = vextract.high.u32 %v512
    %v515 = vmul.u32 %v508, %v499
    %v516 = vadd.s32 %v511, %v513
    %vm517 = vc.u32 %v511, %v513
    %v518 = vadd.s32 %v514, 1
    %v519 = vsel %vm517, %v518, %v514
    %v520 = vadd.s32 %v515, %v519
    %v521 = vadd.s32 %v520, 536870912
    %v522 = vshrl.u32 %v521, 30
    %v523 = vshll.u32 %v522, 30
    %v524 = vsub.s32 %v520, %v523
    %vm525 = vcmp.lt.s32.totalorder %v524, 0
    %v526 = vsub.s32 0, %v524
    %v527 = vsel %vm525, %v526, %v524
    %v528 = vclz %v527
    %v529 = vsub.s32 %v528, 2
    %vm530 = vcmp.gt.s32.totalorder 0, %v529
    %v531 = vsel %vm530, 0, %v529
    %v532 = vsub.s32 32, %v531
    %v533 = vshll.u32 %v524, %v531
    %v534 = vshrl.u32 %v516, %v532
    %v535 = vor.u32 %v533, %v534
    %v536 = vsub.s32 4294967266, %v531
    %v537 = vadd.s32 %v536, 127
    %v538 = vshll.u32 %v537, 23
    %v539 = vor.u32 4788187, %v538
    %v540 = vand.u32 2147483647, %v539
    %v542 = vcvt.s32.f32 %v535
    %v543 = vmul.f32 %v542, %v540
    %v544 = vxor.u32 %v543, 2147483648
    %v545 = vsel %vm462, %v544, %v543
    %v546 = vsub.s32 4, %v522
    %v547 = vsel %vm462, %v546, %v522
    %v548 = vsel %vm461, %v456, %v545
    %v549 = vsel %vm461, 0, %v547
    %v550 = vcosq.f32.pop %v548
    %v551 = vsinq.f32.pop %v548
    %vm552 = vweird.f32 %v456
    %v553 = vadd.s32 %v549, 3
    %v554 = vand.u32 %v553, 3
    %vm555 = vcmp.lt.s32.totalorder %v554, 2
    %vm556 = vcmp.eq.s32.totalorder %v554, 0
    %v557 = vxor.u32 %v551, 2147483648
    %v558 = vsel %vm556, %v550, %v557
    %vm559 = vcmp.eq.s32.totalorder %v554, 2
    %v560 = vxor.u32 %v550, 2147483648
    %v561 = vsel %vm559, %v560, %v551
    %v562 = vsel %vm555, %v558, %v561
    %v563 = vsel %vm552, nan, %v562
    %v564 = vand.u32 2147483647, %v457
    %vm565 = vcmp.le.f32.partialorder %v564, 0.7853982
    %vm566 = vcmp.lt.s32.totalorder %v457, 0
    %v567 = vand.u32 %v457, 2139095040
    %v568 = vshrl.u32 %v567, 23
    %v569 = vsub.s32 %v568, 127
    %v570 = vand.u32 2147483647, %v457
    %v571 = vand.u32 %v570, 8388607
    %v572 = vor.u32 %v571, 8388608
    %v573 = vsub.s32 0, %v572
    %v574 = vadd.s32 %v569, 1
    %vm575 = vcmp.gt.s32.totalorder %v574, 0
    %v576 = vsel %vm575, %v574, 0
    %v577 = vshrl.u32 %v576, 5
    %v578 = vand.u32 %v576, 31
    %v579 = vsub.s32 32, %v578
    %v580 = vshrl.u32 683565275, %v579
    %v581 = vshll.u32 683565275, %v578
    %v582 = vshrl.u32 2475754826, %v579
    %v583 = vor.u32 %v581, %v582
    %v584 = vshll.u32 2475754826, %v578
    %v585 = vshrl.u32 2131351028, %v579
    %v586 = vor.u32 %v584, %v585
    %v587 = vshll.u32 2131351028, %v578
    %v588 = vshrl.u32 2102212464, %v579
    %v589 = vor.u32 %v587, %v588
    %v590 = vshll.u32 2102212464, %v578
    %v591 = vshrl.u32 920167782, %v579
    %v592 = vor.u32 %v590, %v591
    %v593 = vshll.u32 920167782, %v578
    %v594 = vshrl.u32 1326507024, %v579
    %v595 = vor.u32 %v593, %v594
    %vm596 = vcmp.lt.s32.totalorder %v577, 1
    %vm597 = vcmp.lt.s32.totalorder %v577, 2
    %vm598 = vcmp.lt.s32.totalorder %v577, 3
    %vm599 = vcmp.lt.s32.totalorder %v577, 4
    %v600 = vsel %vm596, %v580, %v583
    %v601 = vsel %vm599, %v589, 2102212464
    %v602 = vsel %vm598, %v586, %v601
    %v603 = vsel %vm597, %v600, %v602
    %v604 = vsel %vm596, %v583, %v586
    %v605 = vsel %vm599, %v592, 920167782
    %v606 = vsel %vm598, %v589, %v605
    %v607 = vsel %vm597, %v604, %v606
    %v608 = vsel %vm596, %v586, %v589
    %v609 = vsel %vm599, %v595, 1326507024
    %v610 = vsel %vm598, %v592, %v609
    %v611 = vsel %vm597, %v608, %v610
    %v612 = vshll.u32 %v572, 8
    %v613 = vmul.u32.u64.compose %v612, %v611
    %v614 = vextract.low.u32 %v613
    %v615 = vextract.high.u32 %v613
    %v616 = vmul.u32.u64.compose %v612, %v607
    %v617 = vextract.low.u32 %v616
    %v618 = vextract.high.u32 %v616
    %v619 = vmul.u32 %v612, %v603
    %v620 = vadd.s32 %v615, %v617
    %vm621 = vc.u32 %v615, %v617
    %v622 = vadd.s32 %v618, 1
    %v623 = vsel %vm621, %v622, %v618
    %v624 = vadd.s32 %v619, %v623
    %v625 = vadd.s32 %v624, 536870912
    %v626 = vshrl.u32 %v625, 30
    %v627 = vshll.u32 %v626, 30
    %v628 = vsub.s32 %v624, %v627
    %vm629 = vcmp.lt.s32.totalorder %v628, 0
    %v630 = vsub.s32 0, %v628
    %v631 = vsel %vm629, %v630, %v628
    %v632 = vclz %v631
    %v633 = vsub.s32 %v632, 2
    %vm634 = vcmp.gt.s32.totalorder 0, %v633
    %v635 = vsel %vm634, 0, %v633
    %v636 = vsub.s32 32, %v635
    %v637 = vshll.u32 %v628, %v635
    %v638 = vshrl.u32 %v620, %v636
    %v639 = vor.u32 %v637, %v638
    %v640 = vsub.s32 4294967266, %v635
    %v641 = vadd.s32 %v640, 127
    %v642 = vshll.u32 %v641, 23
    %v643 = vor.u32 4788187, %v642
    %v644 = vand.u32 2147483647, %v643
    %v646 = vcvt.s32.f32 %v639
    %v647 = vmul.f32 %v646, %v644
    %v648 = vxor.u32 %v647, 2147483648
    %v649 = vsel %vm566, %v648, %v647
    %v650 = vsub.s32 4, %v626
    %v651 = vsel %vm566, %v650, %v626
    %v652 = vsel %vm565, %v457, %v649
    %v653 = vsel %vm565, 0, %v651
    %v654 = vcosq.f32.pop %v652
    %v655 = vsinq.f32.pop %v652
    %vm656 = vweird.f32 %v457
    %v657 = vadd.s32 %v653, 3
    %v658 = vand.u32 %v657, 3
    %vm659 = vcmp.lt.s32.totalorder %v658, 2
    %vm660 = vcmp.eq.s32.totalorder %v658, 0
    %v661 = vxor.u32 %v655, 2147483648
    %v662 = vsel %vm660, %v654, %v661
    %vm663 = vcmp.eq.s32.totalorder %v658, 2
    %v664 = vxor.u32 %v654, 2147483648
    %v665 = vsel %vm663, %v664, %v655
    %v666 = vsel %vm659, %v662, %v665
    %v667 = vsel %vm656, nan, %v666
    %v668 = vand.u32 2147483647, %v458
    %vm669 = vcmp.le.f32.partialorder %v668, 0.7853982
    %vm670 = vcmp.lt.s32.totalorder %v458, 0
    %v671 = vand.u32 %v458, 2139095040
    %v672 = vshrl.u32 %v671, 23
    %v673 = vsub.s32 %v672, 127
    %v674 = vand.u32 2147483647, %v458
    %v675 = vand.u32 %v674, 8388607
    %v676 = vor.u32 %v675, 8388608
    %v677 = vsub.s32 0, %v676
    %v678 = vadd.s32 %v673, 1
    %vm679 = vcmp.gt.s32.totalorder %v678, 0
    %v680 = vsel %vm679, %v678, 0
    %v681 = vshrl.u32 %v680, 5
    %v682 = vand.u32 %v680, 31
    %v683 = vsub.s32 32, %v682
    %v684 = vshrl.u32 683565275, %v683
    %v685 = vshll.u32 683565275, %v682
    %v686 = vshrl.u32 2475754826, %v683
    %v687 = vor.u32 %v685, %v686
    %v688 = vshll.u32 2475754826, %v682
    %v689 = vshrl.u32 2131351028, %v683
    %v690 = vor.u32 %v688, %v689
    %v691 = vshll.u32 2131351028, %v682
    %v692 = vshrl.u32 2102212464, %v683
    %v693 = vor.u32 %v691, %v692
    %v694 = vshll.u32 2102212464, %v682
    %v695 = vshrl.u32 920167782, %v683
    %v696 = vor.u32 %v694, %v695
    %v697 = vshll.u32 920167782, %v682
    %v698 = vshrl.u32 1326507024, %v683
    %v699 = vor.u32 %v697, %v698
    %vm700 = vcmp.lt.s32.totalorder %v681, 1
    %vm701 = vcmp.lt.s32.totalorder %v681, 2
    %vm702 = vcmp.lt.s32.totalorder %v681, 3
    %vm703 = vcmp.lt.s32.totalorder %v681, 4
    %v704 = vsel %vm700, %v684, %v687
    %v705 = vsel %vm703, %v693, 2102212464
    %v706 = vsel %vm702, %v690, %v705
    %v707 = vsel %vm701, %v704, %v706
    %v708 = vsel %vm700, %v687, %v690
    %v709 = vsel %vm703, %v696, 920167782
    %v710 = vsel %vm702, %v693, %v709
    %v711 = vsel %vm701, %v708, %v710
    %v712 = vsel %vm700, %v690, %v693
    %v713 = vsel %vm703, %v699, 1326507024
    %v714 = vsel %vm702, %v696, %v713
    %v715 = vsel %vm701, %v712, %v714
    %v716 = vshll.u32 %v676, 8
    %v717 = vmul.u32.u64.compose %v716, %v715
    %v718 = vextract.low.u32 %v717
    %v719 = vextract.high.u32 %v717
    %v720 = vmul.u32.u64.compose %v716, %v711
    %v721 = vextract.low.u32 %v720
    %v722 = vextract.high.u32 %v720
    %v723 = vmul.u32 %v716, %v707
    %v724 = vadd.s32 %v719, %v721
    %vm725 = vc.u32 %v719, %v721
    %v726 = vadd.s32 %v722, 1
    %v727 = vsel %vm725, %v726, %v722
    %v728 = vadd.s32 %v723, %v727
    %v729 = vadd.s32 %v728, 536870912
    %v730 = vshrl.u32 %v729, 30
    %v731 = vshll.u32 %v730, 30
    %v732 = vsub.s32 %v728, %v731
    %vm733 = vcmp.lt.s32.totalorder %v732, 0
    %v734 = vsub.s32 0, %v732
    %v735 = vsel %vm733, %v734, %v732
    %v736 = vclz %v735
    %v737 = vsub.s32 %v736, 2
    %vm738 = vcmp.gt.s32.totalorder 0, %v737
    %v739 = vsel %vm738, 0, %v737
    %v740 = vsub.s32 32, %v739
    %v741 = vshll.u32 %v732, %v739
    %v742 = vshrl.u32 %v724, %v740
    %v743 = vor.u32 %v741, %v742
    %v744 = vsub.s32 4294967266, %v739
    %v745 = vadd.s32 %v744, 127
    %v746 = vshll.u32 %v745, 23
    %v747 = vor.u32 4788187, %v746
    %v748 = vand.u32 2147483647, %v747
    %v750 = vcvt.s32.f32 %v743
    %v751 = vmul.f32 %v750, %v748
    %v752 = vxor.u32 %v751, 2147483648
    %v753 = vsel %vm670, %v752, %v751
    %v754 = vsub.s32 4, %v730
    %v755 = vsel %vm670, %v754, %v730
    %v756 = vsel %vm669, %v458, %v753
    %v757 = vsel %vm669, 0, %v755
    %v758 = vcosq.f32.pop %v756
    %v759 = vsinq.f32.pop %v756
    %vm760 = vweird.f32 %v458
    %v761 = vadd.s32 %v757, 3
    %v762 = vand.u32 %v761, 3
    %vm763 = vcmp.lt.s32.totalorder %v762, 2
    %vm764 = vcmp.eq.s32.totalorder %v762, 0
    %v765 = vxor.u32 %v759, 2147483648
    %v766 = vsel %vm764, %v758, %v765
    %vm767 = vcmp.eq.s32.totalorder %v762, 2
    %v768 = vxor.u32 %v758, 2147483648
    %v769 = vsel %vm767, %v768, %v759
    %v770 = vsel %vm763, %v766, %v769
    %v771 = vsel %vm760, nan, %v770
    %v772 = vand.u32 2147483647, %v459
    %vm773 = vcmp.le.f32.partialorder %v772, 0.7853982
    %vm774 = vcmp.lt.s32.totalorder %v459, 0
    %v775 = vand.u32 %v459, 2139095040
    %v776 = vshrl.u32 %v775, 23
    %v777 = vsub.s32 %v776, 127
    %v778 = vand.u32 2147483647, %v459
    %v779 = vand.u32 %v778, 8388607
    %v780 = vor.u32 %v779, 8388608
    %v781 = vsub.s32 0, %v780
    %v782 = vadd.s32 %v777, 1
    %vm783 = vcmp.gt.s32.totalorder %v782, 0
    %v784 = vsel %vm783, %v782, 0
    %v785 = vshrl.u32 %v784, 5
    %v786 = vand.u32 %v784, 31
    %v787 = vsub.s32 32, %v786
    %v788 = vshrl.u32 683565275, %v787
    %v789 = vshll.u32 683565275, %v786
    %v790 = vshrl.u32 2475754826, %v787
    %v791 = vor.u32 %v789, %v790
    %v792 = vshll.u32 2475754826, %v786
    %v793 = vshrl.u32 2131351028, %v787
    %v794 = vor.u32 %v792, %v793
    %v795 = vshll.u32 2131351028, %v786
    %v796 = vshrl.u32 2102212464, %v787
    %v797 = vor.u32 %v795, %v796
    %v798 = vshll.u32 2102212464, %v786
    %v799 = vshrl.u32 920167782, %v787
    %v800 = vor.u32 %v798, %v799
    %v801 = vshll.u32 920167782, %v786
    %v802 = vshrl.u32 1326507024, %v787
    %v803 = vor.u32 %v801, %v802
    %vm804 = vcmp.lt.s32.totalorder %v785, 1
    %vm805 = vcmp.lt.s32.totalorder %v785, 2
    %vm806 = vcmp.lt.s32.totalorder %v785, 3
    %vm807 = vcmp.lt.s32.totalorder %v785, 4
    %v808 = vsel %vm804, %v788, %v791
    %v809 = vsel %vm807, %v797, 2102212464
    %v810 = vsel %vm806, %v794, %v809
    %v811 = vsel %vm805, %v808, %v810
    %v812 = vsel %vm804, %v791, %v794
    %v813 = vsel %vm807, %v800, 920167782
    %v814 = vsel %vm806, %v797, %v813
    %v815 = vsel %vm805, %v812, %v814
    %v816 = vsel %vm804, %v794, %v797
    %v817 = vsel %vm807, %v803, 1326507024
    %v818 = vsel %vm806, %v800, %v817
    %v819 = vsel %vm805, %v816, %v818
    %v820 = vshll.u32 %v780, 8
    %v821 = vmul.u32.u64.compose %v820, %v819
    %v822 = vextract.low.u32 %v821
    %v823 = vextract.high.u32 %v821
    %v824 = vmul.u32.u64.compose %v820, %v815
    %v825 = vextract.low.u32 %v824
    %v826 = vextract.high.u32 %v824
    %v827 = vmul.u32 %v820, %v811
    %v828 = vadd.s32 %v823, %v825
    %vm829 = vc.u32 %v823, %v825
    %v830 = vadd.s32 %v826, 1
    %v831 = vsel %vm829, %v830, %v826
    %v832 = vadd.s32 %v827, %v831
    %v833 = vadd.s32 %v832, 536870912
    %v834 = vshrl.u32 %v833, 30
    %v835 = vshll.u32 %v834, 30
    %v836 = vsub.s32 %v832, %v835
    %vm837 = vcmp.lt.s32.totalorder %v836, 0
    %v838 = vsub.s32 0, %v836
    %v839 = vsel %vm837, %v838, %v836
    %v840 = vclz %v839
    %v841 = vsub.s32 %v840, 2
    %vm842 = vcmp.gt.s32.totalorder 0, %v841
    %v843 = vsel %vm842, 0, %v841
    %v844 = vsub.s32 32, %v843
    %v845 = vshll.u32 %v836, %v843
    %v846 = vshrl.u32 %v828, %v844
    %v847 = vor.u32 %v845, %v846
    %v848 = vsub.s32 4294967266, %v843
    %v849 = vadd.s32 %v848, 127
    %v850 = vshll.u32 %v849, 23
    %v851 = vor.u32 4788187, %v850
    %v852 = vand.u32 2147483647, %v851
    %v854 = vcvt.s32.f32 %v847
    %v855 = vmul.f32 %v854, %v852
    %v856 = vxor.u32 %v855, 2147483648
    %v857 = vsel %vm774, %v856, %v855
    %v858 = vsub.s32 4, %v834
    %v859 = vsel %vm774, %v858, %v834
    %v860 = vsel %vm773, %v459, %v857
    %v861 = vsel %vm773, 0, %v859
    %v862 = vcosq.f32.pop %v860
    %v863 = vsinq.f32.pop %v860
    %vm864 = vweird.f32 %v459
    %v865 = vadd.s32 %v861, 3
    %v866 = vand.u32 %v865, 3
    %vm867 = vcmp.lt.s32.totalorder %v866, 2
    %vm868 = vcmp.eq.s32.totalorder %v866, 0
    %v869 = vxor.u32 %v863, 2147483648
    %v870 = vsel %vm868, %v862, %v869
    %vm871 = vcmp.eq.s32.totalorder %v866, 2
    %v872 = vxor.u32 %v862, 2147483648
    %v873 = vsel %vm871, %v872, %v863
    %v874 = vsel %vm867, %v870, %v873
    %v875 = vsel %vm864, nan, %v874
    %v880 = vrot.slane %v143, 5
    %v881 = vrot.slane %v880, 4
    %v882 = vrot.slane %v247, 5
    %v883 = vrot.slane %v882, 4
    %v884 = vrot.slane %v351, 5
    %v885 = vrot.slane %v884, 4
    %v886 = vrot.slane %v455, 5
    %v887 = vrot.slane %v886, 4
    %v892 = vadd.f32 %v143, %v881
    %v893 = vadd.f32 %v247, %v883
    %v894 = vadd.f32 %v351, %v885
    %v895 = vadd.f32 %v455, %v887
    %v896 = vrot.slane %v143, 6
    %v897 = vrot.slane %v896, 4
    %v898 = vrot.slane %v247, 6
    %v899 = vrot.slane %v898, 4
    %v900 = vrot.slane %v351, 6
    %v901 = vrot.slane %v900, 4
    %v902 = vrot.slane %v455, 6
    %v903 = vrot.slane %v902, 4
    %v908 = vadd.f32 %v892, %v897
    %v909 = vadd.f32 %v893, %v899
    %v910 = vadd.f32 %v894, %v901
    %v911 = vadd.f32 %v895, %v903
    %v912 = vmul.f32 %v908, 0.33333334
    %v913 = vmul.f32 %v909, 0.33333334
    %v914 = vmul.f32 %v910, 0.33333334
    %v915 = vmul.f32 %v911, 0.33333334
    %v920 = vrot.slane %v563, 5
    %v921 = vrot.slane %v920, 4
    %v922 = vrot.slane %v667, 5
    %v923 = vrot.slane %v922, 4
    %v924 = vrot.slane %v771, 5
    %v925 = vrot.slane %v924, 4
    %v926 = vrot.slane %v875, 5
    %v927 = vrot.slane %v926, 4
    %v932 = vadd.f32 %v563, %v921
    %v933 = vadd.f32 %v667, %v923
    %v934 = vadd.f32 %v771, %v925
    %v935 = vadd.f32 %v875, %v927
    %v936 = vrot.slane %v563, 6
    %v937 = vrot.slane %v936, 4
    %v938 = vrot.slane %v667, 6
    %v939 = vrot.slane %v938, 4
    %v940 = vrot.slane %v771, 6
    %v941 = vrot.slane %v940, 4
    %v942 = vrot.slane %v875, 6
    %v943 = vrot.slane %v942, 4
    %v948 = vadd.f32 %v932, %v937
    %v949 = vadd.f32 %v933, %v939
    %v950 = vadd.f32 %v934, %v941
    %v951 = vadd.f32 %v935, %v943
    %v952 = vmul.f32 %v948, 0.33333334
    %v953 = vmul.f32 %v949, 0.33333334
    %v954 = vmul.f32 %v950, 0.33333334
    %v955 = vmul.f32 %v951, 0.33333334
    %v960 = vrot.slane %v912, 7
    %v961 = vrot.slane %v913, 7
    %v962 = vrot.slane %v914, 7
    %v963 = vrot.slane %v915, 7
    %v968 = vadd.f32 %v32, %v960
    %v969 = vadd.f32 %v33, %v961
    %v970 = vadd.f32 %v34, %v962
    %v971 = vadd.f32 %v35, %v963
    %v976 = vrot.slane %v952, 6
    %v977 = vrot.slane %v953, 6
    %v978 = vrot.slane %v954, 6
    %v979 = vrot.slane %v955, 6
    %v984 = vadd.f32 %v32, %v976
    %v985 = vadd.f32 %v33, %v977
    %v986 = vadd.f32 %v34, %v978
    %v987 = vadd.f32 %v35, %v979
    %v988 = vld [vmem:[%s1] sm:$0xff]
    %v989 = vld [vmem:[%s1 + $0x8] sm:$0xff]
    %v990 = vld [vmem:[%s1 + $0x10] sm:$0xff]
    %v991 = vld [vmem:[%s1 + $0x18] sm:$0xff]
    %v992 = vld [vmem:[%s2] sm:$0xff]
    %v993 = vld [vmem:[%s2 + $0x8] sm:$0xff]
    %v994 = vld [vmem:[%s2 + $0x10] sm:$0xff]
    %v995 = vld [vmem:[%s2 + $0x18] sm:$0xff]
    %997 = vset.pattern.permute.xlu0 0
    %998 = vperm.xlu0 %997, %v988
    %v999 = vpop.permute.xlu0 %998
    %1002 = vset.pattern.permute.xlu0 0
    %1003 = vperm.xlu0 %1002, %v989
    %v1004 = vpop.permute.xlu0 %1003
    %1007 = vset.pattern.permute.xlu0 0
    %1008 = vperm.xlu0 %1007, %v990
    %v1009 = vpop.permute.xlu0 %1008
    %1012 = vset.pattern.permute.xlu0 0
    %1013 = vperm.xlu0 %1012, %v991
    %v1014 = vpop.permute.xlu0 %1013
    %v1020 = vlaneseq
    %v1021 = vshrl.u32 %v1020, 7
    %v1022 = vsub.s32 0, %v1021
    %v1023 = vrot.slane %v32, %v1022
    %v1024 = vlaneseq
    %v1025 = vshrl.u32 %v1024, 7
    %v1026 = vsub.s32 4, %v1025
    %v1027 = vrot.slane %v32, %v1026
    %v1028 = vlaneseq
    %v1029 = vshrl.u32 %v1028, 7
    %v1030 = vsub.s32 0, %v1029
    %v1031 = vrot.slane %v33, %v1030
    %v1032 = vlaneseq
    %v1033 = vshrl.u32 %v1032, 7
    %v1034 = vsub.s32 4, %v1033
    %v1035 = vrot.slane %v33, %v1034
    %v1036 = vlaneseq
    %v1037 = vshrl.u32 %v1036, 7
    %v1038 = vsub.s32 0, %v1037
    %v1039 = vrot.slane %v34, %v1038
    %v1040 = vlaneseq
    %v1041 = vshrl.u32 %v1040, 7
    %v1042 = vsub.s32 4, %v1041
    %v1043 = vrot.slane %v34, %v1042
    %v1044 = vlaneseq
    %v1045 = vshrl.u32 %v1044, 7
    %v1046 = vsub.s32 0, %v1045
    %v1047 = vrot.slane %v35, %v1046
    %v1048 = vlaneseq
    %v1049 = vshrl.u32 %v1048, 7
    %v1050 = vsub.s32 4, %v1049
    %v1051 = vrot.slane %v35, %v1050
    %v1060 = vlaneseq
    %v1061 = vshrl.u32 %v1060, 7
    %v1062 = vsub.s32 0, %v1061
    %v1063 = vrot.slane %v1023, %v1062
    %v1064 = vlaneseq
    %v1065 = vshrl.u32 %v1064, 7
    %v1066 = vsub.s32 0, %v1065
    %v1067 = vrot.slane %v1027, %v1066
    %v1068 = vlaneseq
    %v1069 = vshrl.u32 %v1068, 7
    %v1070 = vsub.s32 0, %v1069
    %v1071 = vrot.slane %v1031, %v1070
    %v1072 = vlaneseq
    %v1073 = vshrl.u32 %v1072, 7
    %v1074 = vsub.s32 0, %v1073
    %v1075 = vrot.slane %v1035, %v1074
    %v1076 = vlaneseq
    %v1077 = vshrl.u32 %v1076, 7
    %v1078 = vsub.s32 0, %v1077
    %v1079 = vrot.slane %v1039, %v1078
    %v1080 = vlaneseq
    %v1081 = vshrl.u32 %v1080, 7
    %v1082 = vsub.s32 0, %v1081
    %v1083 = vrot.slane %v1043, %v1082
    %v1084 = vlaneseq
    %v1085 = vshrl.u32 %v1084, 7
    %v1086 = vsub.s32 0, %v1085
    %v1087 = vrot.slane %v1047, %v1086
    %v1088 = vlaneseq
    %v1089 = vshrl.u32 %v1088, 7
    %v1090 = vsub.s32 0, %v1089
    %v1091 = vrot.slane %v1051, %v1090
    %v1092 = vmul.f32 %v999, %v1063
    %v1093 = vmul.f32 %v999, %v1067
    %v1094 = vmul.f32 %v999, %v1071
    %v1095 = vmul.f32 %v999, %v1075
    %v1096 = vmul.f32 %v999, %v1079
    %v1097 = vmul.f32 %v999, %v1083
    %v1098 = vmul.f32 %v999, %v1087
    %v1099 = vmul.f32 %v999, %v1091
    %v1100 = vmul.f32 %v1004, %v1063
    %v1101 = vmul.f32 %v1004, %v1067
    %v1102 = vmul.f32 %v1004, %v1071
    %v1103 = vmul.f32 %v1004, %v1075
    %v1104 = vmul.f32 %v1004, %v1079
    %v1105 = vmul.f32 %v1004, %v1083
    %v1106 = vmul.f32 %v1004, %v1087
    %v1107 = vmul.f32 %v1004, %v1091
    %v1108 = vmul.f32 %v1009, %v1063
    %v1109 = vmul.f32 %v1009, %v1067
    %v1110 = vmul.f32 %v1009, %v1071
    %v1111 = vmul.f32 %v1009, %v1075
    %v1112 = vmul.f32 %v1009, %v1079
    %v1113 = vmul.f32 %v1009, %v1083
    %v1114 = vmul.f32 %v1009, %v1087
    %v1115 = vmul.f32 %v1009, %v1091
    %v1116 = vmul.f32 %v1014, %v1063
    %v1117 = vmul.f32 %v1014, %v1067
    %v1118 = vmul.f32 %v1014, %v1071
    %v1119 = vmul.f32 %v1014, %v1075
    %v1120 = vmul.f32 %v1014, %v1079
    %v1121 = vmul.f32 %v1014, %v1083
    %v1122 = vmul.f32 %v1014, %v1087
    %v1123 = vmul.f32 %v1014, %v1091
    %1125 = vset.pattern.permute.xlu0 0
    %1126 = vperm.xlu0 %1125, %v992
    %v1127 = vpop.permute.xlu0 %1126
    %1130 = vset.pattern.permute.xlu0 0
    %1131 = vperm.xlu0 %1130, %v993
    %v1132 = vpop.permute.xlu0 %1131
    %1135 = vset.pattern.permute.xlu0 0
    %1136 = vperm.xlu0 %1135, %v994
    %v1137 = vpop.permute.xlu0 %1136
    %1140 = vset.pattern.permute.xlu0 0
    %1141 = vperm.xlu0 %1140, %v995
    %v1142 = vpop.permute.xlu0 %1141
    %v1144 = vadd.f32 %v1127, %v1092
    %v1145 = vadd.f32 %v1127, %v1093
    %v1146 = vadd.f32 %v1127, %v1094
    %v1147 = vadd.f32 %v1127, %v1095
    %v1148 = vadd.f32 %v1127, %v1096
    %v1149 = vadd.f32 %v1127, %v1097
    %v1150 = vadd.f32 %v1127, %v1098
    %v1151 = vadd.f32 %v1127, %v1099
    %v1152 = vadd.f32 %v1132, %v1100
    %v1153 = vadd.f32 %v1132, %v1101
    %v1154 = vadd.f32 %v1132, %v1102
    %v1155 = vadd.f32 %v1132, %v1103
    %v1156 = vadd.f32 %v1132, %v1104
    %v1157 = vadd.f32 %v1132, %v1105
    %v1158 = vadd.f32 %v1132, %v1106
    %v1159 = vadd.f32 %v1132, %v1107
    %v1160 = vadd.f32 %v1137, %v1108
    %v1161 = vadd.f32 %v1137, %v1109
    %v1162 = vadd.f32 %v1137, %v1110
    %v1163 = vadd.f32 %v1137, %v1111
    %v1164 = vadd.f32 %v1137, %v1112
    %v1165 = vadd.f32 %v1137, %v1113
    %v1166 = vadd.f32 %v1137, %v1114
    %v1167 = vadd.f32 %v1137, %v1115
    %v1168 = vadd.f32 %v1142, %v1116
    %v1169 = vadd.f32 %v1142, %v1117
    %v1170 = vadd.f32 %v1142, %v1118
    %v1171 = vadd.f32 %v1142, %v1119
    %v1172 = vadd.f32 %v1142, %v1120
    %v1173 = vadd.f32 %v1142, %v1121
    %v1174 = vadd.f32 %v1142, %v1122
    %v1175 = vadd.f32 %v1142, %v1123
    %1176 = vset.pattern.permute.xlu0 1
    %1177 = vperm.xlu0 %1176, %v988
    %v1178 = vpop.permute.xlu0 %1177
    %1180 = vset.pattern.permute.xlu0 1
    %1181 = vperm.xlu0 %1180, %v989
    %v1182 = vpop.permute.xlu0 %1181
    %1184 = vset.pattern.permute.xlu0 1
    %1185 = vperm.xlu0 %1184, %v990
    %v1186 = vpop.permute.xlu0 %1185
    %1188 = vset.pattern.permute.xlu0 1
    %1189 = vperm.xlu0 %1188, %v991
    %v1190 = vpop.permute.xlu0 %1189
    %v1196 = vlaneseq
    %v1197 = vshrl.u32 %v1196, 7
    %v1198 = vsub.s32 1, %v1197
    %v1199 = vrot.slane %v968, %v1198
    %v1200 = vlaneseq
    %v1201 = vshrl.u32 %v1200, 7
    %v1202 = vsub.s32 5, %v1201
    %v1203 = vrot.slane %v968, %v1202
    %v1204 = vlaneseq
    %v1205 = vshrl.u32 %v1204, 7
    %v1206 = vsub.s32 1, %v1205
    %v1207 = vrot.slane %v969, %v1206
    %v1208 = vlaneseq
    %v1209 = vshrl.u32 %v1208, 7
    %v1210 = vsub.s32 5, %v1209
    %v1211 = vrot.slane %v969, %v1210
    %v1212 = vlaneseq
    %v1213 = vshrl.u32 %v1212, 7
    %v1214 = vsub.s32 1, %v1213
    %v1215 = vrot.slane %v970, %v1214
    %v1216 = vlaneseq
    %v1217 = vshrl.u32 %v1216, 7
    %v1218 = vsub.s32 5, %v1217
    %v1219 = vrot.slane %v970, %v1218
    %v1220 = vlaneseq
    %v1221 = vshrl.u32 %v1220, 7
    %v1222 = vsub.s32 1, %v1221
    %v1223 = vrot.slane %v971, %v1222
    %v1224 = vlaneseq
    %v1225 = vshrl.u32 %v1224, 7
    %v1226 = vsub.s32 5, %v1225
    %v1227 = vrot.slane %v971, %v1226
    %v1236 = vlaneseq
    %v1237 = vshrl.u32 %v1236, 7
    %v1238 = vsub.s32 1, %v1237
    %v1239 = vrot.slane %v1199, %v1238
    %v1240 = vlaneseq
    %v1241 = vshrl.u32 %v1240, 7
    %v1242 = vsub.s32 1, %v1241
    %v1243 = vrot.slane %v1203, %v1242
    %v1244 = vlaneseq
    %v1245 = vshrl.u32 %v1244, 7
    %v1246 = vsub.s32 1, %v1245
    %v1247 = vrot.slane %v1207, %v1246
    %v1248 = vlaneseq
    %v1249 = vshrl.u32 %v1248, 7
    %v1250 = vsub.s32 1, %v1249
    %v1251 = vrot.slane %v1211, %v1250
    %v1252 = vlaneseq
    %v1253 = vshrl.u32 %v1252, 7
    %v1254 = vsub.s32 1, %v1253
    %v1255 = vrot.slane %v1215, %v1254
    %v1256 = vlaneseq
    %v1257 = vshrl.u32 %v1256, 7
    %v1258 = vsub.s32 1, %v1257
    %v1259 = vrot.slane %v1219, %v1258
    %v1260 = vlaneseq
    %v1261 = vshrl.u32 %v1260, 7
    %v1262 = vsub.s32 1, %v1261
    %v1263 = vrot.slane %v1223, %v1262
    %v1264 = vlaneseq
    %v1265 = vshrl.u32 %v1264, 7
    %v1266 = vsub.s32 1, %v1265
    %v1267 = vrot.slane %v1227, %v1266
    %v1268 = vmul.f32 %v1178, %v1239
    %v1269 = vmul.f32 %v1178, %v1243
    %v1270 = vmul.f32 %v1178, %v1247
    %v1271 = vmul.f32 %v1178, %v1251
    %v1272 = vmul.f32 %v1178, %v1255
    %v1273 = vmul.f32 %v1178, %v1259
    %v1274 = vmul.f32 %v1178, %v1263
    %v1275 = vmul.f32 %v1178, %v1267
    %v1276 = vmul.f32 %v1182, %v1239
    %v1277 = vmul.f32 %v1182, %v1243
    %v1278 = vmul.f32 %v1182, %v1247
    %v1279 = vmul.f32 %v1182, %v1251
    %v1280 = vmul.f32 %v1182, %v1255
    %v1281 = vmul.f32 %v1182, %v1259
    %v1282 = vmul.f32 %v1182, %v1263
    %v1283 = vmul.f32 %v1182, %v1267
    %v1284 = vmul.f32 %v1186, %v1239
    %v1285 = vmul.f32 %v1186, %v1243
    %v1286 = vmul.f32 %v1186, %v1247
    %v1287 = vmul.f32 %v1186, %v1251
    %v1288 = vmul.f32 %v1186, %v1255
    %v1289 = vmul.f32 %v1186, %v1259
    %v1290 = vmul.f32 %v1186, %v1263
    %v1291 = vmul.f32 %v1186, %v1267
    %v1292 = vmul.f32 %v1190, %v1239
    %v1293 = vmul.f32 %v1190, %v1243
    %v1294 = vmul.f32 %v1190, %v1247
    %v1295 = vmul.f32 %v1190, %v1251
    %v1296 = vmul.f32 %v1190, %v1255
    %v1297 = vmul.f32 %v1190, %v1259
    %v1298 = vmul.f32 %v1190, %v1263
    %v1299 = vmul.f32 %v1190, %v1267
    %v1300 = vadd.f32 %v1144, %v1268
    %v1301 = vadd.f32 %v1145, %v1269
    %v1302 = vadd.f32 %v1146, %v1270
    %v1303 = vadd.f32 %v1147, %v1271
    %v1304 = vadd.f32 %v1148, %v1272
    %v1305 = vadd.f32 %v1149, %v1273
    %v1306 = vadd.f32 %v1150, %v1274
    %v1307 = vadd.f32 %v1151, %v1275
    %v1308 = vadd.f32 %v1152, %v1276
    %v1309 = vadd.f32 %v1153, %v1277
    %v1310 = vadd.f32 %v1154, %v1278
    %v1311 = vadd.f32 %v1155, %v1279
    %v1312 = vadd.f32 %v1156, %v1280
    %v1313 = vadd.f32 %v1157, %v1281
    %v1314 = vadd.f32 %v1158, %v1282
    %v1315 = vadd.f32 %v1159, %v1283
    %v1316 = vadd.f32 %v1160, %v1284
    %v1317 = vadd.f32 %v1161, %v1285
    %v1318 = vadd.f32 %v1162, %v1286
    %v1319 = vadd.f32 %v1163, %v1287
    %v1320 = vadd.f32 %v1164, %v1288
    %v1321 = vadd.f32 %v1165, %v1289
    %v1322 = vadd.f32 %v1166, %v1290
    %v1323 = vadd.f32 %v1167, %v1291
    %v1324 = vadd.f32 %v1168, %v1292
    %v1325 = vadd.f32 %v1169, %v1293
    %v1326 = vadd.f32 %v1170, %v1294
    %v1327 = vadd.f32 %v1171, %v1295
    %v1328 = vadd.f32 %v1172, %v1296
    %v1329 = vadd.f32 %v1173, %v1297
    %v1330 = vadd.f32 %v1174, %v1298
    %v1331 = vadd.f32 %v1175, %v1299
    %1332 = vset.pattern.permute.xlu0 2
    %1333 = vperm.xlu0 %1332, %v988
    %v1334 = vpop.permute.xlu0 %1333
    %1336 = vset.pattern.permute.xlu0 2
    %1337 = vperm.xlu0 %1336, %v989
    %v1338 = vpop.permute.xlu0 %1337
    %1340 = vset.pattern.permute.xlu0 2
    %1341 = vperm.xlu0 %1340, %v990
    %v1342 = vpop.permute.xlu0 %1341
    %1344 = vset.pattern.permute.xlu0 2
    %1345 = vperm.xlu0 %1344, %v991
    %v1346 = vpop.permute.xlu0 %1345
    %v1352 = vlaneseq
    %v1353 = vshrl.u32 %v1352, 7
    %v1354 = vsub.s32 2, %v1353
    %v1355 = vrot.slane %v984, %v1354
    %v1356 = vlaneseq
    %v1357 = vshrl.u32 %v1356, 7
    %v1358 = vsub.s32 6, %v1357
    %v1359 = vrot.slane %v984, %v1358
    %v1360 = vlaneseq
    %v1361 = vshrl.u32 %v1360, 7
    %v1362 = vsub.s32 2, %v1361
    %v1363 = vrot.slane %v985, %v1362
    %v1364 = vlaneseq
    %v1365 = vshrl.u32 %v1364, 7
    %v1366 = vsub.s32 6, %v1365
    %v1367 = vrot.slane %v985, %v1366
    %v1368 = vlaneseq
    %v1369 = vshrl.u32 %v1368, 7
    %v1370 = vsub.s32 2, %v1369
    %v1371 = vrot.slane %v986, %v1370
    %v1372 = vlaneseq
    %v1373 = vshrl.u32 %v1372, 7
    %v1374 = vsub.s32 6, %v1373
    %v1375 = vrot.slane %v986, %v1374
    %v1376 = vlaneseq
    %v1377 = vshrl.u32 %v1376, 7
    %v1378 = vsub.s32 2, %v1377
    %v1379 = vrot.slane %v987, %v1378
    %v1380 = vlaneseq
    %v1381 = vshrl.u32 %v1380, 7
    %v1382 = vsub.s32 6, %v1381
    %v1383 = vrot.slane %v987, %v1382
    %v1392 = vlaneseq
    %v1393 = vshrl.u32 %v1392, 7
    %v1394 = vsub.s32 2, %v1393
    %v1395 = vrot.slane %v1355, %v1394
    %v1396 = vlaneseq
    %v1397 = vshrl.u32 %v1396, 7
    %v1398 = vsub.s32 2, %v1397
    %v1399 = vrot.slane %v1359, %v1398
    %v1400 = vlaneseq
    %v1401 = vshrl.u32 %v1400, 7
    %v1402 = vsub.s32 2, %v1401
    %v1403 = vrot.slane %v1363, %v1402
    %v1404 = vlaneseq
    %v1405 = vshrl.u32 %v1404, 7
    %v1406 = vsub.s32 2, %v1405
    %v1407 = vrot.slane %v1367, %v1406
    %v1408 = vlaneseq
    %v1409 = vshrl.u32 %v1408, 7
    %v1410 = vsub.s32 2, %v1409
    %v1411 = vrot.slane %v1371, %v1410
    %v1412 = vlaneseq
    %v1413 = vshrl.u32 %v1412, 7
    %v1414 = vsub.s32 2, %v1413
    %v1415 = vrot.slane %v1375, %v1414
    %v1416 = vlaneseq
    %v1417 = vshrl.u32 %v1416, 7
    %v1418 = vsub.s32 2, %v1417
    %v1419 = vrot.slane %v1379, %v1418
    %v1420 = vlaneseq
    %v1421 = vshrl.u32 %v1420, 7
    %v1422 = vsub.s32 2, %v1421
    %v1423 = vrot.slane %v1383, %v1422
    %v1424 = vmul.f32 %v1334, %v1395
    %v1425 = vmul.f32 %v1334, %v1399
    %v1426 = vmul.f32 %v1334, %v1403
    %v1427 = vmul.f32 %v1334, %v1407
    %v1428 = vmul.f32 %v1334, %v1411
    %v1429 = vmul.f32 %v1334, %v1415
    %v1430 = vmul.f32 %v1334, %v1419
    %v1431 = vmul.f32 %v1334, %v1423
    %v1432 = vmul.f32 %v1338, %v1395
    %v1433 = vmul.f32 %v1338, %v1399
    %v1434 = vmul.f32 %v1338, %v1403
    %v1435 = vmul.f32 %v1338, %v1407
    %v1436 = vmul.f32 %v1338, %v1411
    %v1437 = vmul.f32 %v1338, %v1415
    %v1438 = vmul.f32 %v1338, %v1419
    %v1439 = vmul.f32 %v1338, %v1423
    %v1440 = vmul.f32 %v1342, %v1395
    %v1441 = vmul.f32 %v1342, %v1399
    %v1442 = vmul.f32 %v1342, %v1403
    %v1443 = vmul.f32 %v1342, %v1407
    %v1444 = vmul.f32 %v1342, %v1411
    %v1445 = vmul.f32 %v1342, %v1415
    %v1446 = vmul.f32 %v1342, %v1419
    %v1447 = vmul.f32 %v1342, %v1423
    %v1448 = vmul.f32 %v1346, %v1395
    %v1449 = vmul.f32 %v1346, %v1399
    %v1450 = vmul.f32 %v1346, %v1403
    %v1451 = vmul.f32 %v1346, %v1407
    %v1452 = vmul.f32 %v1346, %v1411
    %v1453 = vmul.f32 %v1346, %v1415
    %v1454 = vmul.f32 %v1346, %v1419
    %v1455 = vmul.f32 %v1346, %v1423
    %v1456 = vadd.f32 %v1300, %v1424
    %v1457 = vadd.f32 %v1301, %v1425
    %v1458 = vadd.f32 %v1302, %v1426
    %v1459 = vadd.f32 %v1303, %v1427
    %v1460 = vadd.f32 %v1304, %v1428
    %v1461 = vadd.f32 %v1305, %v1429
    %v1462 = vadd.f32 %v1306, %v1430
    %v1463 = vadd.f32 %v1307, %v1431
    %v1464 = vadd.f32 %v1308, %v1432
    %v1465 = vadd.f32 %v1309, %v1433
    %v1466 = vadd.f32 %v1310, %v1434
    %v1467 = vadd.f32 %v1311, %v1435
    %v1468 = vadd.f32 %v1312, %v1436
    %v1469 = vadd.f32 %v1313, %v1437
    %v1470 = vadd.f32 %v1314, %v1438
    %v1471 = vadd.f32 %v1315, %v1439
    %v1472 = vadd.f32 %v1316, %v1440
    %v1473 = vadd.f32 %v1317, %v1441
    %v1474 = vadd.f32 %v1318, %v1442
    %v1475 = vadd.f32 %v1319, %v1443
    %v1476 = vadd.f32 %v1320, %v1444
    %v1477 = vadd.f32 %v1321, %v1445
    %v1478 = vadd.f32 %v1322, %v1446
    %v1479 = vadd.f32 %v1323, %v1447
    %v1480 = vadd.f32 %v1324, %v1448
    %v1481 = vadd.f32 %v1325, %v1449
    %v1482 = vadd.f32 %v1326, %v1450
    %v1483 = vadd.f32 %v1327, %v1451
    %v1484 = vadd.f32 %v1328, %v1452
    %v1485 = vadd.f32 %v1329, %v1453
    %v1486 = vadd.f32 %v1330, %v1454
    %v1487 = vadd.f32 %v1331, %v1455
    %v1488 = vpack.c.bf16 %v1464, %v1456
    %v1489 = vpack.c.bf16 %v1465, %v1457
    %v1490 = vpack.c.bf16 %v1466, %v1458
    %v1491 = vpack.c.bf16 %v1467, %v1459
    %v1492 = vpack.c.bf16 %v1468, %v1460
    %v1493 = vpack.c.bf16 %v1469, %v1461
    %v1494 = vpack.c.bf16 %v1470, %v1462
    %v1495 = vpack.c.bf16 %v1471, %v1463
    %v1496 = vpack.c.bf16 %v1480, %v1472
    %v1497 = vpack.c.bf16 %v1481, %v1473
    %v1498 = vpack.c.bf16 %v1482, %v1474
    %v1499 = vpack.c.bf16 %v1483, %v1475
    %v1500 = vpack.c.bf16 %v1484, %v1476
    %v1501 = vpack.c.bf16 %v1485, %v1477
    %v1502 = vpack.c.bf16 %v1486, %v1478
    %v1503 = vpack.c.bf16 %v1487, %v1479
    %v1504 = vmul.bf16 %v1488, 1056980736
    %v1505 = vmul.bf16 %v1489, 1056980736
    %v1506 = vmul.bf16 %v1490, 1056980736
    %v1507 = vmul.bf16 %v1491, 1056980736
    %v1508 = vmul.bf16 %v1492, 1056980736
    %v1509 = vmul.bf16 %v1493, 1056980736
    %v1510 = vmul.bf16 %v1494, 1056980736
    %v1511 = vmul.bf16 %v1495, 1056980736
    %v1512 = vmul.bf16 %v1496, 1056980736
    %v1513 = vmul.bf16 %v1497, 1056980736
    %v1514 = vmul.bf16 %v1498, 1056980736
    %v1515 = vmul.bf16 %v1499, 1056980736
    %v1516 = vmul.bf16 %v1500, 1056980736
    %v1517 = vmul.bf16 %v1501, 1056980736
    %v1518 = vmul.bf16 %v1502, 1056980736
    %v1519 = vmul.bf16 %v1503, 1056980736
    %v1520 = vmul.bf16 %v1488, 1027030327
    %v1521 = vmul.bf16 %v1489, 1027030327
    %v1522 = vmul.bf16 %v1490, 1027030327
    %v1523 = vmul.bf16 %v1491, 1027030327
    %v1524 = vmul.bf16 %v1492, 1027030327
    %v1525 = vmul.bf16 %v1493, 1027030327
    %v1526 = vmul.bf16 %v1494, 1027030327
    %v1527 = vmul.bf16 %v1495, 1027030327
    %v1528 = vmul.bf16 %v1496, 1027030327
    %v1529 = vmul.bf16 %v1497, 1027030327
    %v1530 = vmul.bf16 %v1498, 1027030327
    %v1531 = vmul.bf16 %v1499, 1027030327
    %v1532 = vmul.bf16 %v1500, 1027030327
    %v1533 = vmul.bf16 %v1501, 1027030327
    %v1534 = vmul.bf16 %v1502, 1027030327
    %v1535 = vmul.bf16 %v1503, 1027030327
    %v1536 = vmul.bf16 %v1520, %v1488
    %v1537 = vmul.bf16 %v1521, %v1489
    %v1538 = vmul.bf16 %v1522, %v1490
    %v1539 = vmul.bf16 %v1523, %v1491
    %v1540 = vmul.bf16 %v1524, %v1492
    %v1541 = vmul.bf16 %v1525, %v1493
    %v1542 = vmul.bf16 %v1526, %v1494
    %v1543 = vmul.bf16 %v1527, %v1495
    %v1544 = vmul.bf16 %v1528, %v1496
    %v1545 = vmul.bf16 %v1529, %v1497
    %v1546 = vmul.bf16 %v1530, %v1498
    %v1547 = vmul.bf16 %v1531, %v1499
    %v1548 = vmul.bf16 %v1532, %v1500
    %v1549 = vmul.bf16 %v1533, %v1501
    %v1550 = vmul.bf16 %v1534, %v1502
    %v1551 = vmul.bf16 %v1535, %v1503
    %v1552 = vmul.bf16 %v1536, %v1488
    %v1553 = vmul.bf16 %v1537, %v1489
    %v1554 = vmul.bf16 %v1538, %v1490
    %v1555 = vmul.bf16 %v1539, %v1491
    %v1556 = vmul.bf16 %v1540, %v1492
    %v1557 = vmul.bf16 %v1541, %v1493
    %v1558 = vmul.bf16 %v1542, %v1494
    %v1559 = vmul.bf16 %v1543, %v1495
    %v1560 = vmul.bf16 %v1544, %v1496
    %v1561 = vmul.bf16 %v1545, %v1497
    %v1562 = vmul.bf16 %v1546, %v1498
    %v1563 = vmul.bf16 %v1547, %v1499
    %v1564 = vmul.bf16 %v1548, %v1500
    %v1565 = vmul.bf16 %v1549, %v1501
    %v1566 = vmul.bf16 %v1550, %v1502
    %v1567 = vmul.bf16 %v1551, %v1503
    %v1568 = vadd.bf16 %v1488, %v1552
    %v1569 = vadd.bf16 %v1489, %v1553
    %v1570 = vadd.bf16 %v1490, %v1554
    %v1571 = vadd.bf16 %v1491, %v1555
    %v1572 = vadd.bf16 %v1492, %v1556
    %v1573 = vadd.bf16 %v1493, %v1557
    %v1574 = vadd.bf16 %v1494, %v1558
    %v1575 = vadd.bf16 %v1495, %v1559
    %v1576 = vadd.bf16 %v1496, %v1560
    %v1577 = vadd.bf16 %v1497, %v1561
    %v1578 = vadd.bf16 %v1498, %v1562
    %v1579 = vadd.bf16 %v1499, %v1563
    %v1580 = vadd.bf16 %v1500, %v1564
    %v1581 = vadd.bf16 %v1501, %v1565
    %v1582 = vadd.bf16 %v1502, %v1566
    %v1583 = vadd.bf16 %v1503, %v1567
    %v1584 = vmul.bf16 %v1568, 1061961548
    %v1585 = vmul.bf16 %v1569, 1061961548
    %v1586 = vmul.bf16 %v1570, 1061961548
    %v1587 = vmul.bf16 %v1571, 1061961548
    %v1588 = vmul.bf16 %v1572, 1061961548
    %v1589 = vmul.bf16 %v1573, 1061961548
    %v1590 = vmul.bf16 %v1574, 1061961548
    %v1591 = vmul.bf16 %v1575, 1061961548
    %v1592 = vmul.bf16 %v1576, 1061961548
    %v1593 = vmul.bf16 %v1577, 1061961548
    %v1594 = vmul.bf16 %v1578, 1061961548
    %v1595 = vmul.bf16 %v1579, 1061961548
    %v1596 = vmul.bf16 %v1580, 1061961548
    %v1597 = vmul.bf16 %v1581, 1061961548
    %v1598 = vmul.bf16 %v1582, 1061961548
    %v1599 = vmul.bf16 %v1583, 1061961548
    %v1600 = vtanh.bf16.pop %v1584
    %v1601 = vtanh.bf16.pop %v1585
    %v1602 = vtanh.bf16.pop %v1586
    %v1603 = vtanh.bf16.pop %v1587
    %v1604 = vtanh.bf16.pop %v1588
    %v1605 = vtanh.bf16.pop %v1589
    %v1606 = vtanh.bf16.pop %v1590
    %v1607 = vtanh.bf16.pop %v1591
    %v1608 = vtanh.bf16.pop %v1592
    %v1609 = vtanh.bf16.pop %v1593
    %v1610 = vtanh.bf16.pop %v1594
    %v1611 = vtanh.bf16.pop %v1595
    %v1612 = vtanh.bf16.pop %v1596
    %v1613 = vtanh.bf16.pop %v1597
    %v1614 = vtanh.bf16.pop %v1598
    %v1615 = vtanh.bf16.pop %v1599
    %v1616 = vadd.bf16 %v1600, 1065369472
    %v1617 = vadd.bf16 %v1601, 1065369472
    %v1618 = vadd.bf16 %v1602, 1065369472
    %v1619 = vadd.bf16 %v1603, 1065369472
    %v1620 = vadd.bf16 %v1604, 1065369472
    %v1621 = vadd.bf16 %v1605, 1065369472
    %v1622 = vadd.bf16 %v1606, 1065369472
    %v1623 = vadd.bf16 %v1607, 1065369472
    %v1624 = vadd.bf16 %v1608, 1065369472
    %v1625 = vadd.bf16 %v1609, 1065369472
    %v1626 = vadd.bf16 %v1610, 1065369472
    %v1627 = vadd.bf16 %v1611, 1065369472
    %v1628 = vadd.bf16 %v1612, 1065369472
    %v1629 = vadd.bf16 %v1613, 1065369472
    %v1630 = vadd.bf16 %v1614, 1065369472
    %v1631 = vadd.bf16 %v1615, 1065369472
    %v1632 = vmul.bf16 %v1504, %v1616
    %v1633 = vmul.bf16 %v1505, %v1617
    %v1634 = vmul.bf16 %v1506, %v1618
    %v1635 = vmul.bf16 %v1507, %v1619
    %v1636 = vmul.bf16 %v1508, %v1620
    %v1637 = vmul.bf16 %v1509, %v1621
    %v1638 = vmul.bf16 %v1510, %v1622
    %v1639 = vmul.bf16 %v1511, %v1623
    %v1640 = vmul.bf16 %v1512, %v1624
    %v1641 = vmul.bf16 %v1513, %v1625
    %v1642 = vmul.bf16 %v1514, %v1626
    %v1643 = vmul.bf16 %v1515, %v1627
    %v1644 = vmul.bf16 %v1516, %v1628
    %v1645 = vmul.bf16 %v1517, %v1629
    %v1646 = vmul.bf16 %v1518, %v1630
    %v1647 = vmul.bf16 %v1519, %v1631
    %v1648 = vld [vmem:[%s3] sm:$0xf]
    %v1649 = vld [vmem:[%s3 + $0x4] sm:$0xf]
    %v1650 = vld [vmem:[%s3 + $0x8] sm:$0xf]
    %v1651 = vld [vmem:[%s3 + $0xc] sm:$0xf]
    %v1652 = vld [vmem:[%s4] sm:$0xff]
    %v1653 = vld [vmem:[%s4 + $0x8] sm:$0xff]
    %v1654 = vld [vmem:[%s4 + $0x10] sm:$0xff]
    %v1655 = vld [vmem:[%s4 + $0x18] sm:$0xff]
    %1657 = vset.pattern.permute.xlu0 0
    %1658 = vperm.xlu0 %1657, %v1652
    %v1659 = vpop.permute.xlu0 %1658
    %1662 = vset.pattern.permute.xlu0 0
    %1663 = vperm.xlu0 %1662, %v1653
    %v1664 = vpop.permute.xlu0 %1663
    %1667 = vset.pattern.permute.xlu0 0
    %1668 = vperm.xlu0 %1667, %v1654
    %v1669 = vpop.permute.xlu0 %1668
    %1672 = vset.pattern.permute.xlu0 0
    %1673 = vperm.xlu0 %1672, %v1655
    %v1674 = vpop.permute.xlu0 %1673
    %v1680 = vunpack.c.l.b16 %v1648
    %v1681 = vunpack.c.l.b16 %v1649
    %v1682 = vunpack.c.l.b16 %v1650
    %v1683 = vunpack.c.l.b16 %v1651
    %v1684 = vpack.c.b16 %v1681, %v1680
    %v1685 = vpack.c.b16 %v1683, %v1682
    %vm1686 = vcmask 261120
    %v1688 = vsel %vm1686, %v1684, 0
    %v1691 = vsel %vm1686, %v1685, 0
    %1693 = vmatprep.subr.bf16.mxu0 %v1633
    %1694 = vmatpush1.bf16.msra.mxu0 %v1632
    %1695 = vmatprep.subr.bf16.mxu0 %v1641
    %1696 = vmatpush1.bf16.msra.mxu0 %v1640
    %1697 = vmatprep.subr.bf16.mxu0 0
    %1698 = vmatpush1.bf16.msra.mxu0 0
    %1699 = vmatprep.subr.bf16.mxu0 0
    %1700 = vmatpush1.bf16.msra.mxu0 0
    %1701 = vmatprep.subr.bf16.mxu0 0
    %1702 = vmatpush1.bf16.msra.mxu0 0
    %1703 = vmatprep.subr.bf16.mxu0 0
    %1704 = vmatpush1.bf16.msra.mxu0 0
    %1705 = vmatprep.subr.bf16.mxu0 0
    %1706 = vmatpush1.bf16.msra.mxu0 0
    %1707 = vmatprep.subr.bf16.mxu0 0
    %1708 = vmatpush1.bf16.msra.mxu0 0
    %1709 = vmatprep.subr.bf16.mxu0 0
    %1710 = vmatpush1.bf16.msra.mxu0 0
    %1711 = vmatprep.subr.bf16.mxu0 0
    %1712 = vmatpush1.bf16.msra.mxu0 0
    %1713 = vmatprep.subr.bf16.mxu0 0
    %1714 = vmatpush1.bf16.msra.mxu0 0
    %1715 = vmatprep.subr.bf16.mxu0 0
    %1716 = vmatpush1.bf16.msra.mxu0 0
    %1717 = vmatprep.subr.bf16.mxu0 0
    %1718 = vmatpush1.bf16.msra.mxu0 0
    %1719 = vmatprep.subr.bf16.mxu0 0
    %1720 = vmatpush1.bf16.msra.mxu0 0
    %1721 = vmatprep.subr.bf16.mxu0 0
    %1722 = vmatpush1.bf16.msra.mxu0 0
    %1723 = vmatprep.subr.bf16.mxu0 0
    %1724 = vmatpush1.bf16.msra.mxu0 0
    %1725 = vmatprep.mubr.bf16.mxu0 0
    %1726 = vmatmul.mubr.bf16.gmra.mrb[0].mxu0 %v1688
    %v1727 = vpop.f32.mrb[0].mxu0
    %v1728 = vadd.f32 %v1659, %v1727
    %v1729 = vpop.f32.mrb[0].mxu0
    %v1730 = vadd.f32 %v1659, %v1729
    %v1731 = vpop.f32.mrb[0].mxu0
    %v1732 = vadd.f32 %v1664, %v1731
    %v1733 = vpop.f32.mrb[0].mxu0
    %v1734 = vadd.f32 %v1664, %v1733
    %1735 = vmatprep.mubr.bf16.mxu0 0
    %1736 = vmatmul.mubr.bf16.gmra.mrb[0].mxu0 %v1691
    %v1737 = vpop.f32.mrb[0].mxu0
    %v1738 = vadd.f32 %v1669, %v1737
    %v1739 = vpop.f32.mrb[0].mxu0
    %v1740 = vadd.f32 %v1669, %v1739
    %v1741 = vpop.f32.mrb[0].mxu0
    %v1742 = vadd.f32 %v1674, %v1741
    %v1743 = vpop.f32.mrb[0].mxu0
    %v1744 = vadd.f32 %v1674, %v1743
    %1745 = vdwg.mxu0
    %1746 = vmatprep.subr.bf16.mxu0 %v1635
    %1747 = vmatpush1.bf16.msra.mxu0 %v1634
    %1748 = vmatprep.subr.bf16.mxu0 %v1643
    %1749 = vmatpush1.bf16.msra.mxu0 %v1642
    %1750 = vmatprep.subr.bf16.mxu0 0
    %1751 = vmatpush1.bf16.msra.mxu0 0
    %1752 = vmatprep.subr.bf16.mxu0 0
    %1753 = vmatpush1.bf16.msra.mxu0 0
    %1754 = vmatprep.subr.bf16.mxu0 0
    %1755 = vmatpush1.bf16.msra.mxu0 0
    %1756 = vmatprep.subr.bf16.mxu0 0
    %1757 = vmatpush1.bf16.msra.mxu0 0
    %1758 = vmatprep.subr.bf16.mxu0 0
    %1759 = vmatpush1.bf16.msra.mxu0 0
    %1760 = vmatprep.subr.bf16.mxu0 0
    %1761 = vmatpush1.bf16.msra.mxu0 0
    %1762 = vmatprep.subr.bf16.mxu0 0
    %1763 = vmatpush1.bf16.msra.mxu0 0
    %1764 = vmatprep.subr.bf16.mxu0 0
    %1765 = vmatpush1.bf16.msra.mxu0 0
    %1766 = vmatprep.subr.bf16.mxu0 0
    %1767 = vmatpush1.bf16.msra.mxu0 0
    %1768 = vmatprep.subr.bf16.mxu0 0
    %1769 = vmatpush1.bf16.msra.mxu0 0
    %1770 = vmatprep.subr.bf16.mxu0 0
    %1771 = vmatpush1.bf16.msra.mxu0 0
    %1772 = vmatprep.subr.bf16.mxu0 0
    %1773 = vmatpush1.bf16.msra.mxu0 0
    %1774 = vmatprep.subr.bf16.mxu0 0
    %1775 = vmatpush1.bf16.msra.mxu0 0
    %1776 = vmatprep.subr.bf16.mxu0 0
    %1777 = vmatpush1.bf16.msra.mxu0 0
    %1778 = vmatprep.mubr.bf16.mxu0 0
    %1779 = vmatmul.mubr.bf16.gmra.mrb[0].mxu0 %v1688
    %v1780 = vpop.f32.mrb[0].mxu0
    %v1781 = vadd.f32 %v1659, %v1780
    %v1782 = vpop.f32.mrb[0].mxu0
    %v1783 = vadd.f32 %v1659, %v1782
    %v1784 = vpop.f32.mrb[0].mxu0
    %v1785 = vadd.f32 %v1664, %v1784
    %v1786 = vpop.f32.mrb[0].mxu0
    %v1787 = vadd.f32 %v1664, %v1786
    %1788 = vmatprep.mubr.bf16.mxu0 0
    %1789 = vmatmul.mubr.bf16.gmra.mrb[0].mxu0 %v1691
    %v1790 = vpop.f32.mrb[0].mxu0
    %v1791 = vadd.f32 %v1669, %v1790
    %v1792 = vpop.f32.mrb[0].mxu0
    %v1793 = vadd.f32 %v1669, %v1792
    %v1794 = vpop.f32.mrb[0].mxu0
    %v1795 = vadd.f32 %v1674, %v1794
    %v1796 = vpop.f32.mrb[0].mxu0
    %v1797 = vadd.f32 %v1674, %v1796
    %1798 = vdwg.mxu0
    %1799 = vmatprep.subr.bf16.mxu0 %v1637
    %1800 = vmatpush1.bf16.msra.mxu0 %v1636
    %1801 = vmatprep.subr.bf16.mxu0 %v1645
    %1802 = vmatpush1.bf16.msra.mxu0 %v1644
    %1803 = vmatprep.subr.bf16.mxu0 0
    %1804 = vmatpush1.bf16.msra.mxu0 0
    %1805 = vmatprep.subr.bf16.mxu0 0
    %1806 = vmatpush1.bf16.msra.mxu0 0
    %1807 = vmatprep.subr.bf16.mxu0 0
    %1808 = vmatpush1.bf16.msra.mxu0 0
    %1809 = vmatprep.subr.bf16.mxu0 0
    %1810 = vmatpush1.bf16.msra.mxu0 0
    %1811 = vmatprep.subr.bf16.mxu0 0
    %1812 = vmatpush1.bf16.msra.mxu0 0
    %1813 = vmatprep.subr.bf16.mxu0 0
    %1814 = vmatpush1.bf16.msra.mxu0 0
    %1815 = vmatprep.subr.bf16.mxu0 0
    %1816 = vmatpush1.bf16.msra.mxu0 0
    %1817 = vmatprep.subr.bf16.mxu0 0
    %1818 = vmatpush1.bf16.msra.mxu0 0
    %1819 = vmatprep.subr.bf16.mxu0 0
    %1820 = vmatpush1.bf16.msra.mxu0 0
    %1821 = vmatprep.subr.bf16.mxu0 0
    %1822 = vmatpush1.bf16.msra.mxu0 0
    %1823 = vmatprep.subr.bf16.mxu0 0
    %1824 = vmatpush1.bf16.msra.mxu0 0
    %1825 = vmatprep.subr.bf16.mxu0 0
    %1826 = vmatpush1.bf16.msra.mxu0 0
    %1827 = vmatprep.subr.bf16.mxu0 0
    %1828 = vmatpush1.bf16.msra.mxu0 0
    %1829 = vmatprep.subr.bf16.mxu0 0
    %1830 = vmatpush1.bf16.msra.mxu0 0
    %1831 = vmatprep.mubr.bf16.mxu0 0
    %1832 = vmatmul.mubr.bf16.gmra.mrb[0].mxu0 %v1688
    %v1833 = vpop.f32.mrb[0].mxu0
    %v1834 = vadd.f32 %v1659, %v1833
    %v1835 = vpop.f32.mrb[0].mxu0
    %v1836 = vadd.f32 %v1659, %v1835
    %v1837 = vpop.f32.mrb[0].mxu0
    %v1838 = vadd.f32 %v1664, %v1837
    %v1839 = vpop.f32.mrb[0].mxu0
    %v1840 = vadd.f32 %v1664, %v1839
    %1841 = vmatprep.mubr.bf16.mxu0 0
    %1842 = vmatmul.mubr.bf16.gmra.mrb[0].mxu0 %v1691
    %v1843 = vpop.f32.mrb[0].mxu0
    %v1844 = vadd.f32 %v1669, %v1843
    %v1845 = vpop.f32.mrb[0].mxu0
    %v1846 = vadd.f32 %v1669, %v1845
    %v1847 = vpop.f32.mrb[0].mxu0
    %v1848 = vadd.f32 %v1674, %v1847
    %v1849 = vpop.f32.mrb[0].mxu0
    %v1850 = vadd.f32 %v1674, %v1849
    %1851 = vdwg.mxu0
    %1852 = vmatprep.subr.bf16.mxu0 %v1639
    %1853 = vmatpush1.bf16.msra.mxu0 %v1638
    %1854 = vmatprep.subr.bf16.mxu0 %v1647
    %1855 = vmatpush1.bf16.msra.mxu0 %v1646
    %1856 = vmatprep.subr.bf16.mxu0 0
    %1857 = vmatpush1.bf16.msra.mxu0 0
    %1858 = vmatprep.subr.bf16.mxu0 0
    %1859 = vmatpush1.bf16.msra.mxu0 0
    %1860 = vmatprep.subr.bf16.mxu0 0
    %1861 = vmatpush1.bf16.msra.mxu0 0
    %1862 = vmatprep.subr.bf16.mxu0 0
    %1863 = vmatpush1.bf16.msra.mxu0 0
    %1864 = vmatprep.subr.bf16.mxu0 0
    %1865 = vmatpush1.bf16.msra.mxu0 0
    %1866 = vmatprep.subr.bf16.mxu0 0
    %1867 = vmatpush1.bf16.msra.mxu0 0
    %1868 = vmatprep.subr.bf16.mxu0 0
    %1869 = vmatpush1.bf16.msra.mxu0 0
    %1870 = vmatprep.subr.bf16.mxu0 0
    %1871 = vmatpush1.bf16.msra.mxu0 0
    %1872 = vmatprep.subr.bf16.mxu0 0
    %1873 = vmatpush1.bf16.msra.mxu0 0
    %1874 = vmatprep.subr.bf16.mxu0 0
    %1875 = vmatpush1.bf16.msra.mxu0 0
    %1876 = vmatprep.subr.bf16.mxu0 0
    %1877 = vmatpush1.bf16.msra.mxu0 0
    %1878 = vmatprep.subr.bf16.mxu0 0
    %1879 = vmatpush1.bf16.msra.mxu0 0
    %1880 = vmatprep.subr.bf16.mxu0 0
    %1881 = vmatpush1.bf16.msra.mxu0 0
    %1882 = vmatprep.subr.bf16.mxu0 0
    %1883 = vmatpush1.bf16.msra.mxu0 0
    %1884 = vmatprep.mubr.bf16.mxu0 0
    %1885 = vmatmul.mubr.bf16.gmra.mrb[0].mxu0 %v1688
    %v1886 = vpop.f32.mrb[0].mxu0
    %v1887 = vadd.f32 %v1659, %v1886
    %v1888 = vpop.f32.mrb[0].mxu0
    %v1889 = vadd.f32 %v1659, %v1888
    %v1890 = vpop.f32.mrb[0].mxu0
    %v1891 = vadd.f32 %v1664, %v1890
    %v1892 = vpop.f32.mrb[0].mxu0
    %v1893 = vadd.f32 %v1664, %v1892
    %1894 = vmatprep.mubr.bf16.mxu0 0
    %1895 = vmatmul.mubr.bf16.gmra.mrb[0].mxu0 %v1691
    %v1896 = vpop.f32.mrb[0].mxu0
    %v1897 = vadd.f32 %v1669, %v1896
    %v1898 = vpop.f32.mrb[0].mxu0
    %v1899 = vadd.f32 %v1669, %v1898
    %v1900 = vpop.f32.mrb[0].mxu0
    %v1901 = vadd.f32 %v1674, %v1900
    %v1902 = vpop.f32.mrb[0].mxu0
    %v1903 = vadd.f32 %v1674, %v1902
    %1904 = vdwg.mxu0
    %v1905 = vpack.c.bf16 %v1732, %v1728
    %v1906 = vpack.c.bf16 %v1734, %v1730
    %v1907 = vpack.c.bf16 %v1785, %v1781
    %v1908 = vpack.c.bf16 %v1787, %v1783
    %v1909 = vpack.c.bf16 %v1838, %v1834
    %v1910 = vpack.c.bf16 %v1840, %v1836
    %v1911 = vpack.c.bf16 %v1891, %v1887
    %v1912 = vpack.c.bf16 %v1893, %v1889
    %v1913 = vpack.c.bf16 %v1742, %v1738
    %v1914 = vpack.c.bf16 %v1744, %v1740
    %v1915 = vpack.c.bf16 %v1795, %v1791
    %v1916 = vpack.c.bf16 %v1797, %v1793
    %v1917 = vpack.c.bf16 %v1848, %v1844
    %v1918 = vpack.c.bf16 %v1850, %v1846
    %v1919 = vpack.c.bf16 %v1901, %v1897
    %v1920 = vpack.c.bf16 %v1903, %v1899
    %v1921 = vmul.bf16 %v1905, 1056980736
    %v1922 = vmul.bf16 %v1906, 1056980736
    %v1923 = vmul.bf16 %v1907, 1056980736
    %v1924 = vmul.bf16 %v1908, 1056980736
    %v1925 = vmul.bf16 %v1909, 1056980736
    %v1926 = vmul.bf16 %v1910, 1056980736
    %v1927 = vmul.bf16 %v1911, 1056980736
    %v1928 = vmul.bf16 %v1912, 1056980736
    %v1929 = vmul.bf16 %v1913, 1056980736
    %v1930 = vmul.bf16 %v1914, 1056980736
    %v1931 = vmul.bf16 %v1915, 1056980736
    %v1932 = vmul.bf16 %v1916, 1056980736
    %v1933 = vmul.bf16 %v1917, 1056980736
    %v1934 = vmul.bf16 %v1918, 1056980736
    %v1935 = vmul.bf16 %v1919, 1056980736
    %v1936 = vmul.bf16 %v1920, 1056980736
    %v1937 = vmul.bf16 %v1905, 1027030327
    %v1938 = vmul.bf16 %v1906, 1027030327
    %v1939 = vmul.bf16 %v1907, 1027030327
    %v1940 = vmul.bf16 %v1908, 1027030327
    %v1941 = vmul.bf16 %v1909, 1027030327
    %v1942 = vmul.bf16 %v1910, 1027030327
    %v1943 = vmul.bf16 %v1911, 1027030327
    %v1944 = vmul.bf16 %v1912, 1027030327
    %v1945 = vmul.bf16 %v1913, 1027030327
    %v1946 = vmul.bf16 %v1914, 1027030327
    %v1947 = vmul.bf16 %v1915, 1027030327
    %v1948 = vmul.bf16 %v1916, 1027030327
    %v1949 = vmul.bf16 %v1917, 1027030327
    %v1950 = vmul.bf16 %v1918, 1027030327
    %v1951 = vmul.bf16 %v1919, 1027030327
    %v1952 = vmul.bf16 %v1920, 1027030327
    %v1953 = vmul.bf16 %v1937, %v1905
    %v1954 = vmul.bf16 %v1938, %v1906
    %v1955 = vmul.bf16 %v1939, %v1907
    %v1956 = vmul.bf16 %v1940, %v1908
    %v1957 = vmul.bf16 %v1941, %v1909
    %v1958 = vmul.bf16 %v1942, %v1910
    %v1959 = vmul.bf16 %v1943, %v1911
    %v1960 = vmul.bf16 %v1944, %v1912
    %v1961 = vmul.bf16 %v1945, %v1913
    %v1962 = vmul.bf16 %v1946, %v1914
    %v1963 = vmul.bf16 %v1947, %v1915
    %v1964 = vmul.bf16 %v1948, %v1916
    %v1965 = vmul.bf16 %v1949, %v1917
    %v1966 = vmul.bf16 %v1950, %v1918
    %v1967 = vmul.bf16 %v1951, %v1919
    %v1968 = vmul.bf16 %v1952, %v1920
    %v1969 = vmul.bf16 %v1953, %v1905
    %v1970 = vmul.bf16 %v1954, %v1906
    %v1971 = vmul.bf16 %v1955, %v1907
    %v1972 = vmul.bf16 %v1956, %v1908
    %v1973 = vmul.bf16 %v1957, %v1909
    %v1974 = vmul.bf16 %v1958, %v1910
    %v1975 = vmul.bf16 %v1959, %v1911
    %v1976 = vmul.bf16 %v1960, %v1912
    %v1977 = vmul.bf16 %v1961, %v1913
    %v1978 = vmul.bf16 %v1962, %v1914
    %v1979 = vmul.bf16 %v1963, %v1915
    %v1980 = vmul.bf16 %v1964, %v1916
    %v1981 = vmul.bf16 %v1965, %v1917
    %v1982 = vmul.bf16 %v1966, %v1918
    %v1983 = vmul.bf16 %v1967, %v1919
    %v1984 = vmul.bf16 %v1968, %v1920
    %v1985 = vadd.bf16 %v1905, %v1969
    %v1986 = vadd.bf16 %v1906, %v1970
    %v1987 = vadd.bf16 %v1907, %v1971
    %v1988 = vadd.bf16 %v1908, %v1972
    %v1989 = vadd.bf16 %v1909, %v1973
    %v1990 = vadd.bf16 %v1910, %v1974
    %v1991 = vadd.bf16 %v1911, %v1975
    %v1992 = vadd.bf16 %v1912, %v1976
    %v1993 = vadd.bf16 %v1913, %v1977
    %v1994 = vadd.bf16 %v1914, %v1978
    %v1995 = vadd.bf16 %v1915, %v1979
    %v1996 = vadd.bf16 %v1916, %v1980
    %v1997 = vadd.bf16 %v1917, %v1981
    %v1998 = vadd.bf16 %v1918, %v1982
    %v1999 = vadd.bf16 %v1919, %v1983
    %v2000 = vadd.bf16 %v1920, %v1984
    %v2001 = vmul.bf16 %v1985, 1061961548
    %v2002 = vmul.bf16 %v1986, 1061961548
    %v2003 = vmul.bf16 %v1987, 1061961548
    %v2004 = vmul.bf16 %v1988, 1061961548
    %v2005 = vmul.bf16 %v1989, 1061961548
    %v2006 = vmul.bf16 %v1990, 1061961548
    %v2007 = vmul.bf16 %v1991, 1061961548
    %v2008 = vmul.bf16 %v1992, 1061961548
    %v2009 = vmul.bf16 %v1993, 1061961548
    %v2010 = vmul.bf16 %v1994, 1061961548
    %v2011 = vmul.bf16 %v1995, 1061961548
    %v2012 = vmul.bf16 %v1996, 1061961548
    %v2013 = vmul.bf16 %v1997, 1061961548
    %v2014 = vmul.bf16 %v1998, 1061961548
    %v2015 = vmul.bf16 %v1999, 1061961548
    %v2016 = vmul.bf16 %v2000, 1061961548
    %v2017 = vtanh.bf16.pop %v2001
    %v2018 = vtanh.bf16.pop %v2002
    %v2019 = vtanh.bf16.pop %v2003
    %v2020 = vtanh.bf16.pop %v2004
    %v2021 = vtanh.bf16.pop %v2005
    %v2022 = vtanh.bf16.pop %v2006
    %v2023 = vtanh.bf16.pop %v2007
    %v2024 = vtanh.bf16.pop %v2008
    %v2025 = vtanh.bf16.pop %v2009
    %v2026 = vtanh.bf16.pop %v2010
    %v2027 = vtanh.bf16.pop %v2011
    %v2028 = vtanh.bf16.pop %v2012
    %v2029 = vtanh.bf16.pop %v2013
    %v2030 = vtanh.bf16.pop %v2014
    %v2031 = vtanh.bf16.pop %v2015
    %v2032 = vtanh.bf16.pop %v2016
    %v2033 = vadd.bf16 %v2017, 1065369472
    %v2034 = vadd.bf16 %v2018, 1065369472
    %v2035 = vadd.bf16 %v2019, 1065369472
    %v2036 = vadd.bf16 %v2020, 1065369472
    %v2037 = vadd.bf16 %v2021, 1065369472
    %v2038 = vadd.bf16 %v2022, 1065369472
    %v2039 = vadd.bf16 %v2023, 1065369472
    %v2040 = vadd.bf16 %v2024, 1065369472
    %v2041 = vadd.bf16 %v2025, 1065369472
    %v2042 = vadd.bf16 %v2026, 1065369472
    %v2043 = vadd.bf16 %v2027, 1065369472
    %v2044 = vadd.bf16 %v2028, 1065369472
    %v2045 = vadd.bf16 %v2029, 1065369472
    %v2046 = vadd.bf16 %v2030, 1065369472
    %v2047 = vadd.bf16 %v2031, 1065369472
    %v2048 = vadd.bf16 %v2032, 1065369472
    %v2049 = vmul.bf16 %v1921, %v2033
    %v2050 = vmul.bf16 %v1922, %v2034
    %v2051 = vmul.bf16 %v1923, %v2035
    %v2052 = vmul.bf16 %v1924, %v2036
    %v2053 = vmul.bf16 %v1925, %v2037
    %v2054 = vmul.bf16 %v1926, %v2038
    %v2055 = vmul.bf16 %v1927, %v2039
    %v2056 = vmul.bf16 %v1928, %v2040
    %v2057 = vmul.bf16 %v1929, %v2041
    %v2058 = vmul.bf16 %v1930, %v2042
    %v2059 = vmul.bf16 %v1931, %v2043
    %v2060 = vmul.bf16 %v1932, %v2044
    %v2061 = vmul.bf16 %v1933, %v2045
    %v2062 = vmul.bf16 %v1934, %v2046
    %v2063 = vmul.bf16 %v1935, %v2047
    %v2064 = vmul.bf16 %v1936, %v2048
    %s2065 = scalar_lea.vmem %s3, 16
    %v2066 = vld [vmem:[%s2065] sm:$0xf]
    %v2067 = vld [vmem:[%s2065 + $0x4] sm:$0xf]
    %v2068 = vld [vmem:[%s2065 + $0x8] sm:$0xf]
    %v2069 = vld [vmem:[%s2065 + $0xc] sm:$0xf]
    %s2070 = scalar_lea.vmem %s4, 32
    %v2071 = vld [vmem:[%s2070] sm:$0xff]
    %v2072 = vld [vmem:[%s2070 + $0x8] sm:$0xff]
    %v2073 = vld [vmem:[%s2070 + $0x10] sm:$0xff]
    %v2074 = vld [vmem:[%s2070 + $0x18] sm:$0xff]
    %2076 = vset.pattern.permute.xlu0 0
    %2077 = vperm.xlu0 %2076, %v2071
    %v2078 = vpop.permute.xlu0 %2077
    %2081 = vset.pattern.permute.xlu0 0
    %2082 = vperm.xlu0 %2081, %v2072
    %v2083 = vpop.permute.xlu0 %2082
    %2086 = vset.pattern.permute.xlu0 0
    %2087 = vperm.xlu0 %2086, %v2073
    %v2088 = vpop.permute.xlu0 %2087
    %2091 = vset.pattern.permute.xlu0 0
    %2092 = vperm.xlu0 %2091, %v2074
    %v2093 = vpop.permute.xlu0 %2092
    %v2099 = vunpack.c.l.b16 %v2066
    %v2100 = vunpack.c.l.b16 %v2067
    %v2101 = vunpack.c.l.b16 %v2068
    %v2102 = vunpack.c.l.b16 %v2069
    %v2103 = vpack.c.b16 %v2100, %v2099
    %v2104 = vpack.c.b16 %v2102, %v2101
    %v2106 = vsel %vm1686, %v2103, 0
    %v2109 = vsel %vm1686, %v2104, 0
    %2111 = vmatprep.subr.bf16.mxu0 %v2050
    %2112 = vmatpush1.bf16.msra.mxu0 %v2049
    %2113 = vmatprep.subr.bf16.mxu0 %v2058
    %2114 = vmatpush1.bf16.msra.mxu0 %v2057
    %2115 = vmatprep.subr.bf16.mxu0 0
    %2116 = vmatpush1.bf16.msra.mxu0 0
    %2117 = vmatprep.subr.bf16.mxu0 0
    %2118 = vmatpush1.bf16.msra.mxu0 0
    %2119 = vmatprep.subr.bf16.mxu0 0
    %2120 = vmatpush1.bf16.msra.mxu0 0
    %2121 = vmatprep.subr.bf16.mxu0 0
    %2122 = vmatpush1.bf16.msra.mxu0 0
    %2123 = vmatprep.subr.bf16.mxu0 0
    %2124 = vmatpush1.bf16.msra.mxu0 0
    %2125 = vmatprep.subr.bf16.mxu0 0
    %2126 = vmatpush1.bf16.msra.mxu0 0
    %2127 = vmatprep.subr.bf16.mxu0 0
    %2128 = vmatpush1.bf16.msra.mxu0 0
    %2129 = vmatprep.subr.bf16.mxu0 0
    %2130 = vmatpush1.bf16.msra.mxu0 0
    %2131 = vmatprep.subr.bf16.mxu0 0
    %2132 = vmatpush1.bf16.msra.mxu0 0
    %2133 = vmatprep.subr.bf16.mxu0 0
    %2134 = vmatpush1.bf16.msra.mxu0 0
    %2135 = vmatprep.subr.bf16.mxu0 0
    %2136 = vmatpush1.bf16.msra.mxu0 0
    %2137 = vmatprep.subr.bf16.mxu0 0
    %2138 = vmatpush1.bf16.msra.mxu0 0
    %2139 = vmatprep.subr.bf16.mxu0 0
    %2140 = vmatpush1.bf16.msra.mxu0 0
    %2141 = vmatprep.subr.bf16.mxu0 0
    %2142 = vmatpush1.bf16.msra.mxu0 0
    %2143 = vmatprep.mubr.bf16.mxu0 0
    %2144 = vmatmul.mubr.bf16.gmra.mrb[0].mxu0 %v2106
    %v2145 = vpop.f32.mrb[0].mxu0
    %v2146 = vadd.f32 %v2078, %v2145
    %v2147 = vpop.f32.mrb[0].mxu0
    %v2148 = vadd.f32 %v2078, %v2147
    %v2149 = vpop.f32.mrb[0].mxu0
    %v2150 = vadd.f32 %v2083, %v2149
    %v2151 = vpop.f32.mrb[0].mxu0
    %v2152 = vadd.f32 %v2083, %v2151
    %2153 = vmatprep.mubr.bf16.mxu0 0
    %2154 = vmatmul.mubr.bf16.gmra.mrb[0].mxu0 %v2109
    %v2155 = vpop.f32.mrb[0].mxu0
    %v2156 = vadd.f32 %v2088, %v2155
    %v2157 = vpop.f32.mrb[0].mxu0
    %v2158 = vadd.f32 %v2088, %v2157
    %v2159 = vpop.f32.mrb[0].mxu0
    %v2160 = vadd.f32 %v2093, %v2159
    %v2161 = vpop.f32.mrb[0].mxu0
    %v2162 = vadd.f32 %v2093, %v2161
    %2163 = vdwg.mxu0
    %2164 = vmatprep.subr.bf16.mxu0 %v2052
    %2165 = vmatpush1.bf16.msra.mxu0 %v2051
    %2166 = vmatprep.subr.bf16.mxu0 %v2060
    %2167 = vmatpush1.bf16.msra.mxu0 %v2059
    %2168 = vmatprep.subr.bf16.mxu0 0
    %2169 = vmatpush1.bf16.msra.mxu0 0
    %2170 = vmatprep.subr.bf16.mxu0 0
    %2171 = vmatpush1.bf16.msra.mxu0 0
    %2172 = vmatprep.subr.bf16.mxu0 0
    %2173 = vmatpush1.bf16.msra.mxu0 0
    %2174 = vmatprep.subr.bf16.mxu0 0
    %2175 = vmatpush1.bf16.msra.mxu0 0
    %2176 = vmatprep.subr.bf16.mxu0 0
    %2177 = vmatpush1.bf16.msra.mxu0 0
    %2178 = vmatprep.subr.bf16.mxu0 0
    %2179 = vmatpush1.bf16.msra.mxu0 0
    %2180 = vmatprep.subr.bf16.mxu0 0
    %2181 = vmatpush1.bf16.msra.mxu0 0
    %2182 = vmatprep.subr.bf16.mxu0 0
    %2183 = vmatpush1.bf16.msra.mxu0 0
    %2184 = vmatprep.subr.bf16.mxu0 0
    %2185 = vmatpush1.bf16.msra.mxu0 0
    %2186 = vmatprep.subr.bf16.mxu0 0
    %2187 = vmatpush1.bf16.msra.mxu0 0
    %2188 = vmatprep.subr.bf16.mxu0 0
    %2189 = vmatpush1.bf16.msra.mxu0 0
    %2190 = vmatprep.subr.bf16.mxu0 0
    %2191 = vmatpush1.bf16.msra.mxu0 0
    %2192 = vmatprep.subr.bf16.mxu0 0
    %2193 = vmatpush1.bf16.msra.mxu0 0
    %2194 = vmatprep.subr.bf16.mxu0 0
    %2195 = vmatpush1.bf16.msra.mxu0 0
    %2196 = vmatprep.mubr.bf16.mxu0 0
    %2197 = vmatmul.mubr.bf16.gmra.mrb[0].mxu0 %v2106
    %v2198 = vpop.f32.mrb[0].mxu0
    %v2199 = vadd.f32 %v2078, %v2198
    %v2200 = vpop.f32.mrb[0].mxu0
    %v2201 = vadd.f32 %v2078, %v2200
    %v2202 = vpop.f32.mrb[0].mxu0
    %v2203 = vadd.f32 %v2083, %v2202
    %v2204 = vpop.f32.mrb[0].mxu0
    %v2205 = vadd.f32 %v2083, %v2204
    %2206 = vmatprep.mubr.bf16.mxu0 0
    %2207 = vmatmul.mubr.bf16.gmra.mrb[0].mxu0 %v2109
    %v2208 = vpop.f32.mrb[0].mxu0
    %v2209 = vadd.f32 %v2088, %v2208
    %v2210 = vpop.f32.mrb[0].mxu0
    %v2211 = vadd.f32 %v2088, %v2210
    %v2212 = vpop.f32.mrb[0].mxu0
    %v2213 = vadd.f32 %v2093, %v2212
    %v2214 = vpop.f32.mrb[0].mxu0
    %v2215 = vadd.f32 %v2093, %v2214
    %2216 = vdwg.mxu0
    %2217 = vmatprep.subr.bf16.mxu0 %v2054
    %2218 = vmatpush1.bf16.msra.mxu0 %v2053
    %2219 = vmatprep.subr.bf16.mxu0 %v2062
    %2220 = vmatpush1.bf16.msra.mxu0 %v2061
    %2221 = vmatprep.subr.bf16.mxu0 0
    %2222 = vmatpush1.bf16.msra.mxu0 0
    %2223 = vmatprep.subr.bf16.mxu0 0
    %2224 = vmatpush1.bf16.msra.mxu0 0
    %2225 = vmatprep.subr.bf16.mxu0 0
    %2226 = vmatpush1.bf16.msra.mxu0 0
    %2227 = vmatprep.subr.bf16.mxu0 0
    %2228 = vmatpush1.bf16.msra.mxu0 0
    %2229 = vmatprep.subr.bf16.mxu0 0
    %2230 = vmatpush1.bf16.msra.mxu0 0
    %2231 = vmatprep.subr.bf16.mxu0 0
    %2232 = vmatpush1.bf16.msra.mxu0 0
    %2233 = vmatprep.subr.bf16.mxu0 0
    %2234 = vmatpush1.bf16.msra.mxu0 0
    %2235 = vmatprep.subr.bf16.mxu0 0
    %2236 = vmatpush1.bf16.msra.mxu0 0
    %2237 = vmatprep.subr.bf16.mxu0 0
    %2238 = vmatpush1.bf16.msra.mxu0 0
    %2239 = vmatprep.subr.bf16.mxu0 0
    %2240 = vmatpush1.bf16.msra.mxu0 0
    %2241 = vmatprep.subr.bf16.mxu0 0
    %2242 = vmatpush1.bf16.msra.mxu0 0
    %2243 = vmatprep.subr.bf16.mxu0 0
    %2244 = vmatpush1.bf16.msra.mxu0 0
    %2245 = vmatprep.subr.bf16.mxu0 0
    %2246 = vmatpush1.bf16.msra.mxu0 0
    %2247 = vmatprep.subr.bf16.mxu0 0
    %2248 = vmatpush1.bf16.msra.mxu0 0
    %2249 = vmatprep.mubr.bf16.mxu0 0
    %2250 = vmatmul.mubr.bf16.gmra.mrb[0].mxu0 %v2106
    %v2251 = vpop.f32.mrb[0].mxu0
    %v2252 = vadd.f32 %v2078, %v2251
    %v2253 = vpop.f32.mrb[0].mxu0
    %v2254 = vadd.f32 %v2078, %v2253
    %v2255 = vpop.f32.mrb[0].mxu0
    %v2256 = vadd.f32 %v2083, %v2255
    %v2257 = vpop.f32.mrb[0].mxu0
    %v2258 = vadd.f32 %v2083, %v2257
    %2259 = vmatprep.mubr.bf16.mxu0 0
    %2260 = vmatmul.mubr.bf16.gmra.mrb[0].mxu0 %v2109
    %v2261 = vpop.f32.mrb[0].mxu0
    %v2262 = vadd.f32 %v2088, %v2261
    %v2263 = vpop.f32.mrb[0].mxu0
    %v2264 = vadd.f32 %v2088, %v2263
    %v2265 = vpop.f32.mrb[0].mxu0
    %v2266 = vadd.f32 %v2093, %v2265
    %v2267 = vpop.f32.mrb[0].mxu0
    %v2268 = vadd.f32 %v2093, %v2267
    %2269 = vdwg.mxu0
    %2270 = vmatprep.subr.bf16.mxu0 %v2056
    %2271 = vmatpush1.bf16.msra.mxu0 %v2055
    %2272 = vmatprep.subr.bf16.mxu0 %v2064
    %2273 = vmatpush1.bf16.msra.mxu0 %v2063
    %2274 = vmatprep.subr.bf16.mxu0 0
    %2275 = vmatpush1.bf16.msra.mxu0 0
    %2276 = vmatprep.subr.bf16.mxu0 0
    %2277 = vmatpush1.bf16.msra.mxu0 0
    %2278 = vmatprep.subr.bf16.mxu0 0
    %2279 = vmatpush1.bf16.msra.mxu0 0
    %2280 = vmatprep.subr.bf16.mxu0 0
    %2281 = vmatpush1.bf16.msra.mxu0 0
    %2282 = vmatprep.subr.bf16.mxu0 0
    %2283 = vmatpush1.bf16.msra.mxu0 0
    %2284 = vmatprep.subr.bf16.mxu0 0
    %2285 = vmatpush1.bf16.msra.mxu0 0
    %2286 = vmatprep.subr.bf16.mxu0 0
    %2287 = vmatpush1.bf16.msra.mxu0 0
    %2288 = vmatprep.subr.bf16.mxu0 0
    %2289 = vmatpush1.bf16.msra.mxu0 0
    %2290 = vmatprep.subr.bf16.mxu0 0
    %2291 = vmatpush1.bf16.msra.mxu0 0
    %2292 = vmatprep.subr.bf16.mxu0 0
    %2293 = vmatpush1.bf16.msra.mxu0 0
    %2294 = vmatprep.subr.bf16.mxu0 0
    %2295 = vmatpush1.bf16.msra.mxu0 0
    %2296 = vmatprep.subr.bf16.mxu0 0
    %2297 = vmatpush1.bf16.msra.mxu0 0
    %2298 = vmatprep.subr.bf16.mxu0 0
    %2299 = vmatpush1.bf16.msra.mxu0 0
    %2300 = vmatprep.subr.bf16.mxu0 0
    %2301 = vmatpush1.bf16.msra.mxu0 0
    %2302 = vmatprep.mubr.bf16.mxu0 0
    %2303 = vmatmul.mubr.bf16.gmra.mrb[0].mxu0 %v2106
    %v2304 = vpop.f32.mrb[0].mxu0
    %v2305 = vadd.f32 %v2078, %v2304
    %v2306 = vpop.f32.mrb[0].mxu0
    %v2307 = vadd.f32 %v2078, %v2306
    %v2308 = vpop.f32.mrb[0].mxu0
    %v2309 = vadd.f32 %v2083, %v2308
    %v2310 = vpop.f32.mrb[0].mxu0
    %v2311 = vadd.f32 %v2083, %v2310
    %2312 = vmatprep.mubr.bf16.mxu0 0
    %2313 = vmatmul.mubr.bf16.gmra.mrb[0].mxu0 %v2109
    %v2314 = vpop.f32.mrb[0].mxu0
    %v2315 = vadd.f32 %v2088, %v2314
    %v2316 = vpop.f32.mrb[0].mxu0
    %v2317 = vadd.f32 %v2088, %v2316
    %v2318 = vpop.f32.mrb[0].mxu0
    %v2319 = vadd.f32 %v2093, %v2318
    %v2320 = vpop.f32.mrb[0].mxu0
    %v2321 = vadd.f32 %v2093, %v2320
    %2322 = vdwg.mxu0
    %v2323 = vpack.c.bf16 %v2150, %v2146
    %v2324 = vpack.c.bf16 %v2152, %v2148
    %v2325 = vpack.c.bf16 %v2203, %v2199
    %v2326 = vpack.c.bf16 %v2205, %v2201
    %v2327 = vpack.c.bf16 %v2256, %v2252
    %v2328 = vpack.c.bf16 %v2258, %v2254
    %v2329 = vpack.c.bf16 %v2309, %v2305
    %v2330 = vpack.c.bf16 %v2311, %v2307
    %v2331 = vpack.c.bf16 %v2160, %v2156
    %v2332 = vpack.c.bf16 %v2162, %v2158
    %v2333 = vpack.c.bf16 %v2213, %v2209
    %v2334 = vpack.c.bf16 %v2215, %v2211
    %v2335 = vpack.c.bf16 %v2266, %v2262
    %v2336 = vpack.c.bf16 %v2268, %v2264
    %v2337 = vpack.c.bf16 %v2319, %v2315
    %v2338 = vpack.c.bf16 %v2321, %v2317
    %v2339 = vadd.bf16 %v1632, %v2323
    %v2340 = vadd.bf16 %v1633, %v2324
    %v2341 = vadd.bf16 %v1634, %v2325
    %v2342 = vadd.bf16 %v1635, %v2326
    %v2343 = vadd.bf16 %v1636, %v2327
    %v2344 = vadd.bf16 %v1637, %v2328
    %v2345 = vadd.bf16 %v1638, %v2329
    %v2346 = vadd.bf16 %v1639, %v2330
    %v2347 = vadd.bf16 %v1640, %v2331
    %v2348 = vadd.bf16 %v1641, %v2332
    %v2349 = vadd.bf16 %v1642, %v2333
    %v2350 = vadd.bf16 %v1643, %v2334
    %v2351 = vadd.bf16 %v1644, %v2335
    %v2352 = vadd.bf16 %v1645, %v2336
    %v2353 = vadd.bf16 %v1646, %v2337
    %v2354 = vadd.bf16 %v1647, %v2338
    %v2355 = vmul.bf16 %v2339, 1056980736
    %v2356 = vmul.bf16 %v2340, 1056980736
    %v2357 = vmul.bf16 %v2341, 1056980736
    %v2358 = vmul.bf16 %v2342, 1056980736
    %v2359 = vmul.bf16 %v2343, 1056980736
    %v2360 = vmul.bf16 %v2344, 1056980736
    %v2361 = vmul.bf16 %v2345, 1056980736
    %v2362 = vmul.bf16 %v2346, 1056980736
    %v2363 = vmul.bf16 %v2347, 1056980736
    %v2364 = vmul.bf16 %v2348, 1056980736
    %v2365 = vmul.bf16 %v2349, 1056980736
    %v2366 = vmul.bf16 %v2350, 1056980736
    %v2367 = vmul.bf16 %v2351, 1056980736
    %v2368 = vmul.bf16 %v2352, 1056980736
    %v2369 = vmul.bf16 %v2353, 1056980736
    %v2370 = vmul.bf16 %v2354, 1056980736
    %v2371 = vmul.bf16 %v2339, 1027030327
    %v2372 = vmul.bf16 %v2340, 1027030327
    %v2373 = vmul.bf16 %v2341, 1027030327
    %v2374 = vmul.bf16 %v2342, 1027030327
    %v2375 = vmul.bf16 %v2343, 1027030327
    %v2376 = vmul.bf16 %v2344, 1027030327
    %v2377 = vmul.bf16 %v2345, 1027030327
    %v2378 = vmul.bf16 %v2346, 1027030327
    %v2379 = vmul.bf16 %v2347, 1027030327
    %v2380 = vmul.bf16 %v2348, 1027030327
    %v2381 = vmul.bf16 %v2349, 1027030327
    %v2382 = vmul.bf16 %v2350, 1027030327
    %v2383 = vmul.bf16 %v2351, 1027030327
    %v2384 = vmul.bf16 %v2352, 1027030327
    %v2385 = vmul.bf16 %v2353, 1027030327
    %v2386 = vmul.bf16 %v2354, 1027030327
    %v2387 = vmul.bf16 %v2371, %v2339
    %v2388 = vmul.bf16 %v2372, %v2340
    %v2389 = vmul.bf16 %v2373, %v2341
    %v2390 = vmul.bf16 %v2374, %v2342
    %v2391 = vmul.bf16 %v2375, %v2343
    %v2392 = vmul.bf16 %v2376, %v2344
    %v2393 = vmul.bf16 %v2377, %v2345
    %v2394 = vmul.bf16 %v2378, %v2346
    %v2395 = vmul.bf16 %v2379, %v2347
    %v2396 = vmul.bf16 %v2380, %v2348
    %v2397 = vmul.bf16 %v2381, %v2349
    %v2398 = vmul.bf16 %v2382, %v2350
    %v2399 = vmul.bf16 %v2383, %v2351
    %v2400 = vmul.bf16 %v2384, %v2352
    %v2401 = vmul.bf16 %v2385, %v2353
    %v2402 = vmul.bf16 %v2386, %v2354
    %v2403 = vmul.bf16 %v2387, %v2339
    %v2404 = vmul.bf16 %v2388, %v2340
    %v2405 = vmul.bf16 %v2389, %v2341
    %v2406 = vmul.bf16 %v2390, %v2342
    %v2407 = vmul.bf16 %v2391, %v2343
    %v2408 = vmul.bf16 %v2392, %v2344
    %v2409 = vmul.bf16 %v2393, %v2345
    %v2410 = vmul.bf16 %v2394, %v2346
    %v2411 = vmul.bf16 %v2395, %v2347
    %v2412 = vmul.bf16 %v2396, %v2348
    %v2413 = vmul.bf16 %v2397, %v2349
    %v2414 = vmul.bf16 %v2398, %v2350
    %v2415 = vmul.bf16 %v2399, %v2351
    %v2416 = vmul.bf16 %v2400, %v2352
    %v2417 = vmul.bf16 %v2401, %v2353
    %v2418 = vmul.bf16 %v2402, %v2354
    %v2419 = vadd.bf16 %v2339, %v2403
    %v2420 = vadd.bf16 %v2340, %v2404
    %v2421 = vadd.bf16 %v2341, %v2405
    %v2422 = vadd.bf16 %v2342, %v2406
    %v2423 = vadd.bf16 %v2343, %v2407
    %v2424 = vadd.bf16 %v2344, %v2408
    %v2425 = vadd.bf16 %v2345, %v2409
    %v2426 = vadd.bf16 %v2346, %v2410
    %v2427 = vadd.bf16 %v2347, %v2411
    %v2428 = vadd.bf16 %v2348, %v2412
    %v2429 = vadd.bf16 %v2349, %v2413
    %v2430 = vadd.bf16 %v2350, %v2414
    %v2431 = vadd.bf16 %v2351, %v2415
    %v2432 = vadd.bf16 %v2352, %v2416
    %v2433 = vadd.bf16 %v2353, %v2417
    %v2434 = vadd.bf16 %v2354, %v2418
    %v2435 = vmul.bf16 %v2419, 1061961548
    %v2436 = vmul.bf16 %v2420, 1061961548
    %v2437 = vmul.bf16 %v2421, 1061961548
    %v2438 = vmul.bf16 %v2422, 1061961548
    %v2439 = vmul.bf16 %v2423, 1061961548
    %v2440 = vmul.bf16 %v2424, 1061961548
    %v2441 = vmul.bf16 %v2425, 1061961548
    %v2442 = vmul.bf16 %v2426, 1061961548
    %v2443 = vmul.bf16 %v2427, 1061961548
    %v2444 = vmul.bf16 %v2428, 1061961548
    %v2445 = vmul.bf16 %v2429, 1061961548
    %v2446 = vmul.bf16 %v2430, 1061961548
    %v2447 = vmul.bf16 %v2431, 1061961548
    %v2448 = vmul.bf16 %v2432, 1061961548
    %v2449 = vmul.bf16 %v2433, 1061961548
    %v2450 = vmul.bf16 %v2434, 1061961548
    %v2451 = vtanh.bf16.pop %v2435
    %v2452 = vtanh.bf16.pop %v2436
    %v2453 = vtanh.bf16.pop %v2437
    %v2454 = vtanh.bf16.pop %v2438
    %v2455 = vtanh.bf16.pop %v2439
    %v2456 = vtanh.bf16.pop %v2440
    %v2457 = vtanh.bf16.pop %v2441
    %v2458 = vtanh.bf16.pop %v2442
    %v2459 = vtanh.bf16.pop %v2443
    %v2460 = vtanh.bf16.pop %v2444
    %v2461 = vtanh.bf16.pop %v2445
    %v2462 = vtanh.bf16.pop %v2446
    %v2463 = vtanh.bf16.pop %v2447
    %v2464 = vtanh.bf16.pop %v2448
    %v2465 = vtanh.bf16.pop %v2449
    %v2466 = vtanh.bf16.pop %v2450
    %v2467 = vadd.bf16 %v2451, 1065369472
    %v2468 = vadd.bf16 %v2452, 1065369472
    %v2469 = vadd.bf16 %v2453, 1065369472
    %v2470 = vadd.bf16 %v2454, 1065369472
    %v2471 = vadd.bf16 %v2455, 1065369472
    %v2472 = vadd.bf16 %v2456, 1065369472
    %v2473 = vadd.bf16 %v2457, 1065369472
    %v2474 = vadd.bf16 %v2458, 1065369472
    %v2475 = vadd.bf16 %v2459, 1065369472
    %v2476 = vadd.bf16 %v2460, 1065369472
    %v2477 = vadd.bf16 %v2461, 1065369472
    %v2478 = vadd.bf16 %v2462, 1065369472
    %v2479 = vadd.bf16 %v2463, 1065369472
    %v2480 = vadd.bf16 %v2464, 1065369472
    %v2481 = vadd.bf16 %v2465, 1065369472
    %v2482 = vadd.bf16 %v2466, 1065369472
    %v2483 = vmul.bf16 %v2355, %v2467
    %v2484 = vmul.bf16 %v2356, %v2468
    %v2485 = vmul.bf16 %v2357, %v2469
    %v2486 = vmul.bf16 %v2358, %v2470
    %v2487 = vmul.bf16 %v2359, %v2471
    %v2488 = vmul.bf16 %v2360, %v2472
    %v2489 = vmul.bf16 %v2361, %v2473
    %v2490 = vmul.bf16 %v2362, %v2474
    %v2491 = vmul.bf16 %v2363, %v2475
    %v2492 = vmul.bf16 %v2364, %v2476
    %v2493 = vmul.bf16 %v2365, %v2477
    %v2494 = vmul.bf16 %v2366, %v2478
    %v2495 = vmul.bf16 %v2367, %v2479
    %v2496 = vmul.bf16 %v2368, %v2480
    %v2497 = vmul.bf16 %v2369, %v2481
    %v2498 = vmul.bf16 %v2370, %v2482
    %s2499 = scalar_lea.vmem %s3, 32
    %v2500 = vld [vmem:[%s2499] sm:$0xf]
    %v2501 = vld [vmem:[%s2499 + $0x4] sm:$0xf]
    %v2502 = vld [vmem:[%s2499 + $0x8] sm:$0xf]
    %v2503 = vld [vmem:[%s2499 + $0xc] sm:$0xf]
    %s2504 = scalar_lea.vmem %s4, 64
    %v2505 = vld [vmem:[%s2504] sm:$0xff]
    %v2506 = vld [vmem:[%s2504 + $0x8] sm:$0xff]
    %v2507 = vld [vmem:[%s2504 + $0x10] sm:$0xff]
    %v2508 = vld [vmem:[%s2504 + $0x18] sm:$0xff]
    %2510 = vset.pattern.permute.xlu0 0
    %2511 = vperm.xlu0 %2510, %v2505
    %v2512 = vpop.permute.xlu0 %2511
    %2515 = vset.pattern.permute.xlu0 0
    %2516 = vperm.xlu0 %2515, %v2506
    %v2517 = vpop.permute.xlu0 %2516
    %2520 = vset.pattern.permute.xlu0 0
    %2521 = vperm.xlu0 %2520, %v2507
    %v2522 = vpop.permute.xlu0 %2521
    %2525 = vset.pattern.permute.xlu0 0
    %2526 = vperm.xlu0 %2525, %v2508
    %v2527 = vpop.permute.xlu0 %2526
    %v2533 = vunpack.c.l.b16 %v2500
    %v2534 = vunpack.c.l.b16 %v2501
    %v2535 = vunpack.c.l.b16 %v2502
    %v2536 = vunpack.c.l.b16 %v2503
    %v2537 = vpack.c.b16 %v2534, %v2533
    %v2538 = vpack.c.b16 %v2536, %v2535
    %v2540 = vsel %vm1686, %v2537, 0
    %v2543 = vsel %vm1686, %v2538, 0
    %2545 = vmatprep.subr.bf16.mxu0 %v2484
    %2546 = vmatpush1.bf16.msra.mxu0 %v2483
    %2547 = vmatprep.subr.bf16.mxu0 %v2492
    %2548 = vmatpush1.bf16.msra.mxu0 %v2491
    %2549 = vmatprep.subr.bf16.mxu0 0
    %2550 = vmatpush1.bf16.msra.mxu0 0
    %2551 = vmatprep.subr.bf16.mxu0 0
    %2552 = vmatpush1.bf16.msra.mxu0 0
    %2553 = vmatprep.subr.bf16.mxu0 0
    %2554 = vmatpush1.bf16.msra.mxu0 0
    %2555 = vmatprep.subr.bf16.mxu0 0
    %2556 = vmatpush1.bf16.msra.mxu0 0
    %2557 = vmatprep.subr.bf16.mxu0 0
    %2558 = vmatpush1.bf16.msra.mxu0 0
    %2559 = vmatprep.subr.bf16.mxu0 0
    %2560 = vmatpush1.bf16.msra.mxu0 0
    %2561 = vmatprep.subr.bf16.mxu0 0
    %2562 = vmatpush1.bf16.msra.mxu0 0
    %2563 = vmatprep.subr.bf16.mxu0 0
    %2564 = vmatpush1.bf16.msra.mxu0 0
    %2565 = vmatprep.subr.bf16.mxu0 0
    %2566 = vmatpush1.bf16.msra.mxu0 0
    %2567 = vmatprep.subr.bf16.mxu0 0
    %2568 = vmatpush1.bf16.msra.mxu0 0
    %2569 = vmatprep.subr.bf16.mxu0 0
    %2570 = vmatpush1.bf16.msra.mxu0 0
    %2571 = vmatprep.subr.bf16.mxu0 0
    %2572 = vmatpush1.bf16.msra.mxu0 0
    %2573 = vmatprep.subr.bf16.mxu0 0
    %2574 = vmatpush1.bf16.msra.mxu0 0
    %2575 = vmatprep.subr.bf16.mxu0 0
    %2576 = vmatpush1.bf16.msra.mxu0 0
    %2577 = vmatprep.mubr.bf16.mxu0 0
    %2578 = vmatmul.mubr.bf16.gmra.mrb[0].mxu0 %v2540
    %v2579 = vpop.f32.mrb[0].mxu0
    %v2580 = vadd.f32 %v2512, %v2579
    %v2581 = vpop.f32.mrb[0].mxu0
    %v2582 = vadd.f32 %v2512, %v2581
    %v2583 = vpop.f32.mrb[0].mxu0
    %v2584 = vadd.f32 %v2517, %v2583
    %v2585 = vpop.f32.mrb[0].mxu0
    %v2586 = vadd.f32 %v2517, %v2585
    %2587 = vmatprep.mubr.bf16.mxu0 0
    %2588 = vmatmul.mubr.bf16.gmra.mrb[0].mxu0 %v2543
    %v2589 = vpop.f32.mrb[0].mxu0
    %v2590 = vadd.f32 %v2522, %v2589
    %v2591 = vpop.f32.mrb[0].mxu0
    %v2592 = vadd.f32 %v2522, %v2591
    %v2593 = vpop.f32.mrb[0].mxu0
    %v2594 = vadd.f32 %v2527, %v2593
    %v2595 = vpop.f32.mrb[0].mxu0
    %v2596 = vadd.f32 %v2527, %v2595
    %2597 = vdwg.mxu0
    %2598 = vmatprep.subr.bf16.mxu0 %v2486
    %2599 = vmatpush1.bf16.msra.mxu0 %v2485
    %2600 = vmatprep.subr.bf16.mxu0 %v2494
    %2601 = vmatpush1.bf16.msra.mxu0 %v2493
    %2602 = vmatprep.subr.bf16.mxu0 0
    %2603 = vmatpush1.bf16.msra.mxu0 0
    %2604 = vmatprep.subr.bf16.mxu0 0
    %2605 = vmatpush1.bf16.msra.mxu0 0
    %2606 = vmatprep.subr.bf16.mxu0 0
    %2607 = vmatpush1.bf16.msra.mxu0 0
    %2608 = vmatprep.subr.bf16.mxu0 0
    %2609 = vmatpush1.bf16.msra.mxu0 0
    %2610 = vmatprep.subr.bf16.mxu0 0
    %2611 = vmatpush1.bf16.msra.mxu0 0
    %2612 = vmatprep.subr.bf16.mxu0 0
    %2613 = vmatpush1.bf16.msra.mxu0 0
    %2614 = vmatprep.subr.bf16.mxu0 0
    %2615 = vmatpush1.bf16.msra.mxu0 0
    %2616 = vmatprep.subr.bf16.mxu0 0
    %2617 = vmatpush1.bf16.msra.mxu0 0
    %2618 = vmatprep.subr.bf16.mxu0 0
    %2619 = vmatpush1.bf16.msra.mxu0 0
    %2620 = vmatprep.subr.bf16.mxu0 0
    %2621 = vmatpush1.bf16.msra.mxu0 0
    %2622 = vmatprep.subr.bf16.mxu0 0
    %2623 = vmatpush1.bf16.msra.mxu0 0
    %2624 = vmatprep.subr.bf16.mxu0 0
    %2625 = vmatpush1.bf16.msra.mxu0 0
    %2626 = vmatprep.subr.bf16.mxu0 0
    %2627 = vmatpush1.bf16.msra.mxu0 0
    %2628 = vmatprep.subr.bf16.mxu0 0
    %2629 = vmatpush1.bf16.msra.mxu0 0
    %2630 = vmatprep.mubr.bf16.mxu0 0
    %2631 = vmatmul.mubr.bf16.gmra.mrb[0].mxu0 %v2540
    %v2632 = vpop.f32.mrb[0].mxu0
    %v2633 = vadd.f32 %v2512, %v2632
    %v2634 = vpop.f32.mrb[0].mxu0
    %v2635 = vadd.f32 %v2512, %v2634
    %v2636 = vpop.f32.mrb[0].mxu0
    %v2637 = vadd.f32 %v2517, %v2636
    %v2638 = vpop.f32.mrb[0].mxu0
    %v2639 = vadd.f32 %v2517, %v2638
    %2640 = vmatprep.mubr.bf16.mxu0 0
    %2641 = vmatmul.mubr.bf16.gmra.mrb[0].mxu0 %v2543
    %v2642 = vpop.f32.mrb[0].mxu0
    %v2643 = vadd.f32 %v2522, %v2642
    %v2644 = vpop.f32.mrb[0].mxu0
    %v2645 = vadd.f32 %v2522, %v2644
    %v2646 = vpop.f32.mrb[0].mxu0
    %v2647 = vadd.f32 %v2527, %v2646
    %v2648 = vpop.f32.mrb[0].mxu0
    %v2649 = vadd.f32 %v2527, %v2648
    %2650 = vdwg.mxu0
    %2651 = vmatprep.subr.bf16.mxu0 %v2488
    %2652 = vmatpush1.bf16.msra.mxu0 %v2487
    %2653 = vmatprep.subr.bf16.mxu0 %v2496
    %2654 = vmatpush1.bf16.msra.mxu0 %v2495
    %2655 = vmatprep.subr.bf16.mxu0 0
    %2656 = vmatpush1.bf16.msra.mxu0 0
    %2657 = vmatprep.subr.bf16.mxu0 0
    %2658 = vmatpush1.bf16.msra.mxu0 0
    %2659 = vmatprep.subr.bf16.mxu0 0
    %2660 = vmatpush1.bf16.msra.mxu0 0
    %2661 = vmatprep.subr.bf16.mxu0 0
    %2662 = vmatpush1.bf16.msra.mxu0 0
    %2663 = vmatprep.subr.bf16.mxu0 0
    %2664 = vmatpush1.bf16.msra.mxu0 0
    %2665 = vmatprep.subr.bf16.mxu0 0
    %2666 = vmatpush1.bf16.msra.mxu0 0
    %2667 = vmatprep.subr.bf16.mxu0 0
    %2668 = vmatpush1.bf16.msra.mxu0 0
    %2669 = vmatprep.subr.bf16.mxu0 0
    %2670 = vmatpush1.bf16.msra.mxu0 0
    %2671 = vmatprep.subr.bf16.mxu0 0
    %2672 = vmatpush1.bf16.msra.mxu0 0
    %2673 = vmatprep.subr.bf16.mxu0 0
    %2674 = vmatpush1.bf16.msra.mxu0 0
    %2675 = vmatprep.subr.bf16.mxu0 0
    %2676 = vmatpush1.bf16.msra.mxu0 0
    %2677 = vmatprep.subr.bf16.mxu0 0
    %2678 = vmatpush1.bf16.msra.mxu0 0
    %2679 = vmatprep.subr.bf16.mxu0 0
    %2680 = vmatpush1.bf16.msra.mxu0 0
    %2681 = vmatprep.subr.bf16.mxu0 0
    %2682 = vmatpush1.bf16.msra.mxu0 0
    %2683 = vmatprep.mubr.bf16.mxu0 0
    %2684 = vmatmul.mubr.bf16.gmra.mrb[0].mxu0 %v2540
    %v2685 = vpop.f32.mrb[0].mxu0
    %v2686 = vadd.f32 %v2512, %v2685
    %v2687 = vpop.f32.mrb[0].mxu0
    %v2688 = vadd.f32 %v2512, %v2687
    %v2689 = vpop.f32.mrb[0].mxu0
    %v2690 = vadd.f32 %v2517, %v2689
    %v2691 = vpop.f32.mrb[0].mxu0
    %v2692 = vadd.f32 %v2517, %v2691
    %2693 = vmatprep.mubr.bf16.mxu0 0
    %2694 = vmatmul.mubr.bf16.gmra.mrb[0].mxu0 %v2543
    %v2695 = vpop.f32.mrb[0].mxu0
    %v2696 = vadd.f32 %v2522, %v2695
    %v2697 = vpop.f32.mrb[0].mxu0
    %v2698 = vadd.f32 %v2522, %v2697
    %v2699 = vpop.f32.mrb[0].mxu0
    %v2700 = vadd.f32 %v2527, %v2699
    %v2701 = vpop.f32.mrb[0].mxu0
    %v2702 = vadd.f32 %v2527, %v2701
    %2703 = vdwg.mxu0
    %2704 = vmatprep.subr.bf16.mxu0 %v2490
    %2705 = vmatpush1.bf16.msra.mxu0 %v2489
    %2706 = vmatprep.subr.bf16.mxu0 %v2498
    %2707 = vmatpush1.bf16.msra.mxu0 %v2497
    %2708 = vmatprep.subr.bf16.mxu0 0
    %2709 = vmatpush1.bf16.msra.mxu0 0
    %2710 = vmatprep.subr.bf16.mxu0 0
    %2711 = vmatpush1.bf16.msra.mxu0 0
    %2712 = vmatprep.subr.bf16.mxu0 0
    %2713 = vmatpush1.bf16.msra.mxu0 0
    %2714 = vmatprep.subr.bf16.mxu0 0
    %2715 = vmatpush1.bf16.msra.mxu0 0
    %2716 = vmatprep.subr.bf16.mxu0 0
    %2717 = vmatpush1.bf16.msra.mxu0 0
    %2718 = vmatprep.subr.bf16.mxu0 0
    %2719 = vmatpush1.bf16.msra.mxu0 0
    %2720 = vmatprep.subr.bf16.mxu0 0
    %2721 = vmatpush1.bf16.msra.mxu0 0
    %2722 = vmatprep.subr.bf16.mxu0 0
    %2723 = vmatpush1.bf16.msra.mxu0 0
    %2724 = vmatprep.subr.bf16.mxu0 0
    %2725 = vmatpush1.bf16.msra.mxu0 0
    %2726 = vmatprep.subr.bf16.mxu0 0
    %2727 = vmatpush1.bf16.msra.mxu0 0
    %2728 = vmatprep.subr.bf16.mxu0 0
    %2729 = vmatpush1.bf16.msra.mxu0 0
    %2730 = vmatprep.subr.bf16.mxu0 0
    %2731 = vmatpush1.bf16.msra.mxu0 0
    %2732 = vmatprep.subr.bf16.mxu0 0
    %2733 = vmatpush1.bf16.msra.mxu0 0
    %2734 = vmatprep.subr.bf16.mxu0 0
    %2735 = vmatpush1.bf16.msra.mxu0 0
    %2736 = vmatprep.mubr.bf16.mxu0 0
    %2737 = vmatmul.mubr.bf16.gmra.mrb[0].mxu0 %v2540
    %v2738 = vpop.f32.mrb[0].mxu0
    %v2739 = vadd.f32 %v2512, %v2738
    %v2740 = vpop.f32.mrb[0].mxu0
    %v2741 = vadd.f32 %v2512, %v2740
    %v2742 = vpop.f32.mrb[0].mxu0
    %v2743 = vadd.f32 %v2517, %v2742
    %v2744 = vpop.f32.mrb[0].mxu0
    %v2745 = vadd.f32 %v2517, %v2744
    %2746 = vmatprep.mubr.bf16.mxu0 0
    %2747 = vmatmul.mubr.bf16.gmra.mrb[0].mxu0 %v2543
    %v2748 = vpop.f32.mrb[0].mxu0
    %v2749 = vadd.f32 %v2522, %v2748
    %v2750 = vpop.f32.mrb[0].mxu0
    %v2751 = vadd.f32 %v2522, %v2750
    %v2752 = vpop.f32.mrb[0].mxu0
    %v2753 = vadd.f32 %v2527, %v2752
    %v2754 = vpop.f32.mrb[0].mxu0
    %v2755 = vadd.f32 %v2527, %v2754
    %2756 = vdwg.mxu0
    %v2757 = vpack.c.bf16 %v2584, %v2580
    %v2758 = vpack.c.bf16 %v2586, %v2582
    %v2759 = vpack.c.bf16 %v2637, %v2633
    %v2760 = vpack.c.bf16 %v2639, %v2635
    %v2761 = vpack.c.bf16 %v2690, %v2686
    %v2762 = vpack.c.bf16 %v2692, %v2688
    %v2763 = vpack.c.bf16 %v2743, %v2739
    %v2764 = vpack.c.bf16 %v2745, %v2741
    %v2765 = vpack.c.bf16 %v2594, %v2590
    %v2766 = vpack.c.bf16 %v2596, %v2592
    %v2767 = vpack.c.bf16 %v2647, %v2643
    %v2768 = vpack.c.bf16 %v2649, %v2645
    %v2769 = vpack.c.bf16 %v2700, %v2696
    %v2770 = vpack.c.bf16 %v2702, %v2698
    %v2771 = vpack.c.bf16 %v2753, %v2749
    %v2772 = vpack.c.bf16 %v2755, %v2751
    %v2773 = vmul.bf16 %v2757, 1056980736
    %v2774 = vmul.bf16 %v2758, 1056980736
    %v2775 = vmul.bf16 %v2759, 1056980736
    %v2776 = vmul.bf16 %v2760, 1056980736
    %v2777 = vmul.bf16 %v2761, 1056980736
    %v2778 = vmul.bf16 %v2762, 1056980736
    %v2779 = vmul.bf16 %v2763, 1056980736
    %v2780 = vmul.bf16 %v2764, 1056980736
    %v2781 = vmul.bf16 %v2765, 1056980736
    %v2782 = vmul.bf16 %v2766, 1056980736
    %v2783 = vmul.bf16 %v2767, 1056980736
    %v2784 = vmul.bf16 %v2768, 1056980736
    %v2785 = vmul.bf16 %v2769, 1056980736
    %v2786 = vmul.bf16 %v2770, 1056980736
    %v2787 = vmul.bf16 %v2771, 1056980736
    %v2788 = vmul.bf16 %v2772, 1056980736
    %v2789 = vmul.bf16 %v2757, 1027030327
    %v2790 = vmul.bf16 %v2758, 1027030327
    %v2791 = vmul.bf16 %v2759, 1027030327
    %v2792 = vmul.bf16 %v2760, 1027030327
    %v2793 = vmul.bf16 %v2761, 1027030327
    %v2794 = vmul.bf16 %v2762, 1027030327
    %v2795 = vmul.bf16 %v2763, 1027030327
    %v2796 = vmul.bf16 %v2764, 1027030327
    %v2797 = vmul.bf16 %v2765, 1027030327
    %v2798 = vmul.bf16 %v2766, 1027030327
    %v2799 = vmul.bf16 %v2767, 1027030327
    %v2800 = vmul.bf16 %v2768, 1027030327
    %v2801 = vmul.bf16 %v2769, 1027030327
    %v2802 = vmul.bf16 %v2770, 1027030327
    %v2803 = vmul.bf16 %v2771, 1027030327
    %v2804 = vmul.bf16 %v2772, 1027030327
    %v2805 = vmul.bf16 %v2789, %v2757
    %v2806 = vmul.bf16 %v2790, %v2758
    %v2807 = vmul.bf16 %v2791, %v2759
    %v2808 = vmul.bf16 %v2792, %v2760
    %v2809 = vmul.bf16 %v2793, %v2761
    %v2810 = vmul.bf16 %v2794, %v2762
    %v2811 = vmul.bf16 %v2795, %v2763
    %v2812 = vmul.bf16 %v2796, %v2764
    %v2813 = vmul.bf16 %v2797, %v2765
    %v2814 = vmul.bf16 %v2798, %v2766
    %v2815 = vmul.bf16 %v2799, %v2767
    %v2816 = vmul.bf16 %v2800, %v2768
    %v2817 = vmul.bf16 %v2801, %v2769
    %v2818 = vmul.bf16 %v2802, %v2770
    %v2819 = vmul.bf16 %v2803, %v2771
    %v2820 = vmul.bf16 %v2804, %v2772
    %v2821 = vmul.bf16 %v2805, %v2757
    %v2822 = vmul.bf16 %v2806, %v2758
    %v2823 = vmul.bf16 %v2807, %v2759
    %v2824 = vmul.bf16 %v2808, %v2760
    %v2825 = vmul.bf16 %v2809, %v2761
    %v2826 = vmul.bf16 %v2810, %v2762
    %v2827 = vmul.bf16 %v2811, %v2763
    %v2828 = vmul.bf16 %v2812, %v2764
    %v2829 = vmul.bf16 %v2813, %v2765
    %v2830 = vmul.bf16 %v2814, %v2766
    %v2831 = vmul.bf16 %v2815, %v2767
    %v2832 = vmul.bf16 %v2816, %v2768
    %v2833 = vmul.bf16 %v2817, %v2769
    %v2834 = vmul.bf16 %v2818, %v2770
    %v2835 = vmul.bf16 %v2819, %v2771
    %v2836 = vmul.bf16 %v2820, %v2772
    %v2837 = vadd.bf16 %v2757, %v2821
    %v2838 = vadd.bf16 %v2758, %v2822
    %v2839 = vadd.bf16 %v2759, %v2823
    %v2840 = vadd.bf16 %v2760, %v2824
    %v2841 = vadd.bf16 %v2761, %v2825
    %v2842 = vadd.bf16 %v2762, %v2826
    %v2843 = vadd.bf16 %v2763, %v2827
    %v2844 = vadd.bf16 %v2764, %v2828
    %v2845 = vadd.bf16 %v2765, %v2829
    %v2846 = vadd.bf16 %v2766, %v2830
    %v2847 = vadd.bf16 %v2767, %v2831
    %v2848 = vadd.bf16 %v2768, %v2832
    %v2849 = vadd.bf16 %v2769, %v2833
    %v2850 = vadd.bf16 %v2770, %v2834
    %v2851 = vadd.bf16 %v2771, %v2835
    %v2852 = vadd.bf16 %v2772, %v2836
    %v2853 = vmul.bf16 %v2837, 1061961548
    %v2854 = vmul.bf16 %v2838, 1061961548
    %v2855 = vmul.bf16 %v2839, 1061961548
    %v2856 = vmul.bf16 %v2840, 1061961548
    %v2857 = vmul.bf16 %v2841, 1061961548
    %v2858 = vmul.bf16 %v2842, 1061961548
    %v2859 = vmul.bf16 %v2843, 1061961548
    %v2860 = vmul.bf16 %v2844, 1061961548
    %v2861 = vmul.bf16 %v2845, 1061961548
    %v2862 = vmul.bf16 %v2846, 1061961548
    %v2863 = vmul.bf16 %v2847, 1061961548
    %v2864 = vmul.bf16 %v2848, 1061961548
    %v2865 = vmul.bf16 %v2849, 1061961548
    %v2866 = vmul.bf16 %v2850, 1061961548
    %v2867 = vmul.bf16 %v2851, 1061961548
    %v2868 = vmul.bf16 %v2852, 1061961548
    %v2869 = vtanh.bf16.pop %v2853
    %v2870 = vtanh.bf16.pop %v2854
    %v2871 = vtanh.bf16.pop %v2855
    %v2872 = vtanh.bf16.pop %v2856
    %v2873 = vtanh.bf16.pop %v2857
    %v2874 = vtanh.bf16.pop %v2858
    %v2875 = vtanh.bf16.pop %v2859
    %v2876 = vtanh.bf16.pop %v2860
    %v2877 = vtanh.bf16.pop %v2861
    %v2878 = vtanh.bf16.pop %v2862
    %v2879 = vtanh.bf16.pop %v2863
    %v2880 = vtanh.bf16.pop %v2864
    %v2881 = vtanh.bf16.pop %v2865
    %v2882 = vtanh.bf16.pop %v2866
    %v2883 = vtanh.bf16.pop %v2867
    %v2884 = vtanh.bf16.pop %v2868
    %v2885 = vadd.bf16 %v2869, 1065369472
    %v2886 = vadd.bf16 %v2870, 1065369472
    %v2887 = vadd.bf16 %v2871, 1065369472
    %v2888 = vadd.bf16 %v2872, 1065369472
    %v2889 = vadd.bf16 %v2873, 1065369472
    %v2890 = vadd.bf16 %v2874, 1065369472
    %v2891 = vadd.bf16 %v2875, 1065369472
    %v2892 = vadd.bf16 %v2876, 1065369472
    %v2893 = vadd.bf16 %v2877, 1065369472
    %v2894 = vadd.bf16 %v2878, 1065369472
    %v2895 = vadd.bf16 %v2879, 1065369472
    %v2896 = vadd.bf16 %v2880, 1065369472
    %v2897 = vadd.bf16 %v2881, 1065369472
    %v2898 = vadd.bf16 %v2882, 1065369472
    %v2899 = vadd.bf16 %v2883, 1065369472
    %v2900 = vadd.bf16 %v2884, 1065369472
    %v2901 = vmul.bf16 %v2773, %v2885
    %v2902 = vmul.bf16 %v2774, %v2886
    %v2903 = vmul.bf16 %v2775, %v2887
    %v2904 = vmul.bf16 %v2776, %v2888
    %v2905 = vmul.bf16 %v2777, %v2889
    %v2906 = vmul.bf16 %v2778, %v2890
    %v2907 = vmul.bf16 %v2779, %v2891
    %v2908 = vmul.bf16 %v2780, %v2892
    %v2909 = vmul.bf16 %v2781, %v2893
    %v2910 = vmul.bf16 %v2782, %v2894
    %v2911 = vmul.bf16 %v2783, %v2895
    %v2912 = vmul.bf16 %v2784, %v2896
    %v2913 = vmul.bf16 %v2785, %v2897
    %v2914 = vmul.bf16 %v2786, %v2898
    %v2915 = vmul.bf16 %v2787, %v2899
    %v2916 = vmul.bf16 %v2788, %v2900
    %s2917 = scalar_lea.vmem %s3, 48
    %v2918 = vld [vmem:[%s2917] sm:$0xf]
    %v2919 = vld [vmem:[%s2917 + $0x4] sm:$0xf]
    %v2920 = vld [vmem:[%s2917 + $0x8] sm:$0xf]
    %v2921 = vld [vmem:[%s2917 + $0xc] sm:$0xf]
    %s2922 = scalar_lea.vmem %s4, 96
    %v2923 = vld [vmem:[%s2922] sm:$0xff]
    %v2924 = vld [vmem:[%s2922 + $0x8] sm:$0xff]
    %v2925 = vld [vmem:[%s2922 + $0x10] sm:$0xff]
    %v2926 = vld [vmem:[%s2922 + $0x18] sm:$0xff]
    %2928 = vset.pattern.permute.xlu0 0
    %2929 = vperm.xlu0 %2928, %v2923
    %v2930 = vpop.permute.xlu0 %2929
    %2933 = vset.pattern.permute.xlu0 0
    %2934 = vperm.xlu0 %2933, %v2924
    %v2935 = vpop.permute.xlu0 %2934
    %2938 = vset.pattern.permute.xlu0 0
    %2939 = vperm.xlu0 %2938, %v2925
    %v2940 = vpop.permute.xlu0 %2939
    %2943 = vset.pattern.permute.xlu0 0
    %2944 = vperm.xlu0 %2943, %v2926
    %v2945 = vpop.permute.xlu0 %2944
    %v2951 = vunpack.c.l.b16 %v2918
    %v2952 = vunpack.c.l.b16 %v2919
    %v2953 = vunpack.c.l.b16 %v2920
    %v2954 = vunpack.c.l.b16 %v2921
    %v2955 = vpack.c.b16 %v2952, %v2951
    %v2956 = vpack.c.b16 %v2954, %v2953
    %v2958 = vsel %vm1686, %v2955, 0
    %v2961 = vsel %vm1686, %v2956, 0
    %2963 = vmatprep.subr.bf16.mxu0 %v2902
    %2964 = vmatpush1.bf16.msra.mxu0 %v2901
    %2965 = vmatprep.subr.bf16.mxu0 %v2910
    %2966 = vmatpush1.bf16.msra.mxu0 %v2909
    %2967 = vmatprep.subr.bf16.mxu0 0
    %2968 = vmatpush1.bf16.msra.mxu0 0
    %2969 = vmatprep.subr.bf16.mxu0 0
    %2970 = vmatpush1.bf16.msra.mxu0 0
    %2971 = vmatprep.subr.bf16.mxu0 0
    %2972 = vmatpush1.bf16.msra.mxu0 0
    %2973 = vmatprep.subr.bf16.mxu0 0
    %2974 = vmatpush1.bf16.msra.mxu0 0
    %2975 = vmatprep.subr.bf16.mxu0 0
    %2976 = vmatpush1.bf16.msra.mxu0 0
    %2977 = vmatprep.subr.bf16.mxu0 0
    %2978 = vmatpush1.bf16.msra.mxu0 0
    %2979 = vmatprep.subr.bf16.mxu0 0
    %2980 = vmatpush1.bf16.msra.mxu0 0
    %2981 = vmatprep.subr.bf16.mxu0 0
    %2982 = vmatpush1.bf16.msra.mxu0 0
    %2983 = vmatprep.subr.bf16.mxu0 0
    %2984 = vmatpush1.bf16.msra.mxu0 0
    %2985 = vmatprep.subr.bf16.mxu0 0
    %2986 = vmatpush1.bf16.msra.mxu0 0
    %2987 = vmatprep.subr.bf16.mxu0 0
    %2988 = vmatpush1.bf16.msra.mxu0 0
    %2989 = vmatprep.subr.bf16.mxu0 0
    %2990 = vmatpush1.bf16.msra.mxu0 0
    %2991 = vmatprep.subr.bf16.mxu0 0
    %2992 = vmatpush1.bf16.msra.mxu0 0
    %2993 = vmatprep.subr.bf16.mxu0 0
    %2994 = vmatpush1.bf16.msra.mxu0 0
    %2995 = vmatprep.mubr.bf16.mxu0 0
    %2996 = vmatmul.mubr.bf16.gmra.mrb[0].mxu0 %v2958
    %v2997 = vpop.f32.mrb[0].mxu0
    %v2998 = vadd.f32 %v2930, %v2997
    %v2999 = vpop.f32.mrb[0].mxu0
    %v3000 = vadd.f32 %v2930, %v2999
    %v3001 = vpop.f32.mrb[0].mxu0
    %v3002 = vadd.f32 %v2935, %v3001
    %v3003 = vpop.f32.mrb[0].mxu0
    %v3004 = vadd.f32 %v2935, %v3003
    %3005 = vmatprep.mubr.bf16.mxu0 0
    %3006 = vmatmul.mubr.bf16.gmra.mrb[0].mxu0 %v2961
    %v3007 = vpop.f32.mrb[0].mxu0
    %v3008 = vadd.f32 %v2940, %v3007
    %v3009 = vpop.f32.mrb[0].mxu0
    %v3010 = vadd.f32 %v2940, %v3009
    %v3011 = vpop.f32.mrb[0].mxu0
    %v3012 = vadd.f32 %v2945, %v3011
    %v3013 = vpop.f32.mrb[0].mxu0
    %v3014 = vadd.f32 %v2945, %v3013
    %3015 = vdwg.mxu0
    %3016 = vmatprep.subr.bf16.mxu0 %v2904
    %3017 = vmatpush1.bf16.msra.mxu0 %v2903
    %3018 = vmatprep.subr.bf16.mxu0 %v2912
    %3019 = vmatpush1.bf16.msra.mxu0 %v2911
    %3020 = vmatprep.subr.bf16.mxu0 0
    %3021 = vmatpush1.bf16.msra.mxu0 0
    %3022 = vmatprep.subr.bf16.mxu0 0
    %3023 = vmatpush1.bf16.msra.mxu0 0
    %3024 = vmatprep.subr.bf16.mxu0 0
    %3025 = vmatpush1.bf16.msra.mxu0 0
    %3026 = vmatprep.subr.bf16.mxu0 0
    %3027 = vmatpush1.bf16.msra.mxu0 0
    %3028 = vmatprep.subr.bf16.mxu0 0
    %3029 = vmatpush1.bf16.msra.mxu0 0
    %3030 = vmatprep.subr.bf16.mxu0 0
    %3031 = vmatpush1.bf16.msra.mxu0 0
    %3032 = vmatprep.subr.bf16.mxu0 0
    %3033 = vmatpush1.bf16.msra.mxu0 0
    %3034 = vmatprep.subr.bf16.mxu0 0
    %3035 = vmatpush1.bf16.msra.mxu0 0
    %3036 = vmatprep.subr.bf16.mxu0 0
    %3037 = vmatpush1.bf16.msra.mxu0 0
    %3038 = vmatprep.subr.bf16.mxu0 0
    %3039 = vmatpush1.bf16.msra.mxu0 0
    %3040 = vmatprep.subr.bf16.mxu0 0
    %3041 = vmatpush1.bf16.msra.mxu0 0
    %3042 = vmatprep.subr.bf16.mxu0 0
    %3043 = vmatpush1.bf16.msra.mxu0 0
    %3044 = vmatprep.subr.bf16.mxu0 0
    %3045 = vmatpush1.bf16.msra.mxu0 0
    %3046 = vmatprep.subr.bf16.mxu0 0
    %3047 = vmatpush1.bf16.msra.mxu0 0
    %3048 = vmatprep.mubr.bf16.mxu0 0
    %3049 = vmatmul.mubr.bf16.gmra.mrb[0].mxu0 %v2958
    %v3050 = vpop.f32.mrb[0].mxu0
    %v3051 = vadd.f32 %v2930, %v3050
    %v3052 = vpop.f32.mrb[0].mxu0
    %v3053 = vadd.f32 %v2930, %v3052
    %v3054 = vpop.f32.mrb[0].mxu0
    %v3055 = vadd.f32 %v2935, %v3054
    %v3056 = vpop.f32.mrb[0].mxu0
    %v3057 = vadd.f32 %v2935, %v3056
    %3058 = vmatprep.mubr.bf16.mxu0 0
    %3059 = vmatmul.mubr.bf16.gmra.mrb[0].mxu0 %v2961
    %v3060 = vpop.f32.mrb[0].mxu0
    %v3061 = vadd.f32 %v2940, %v3060
    %v3062 = vpop.f32.mrb[0].mxu0
    %v3063 = vadd.f32 %v2940, %v3062
    %v3064 = vpop.f32.mrb[0].mxu0
    %v3065 = vadd.f32 %v2945, %v3064
    %v3066 = vpop.f32.mrb[0].mxu0
    %v3067 = vadd.f32 %v2945, %v3066
    %3068 = vdwg.mxu0
    %3069 = vmatprep.subr.bf16.mxu0 %v2906
    %3070 = vmatpush1.bf16.msra.mxu0 %v2905
    %3071 = vmatprep.subr.bf16.mxu0 %v2914
    %3072 = vmatpush1.bf16.msra.mxu0 %v2913
    %3073 = vmatprep.subr.bf16.mxu0 0
    %3074 = vmatpush1.bf16.msra.mxu0 0
    %3075 = vmatprep.subr.bf16.mxu0 0
    %3076 = vmatpush1.bf16.msra.mxu0 0
    %3077 = vmatprep.subr.bf16.mxu0 0
    %3078 = vmatpush1.bf16.msra.mxu0 0
    %3079 = vmatprep.subr.bf16.mxu0 0
    %3080 = vmatpush1.bf16.msra.mxu0 0
    %3081 = vmatprep.subr.bf16.mxu0 0
    %3082 = vmatpush1.bf16.msra.mxu0 0
    %3083 = vmatprep.subr.bf16.mxu0 0
    %3084 = vmatpush1.bf16.msra.mxu0 0
    %3085 = vmatprep.subr.bf16.mxu0 0
    %3086 = vmatpush1.bf16.msra.mxu0 0
    %3087 = vmatprep.subr.bf16.mxu0 0
    %3088 = vmatpush1.bf16.msra.mxu0 0
    %3089 = vmatprep.subr.bf16.mxu0 0
    %3090 = vmatpush1.bf16.msra.mxu0 0
    %3091 = vmatprep.subr.bf16.mxu0 0
    %3092 = vmatpush1.bf16.msra.mxu0 0
    %3093 = vmatprep.subr.bf16.mxu0 0
    %3094 = vmatpush1.bf16.msra.mxu0 0
    %3095 = vmatprep.subr.bf16.mxu0 0
    %3096 = vmatpush1.bf16.msra.mxu0 0
    %3097 = vmatprep.subr.bf16.mxu0 0
    %3098 = vmatpush1.bf16.msra.mxu0 0
    %3099 = vmatprep.subr.bf16.mxu0 0
    %3100 = vmatpush1.bf16.msra.mxu0 0
    %3101 = vmatprep.mubr.bf16.mxu0 0
    %3102 = vmatmul.mubr.bf16.gmra.mrb[0].mxu0 %v2958
    %v3103 = vpop.f32.mrb[0].mxu0
    %v3104 = vadd.f32 %v2930, %v3103
    %v3105 = vpop.f32.mrb[0].mxu0
    %v3106 = vadd.f32 %v2930, %v3105
    %v3107 = vpop.f32.mrb[0].mxu0
    %v3108 = vadd.f32 %v2935, %v3107
    %v3109 = vpop.f32.mrb[0].mxu0
    %v3110 = vadd.f32 %v2935, %v3109
    %3111 = vmatprep.mubr.bf16.mxu0 0
    %3112 = vmatmul.mubr.bf16.gmra.mrb[0].mxu0 %v2961
    %v3113 = vpop.f32.mrb[0].mxu0
    %v3114 = vadd.f32 %v2940, %v3113
    %v3115 = vpop.f32.mrb[0].mxu0
    %v3116 = vadd.f32 %v2940, %v3115
    %v3117 = vpop.f32.mrb[0].mxu0
    %v3118 = vadd.f32 %v2945, %v3117
    %v3119 = vpop.f32.mrb[0].mxu0
    %v3120 = vadd.f32 %v2945, %v3119
    %3121 = vdwg.mxu0
    %3122 = vmatprep.subr.bf16.mxu0 %v2908
    %3123 = vmatpush1.bf16.msra.mxu0 %v2907
    %3124 = vmatprep.subr.bf16.mxu0 %v2916
    %3125 = vmatpush1.bf16.msra.mxu0 %v2915
    %3126 = vmatprep.subr.bf16.mxu0 0
    %3127 = vmatpush1.bf16.msra.mxu0 0
    %3128 = vmatprep.subr.bf16.mxu0 0
    %3129 = vmatpush1.bf16.msra.mxu0 0
    %3130 = vmatprep.subr.bf16.mxu0 0
    %3131 = vmatpush1.bf16.msra.mxu0 0
    %3132 = vmatprep.subr.bf16.mxu0 0
    %3133 = vmatpush1.bf16.msra.mxu0 0
    %3134 = vmatprep.subr.bf16.mxu0 0
    %3135 = vmatpush1.bf16.msra.mxu0 0
    %3136 = vmatprep.subr.bf16.mxu0 0
    %3137 = vmatpush1.bf16.msra.mxu0 0
    %3138 = vmatprep.subr.bf16.mxu0 0
    %3139 = vmatpush1.bf16.msra.mxu0 0
    %3140 = vmatprep.subr.bf16.mxu0 0
    %3141 = vmatpush1.bf16.msra.mxu0 0
    %3142 = vmatprep.subr.bf16.mxu0 0
    %3143 = vmatpush1.bf16.msra.mxu0 0
    %3144 = vmatprep.subr.bf16.mxu0 0
    %3145 = vmatpush1.bf16.msra.mxu0 0
    %3146 = vmatprep.subr.bf16.mxu0 0
    %3147 = vmatpush1.bf16.msra.mxu0 0
    %3148 = vmatprep.subr.bf16.mxu0 0
    %3149 = vmatpush1.bf16.msra.mxu0 0
    %3150 = vmatprep.subr.bf16.mxu0 0
    %3151 = vmatpush1.bf16.msra.mxu0 0
    %3152 = vmatprep.subr.bf16.mxu0 0
    %3153 = vmatpush1.bf16.msra.mxu0 0
    %3154 = vmatprep.mubr.bf16.mxu0 0
    %3155 = vmatmul.mubr.bf16.gmra.mrb[0].mxu0 %v2958
    %v3156 = vpop.f32.mrb[0].mxu0
    %v3157 = vadd.f32 %v2930, %v3156
    %v3158 = vpop.f32.mrb[0].mxu0
    %v3159 = vadd.f32 %v2930, %v3158
    %v3160 = vpop.f32.mrb[0].mxu0
    %v3161 = vadd.f32 %v2935, %v3160
    %v3162 = vpop.f32.mrb[0].mxu0
    %v3163 = vadd.f32 %v2935, %v3162
    %3164 = vmatprep.mubr.bf16.mxu0 0
    %3165 = vmatmul.mubr.bf16.gmra.mrb[0].mxu0 %v2961
    %v3166 = vpop.f32.mrb[0].mxu0
    %v3167 = vadd.f32 %v2940, %v3166
    %v3168 = vpop.f32.mrb[0].mxu0
    %v3169 = vadd.f32 %v2940, %v3168
    %v3170 = vpop.f32.mrb[0].mxu0
    %v3171 = vadd.f32 %v2945, %v3170
    %v3172 = vpop.f32.mrb[0].mxu0
    %v3173 = vadd.f32 %v2945, %v3172
    %3174 = vdwg.mxu0
    %v3175 = vpack.c.bf16 %v3002, %v2998
    %v3176 = vpack.c.bf16 %v3004, %v3000
    %v3177 = vpack.c.bf16 %v3055, %v3051
    %v3178 = vpack.c.bf16 %v3057, %v3053
    %v3179 = vpack.c.bf16 %v3108, %v3104
    %v3180 = vpack.c.bf16 %v3110, %v3106
    %v3181 = vpack.c.bf16 %v3161, %v3157
    %v3182 = vpack.c.bf16 %v3163, %v3159
    %v3183 = vpack.c.bf16 %v3012, %v3008
    %v3184 = vpack.c.bf16 %v3014, %v3010
    %v3185 = vpack.c.bf16 %v3065, %v3061
    %v3186 = vpack.c.bf16 %v3067, %v3063
    %v3187 = vpack.c.bf16 %v3118, %v3114
    %v3188 = vpack.c.bf16 %v3120, %v3116
    %v3189 = vpack.c.bf16 %v3171, %v3167
    %v3190 = vpack.c.bf16 %v3173, %v3169
    %v3191 = vadd.bf16 %v2483, %v3175
    %v3192 = vadd.bf16 %v2484, %v3176
    %v3193 = vadd.bf16 %v2485, %v3177
    %v3194 = vadd.bf16 %v2486, %v3178
    %v3195 = vadd.bf16 %v2487, %v3179
    %v3196 = vadd.bf16 %v2488, %v3180
    %v3197 = vadd.bf16 %v2489, %v3181
    %v3198 = vadd.bf16 %v2490, %v3182
    %v3199 = vadd.bf16 %v2491, %v3183
    %v3200 = vadd.bf16 %v2492, %v3184
    %v3201 = vadd.bf16 %v2493, %v3185
    %v3202 = vadd.bf16 %v2494, %v3186
    %v3203 = vadd.bf16 %v2495, %v3187
    %v3204 = vadd.bf16 %v2496, %v3188
    %v3205 = vadd.bf16 %v2497, %v3189
    %v3206 = vadd.bf16 %v2498, %v3190
    %v3207 = vmul.bf16 %v3191, 1056980736
    %v3208 = vmul.bf16 %v3192, 1056980736
    %v3209 = vmul.bf16 %v3193, 1056980736
    %v3210 = vmul.bf16 %v3194, 1056980736
    %v3211 = vmul.bf16 %v3195, 1056980736
    %v3212 = vmul.bf16 %v3196, 1056980736
    %v3213 = vmul.bf16 %v3197, 1056980736
    %v3214 = vmul.bf16 %v3198, 1056980736
    %v3215 = vmul.bf16 %v3199, 1056980736
    %v3216 = vmul.bf16 %v3200, 1056980736
    %v3217 = vmul.bf16 %v3201, 1056980736
    %v3218 = vmul.bf16 %v3202, 1056980736
    %v3219 = vmul.bf16 %v3203, 1056980736
    %v3220 = vmul.bf16 %v3204, 1056980736
    %v3221 = vmul.bf16 %v3205, 1056980736
    %v3222 = vmul.bf16 %v3206, 1056980736
    %v3223 = vmul.bf16 %v3191, 1027030327
    %v3224 = vmul.bf16 %v3192, 1027030327
    %v3225 = vmul.bf16 %v3193, 1027030327
    %v3226 = vmul.bf16 %v3194, 1027030327
    %v3227 = vmul.bf16 %v3195, 1027030327
    %v3228 = vmul.bf16 %v3196, 1027030327
    %v3229 = vmul.bf16 %v3197, 1027030327
    %v3230 = vmul.bf16 %v3198, 1027030327
    %v3231 = vmul.bf16 %v3199, 1027030327
    %v3232 = vmul.bf16 %v3200, 1027030327
    %v3233 = vmul.bf16 %v3201, 1027030327
    %v3234 = vmul.bf16 %v3202, 1027030327
    %v3235 = vmul.bf16 %v3203, 1027030327
    %v3236 = vmul.bf16 %v3204, 1027030327
    %v3237 = vmul.bf16 %v3205, 1027030327
    %v3238 = vmul.bf16 %v3206, 1027030327
    %v3239 = vmul.bf16 %v3223, %v3191
    %v3240 = vmul.bf16 %v3224, %v3192
    %v3241 = vmul.bf16 %v3225, %v3193
    %v3242 = vmul.bf16 %v3226, %v3194
    %v3243 = vmul.bf16 %v3227, %v3195
    %v3244 = vmul.bf16 %v3228, %v3196
    %v3245 = vmul.bf16 %v3229, %v3197
    %v3246 = vmul.bf16 %v3230, %v3198
    %v3247 = vmul.bf16 %v3231, %v3199
    %v3248 = vmul.bf16 %v3232, %v3200
    %v3249 = vmul.bf16 %v3233, %v3201
    %v3250 = vmul.bf16 %v3234, %v3202
    %v3251 = vmul.bf16 %v3235, %v3203
    %v3252 = vmul.bf16 %v3236, %v3204
    %v3253 = vmul.bf16 %v3237, %v3205
    %v3254 = vmul.bf16 %v3238, %v3206
    %v3255 = vmul.bf16 %v3239, %v3191
    %v3256 = vmul.bf16 %v3240, %v3192
    %v3257 = vmul.bf16 %v3241, %v3193
    %v3258 = vmul.bf16 %v3242, %v3194
    %v3259 = vmul.bf16 %v3243, %v3195
    %v3260 = vmul.bf16 %v3244, %v3196
    %v3261 = vmul.bf16 %v3245, %v3197
    %v3262 = vmul.bf16 %v3246, %v3198
    %v3263 = vmul.bf16 %v3247, %v3199
    %v3264 = vmul.bf16 %v3248, %v3200
    %v3265 = vmul.bf16 %v3249, %v3201
    %v3266 = vmul.bf16 %v3250, %v3202
    %v3267 = vmul.bf16 %v3251, %v3203
    %v3268 = vmul.bf16 %v3252, %v3204
    %v3269 = vmul.bf16 %v3253, %v3205
    %v3270 = vmul.bf16 %v3254, %v3206
    %v3271 = vadd.bf16 %v3191, %v3255
    %v3272 = vadd.bf16 %v3192, %v3256
    %v3273 = vadd.bf16 %v3193, %v3257
    %v3274 = vadd.bf16 %v3194, %v3258
    %v3275 = vadd.bf16 %v3195, %v3259
    %v3276 = vadd.bf16 %v3196, %v3260
    %v3277 = vadd.bf16 %v3197, %v3261
    %v3278 = vadd.bf16 %v3198, %v3262
    %v3279 = vadd.bf16 %v3199, %v3263
    %v3280 = vadd.bf16 %v3200, %v3264
    %v3281 = vadd.bf16 %v3201, %v3265
    %v3282 = vadd.bf16 %v3202, %v3266
    %v3283 = vadd.bf16 %v3203, %v3267
    %v3284 = vadd.bf16 %v3204, %v3268
    %v3285 = vadd.bf16 %v3205, %v3269
    %v3286 = vadd.bf16 %v3206, %v3270
    %v3287 = vmul.bf16 %v3271, 1061961548
    %v3288 = vmul.bf16 %v3272, 1061961548
    %v3289 = vmul.bf16 %v3273, 1061961548
    %v3290 = vmul.bf16 %v3274, 1061961548
    %v3291 = vmul.bf16 %v3275, 1061961548
    %v3292 = vmul.bf16 %v3276, 1061961548
    %v3293 = vmul.bf16 %v3277, 1061961548
    %v3294 = vmul.bf16 %v3278, 1061961548
    %v3295 = vmul.bf16 %v3279, 1061961548
    %v3296 = vmul.bf16 %v3280, 1061961548
    %v3297 = vmul.bf16 %v3281, 1061961548
    %v3298 = vmul.bf16 %v3282, 1061961548
    %v3299 = vmul.bf16 %v3283, 1061961548
    %v3300 = vmul.bf16 %v3284, 1061961548
    %v3301 = vmul.bf16 %v3285, 1061961548
    %v3302 = vmul.bf16 %v3286, 1061961548
    %v3303 = vtanh.bf16.pop %v3287
    %v3304 = vtanh.bf16.pop %v3288
    %v3305 = vtanh.bf16.pop %v3289
    %v3306 = vtanh.bf16.pop %v3290
    %v3307 = vtanh.bf16.pop %v3291
    %v3308 = vtanh.bf16.pop %v3292
    %v3309 = vtanh.bf16.pop %v3293
    %v3310 = vtanh.bf16.pop %v3294
    %v3311 = vtanh.bf16.pop %v3295
    %v3312 = vtanh.bf16.pop %v3296
    %v3313 = vtanh.bf16.pop %v3297
    %v3314 = vtanh.bf16.pop %v3298
    %v3315 = vtanh.bf16.pop %v3299
    %v3316 = vtanh.bf16.pop %v3300
    %v3317 = vtanh.bf16.pop %v3301
    %v3318 = vtanh.bf16.pop %v3302
    %v3319 = vadd.bf16 %v3303, 1065369472
    %v3320 = vadd.bf16 %v3304, 1065369472
    %v3321 = vadd.bf16 %v3305, 1065369472
    %v3322 = vadd.bf16 %v3306, 1065369472
    %v3323 = vadd.bf16 %v3307, 1065369472
    %v3324 = vadd.bf16 %v3308, 1065369472
    %v3325 = vadd.bf16 %v3309, 1065369472
    %v3326 = vadd.bf16 %v3310, 1065369472
    %v3327 = vadd.bf16 %v3311, 1065369472
    %v3328 = vadd.bf16 %v3312, 1065369472
    %v3329 = vadd.bf16 %v3313, 1065369472
    %v3330 = vadd.bf16 %v3314, 1065369472
    %v3331 = vadd.bf16 %v3315, 1065369472
    %v3332 = vadd.bf16 %v3316, 1065369472
    %v3333 = vadd.bf16 %v3317, 1065369472
    %v3334 = vadd.bf16 %v3318, 1065369472
    %v3335 = vmul.bf16 %v3207, %v3319
    %v3336 = vmul.bf16 %v3208, %v3320
    %v3337 = vmul.bf16 %v3209, %v3321
    %v3338 = vmul.bf16 %v3210, %v3322
    %v3339 = vmul.bf16 %v3211, %v3323
    %v3340 = vmul.bf16 %v3212, %v3324
    %v3341 = vmul.bf16 %v3213, %v3325
    %v3342 = vmul.bf16 %v3214, %v3326
    %v3343 = vmul.bf16 %v3215, %v3327
    %v3344 = vmul.bf16 %v3216, %v3328
    %v3345 = vmul.bf16 %v3217, %v3329
    %v3346 = vmul.bf16 %v3218, %v3330
    %v3347 = vmul.bf16 %v3219, %v3331
    %v3348 = vmul.bf16 %v3220, %v3332
    %v3349 = vmul.bf16 %v3221, %v3333
    %v3350 = vmul.bf16 %v3222, %v3334
    %s3351 = scalar_lea.vmem %s3, 64
    %v3352 = vld [vmem:[%s3351] sm:$0xf]
    %v3353 = vld [vmem:[%s3351 + $0x4] sm:$0xf]
    %v3354 = vld [vmem:[%s3351 + $0x8] sm:$0xf]
    %v3355 = vld [vmem:[%s3351 + $0xc] sm:$0xf]
    %s3356 = scalar_lea.vmem %s4, 128
    %v3357 = vld [vmem:[%s3356] sm:$0xff]
    %v3358 = vld [vmem:[%s3356 + $0x8] sm:$0xff]
    %v3359 = vld [vmem:[%s3356 + $0x10] sm:$0xff]
    %v3360 = vld [vmem:[%s3356 + $0x18] sm:$0xff]
    %3362 = vset.pattern.permute.xlu0 0
    %3363 = vperm.xlu0 %3362, %v3357
    %v3364 = vpop.permute.xlu0 %3363
    %3367 = vset.pattern.permute.xlu0 0
    %3368 = vperm.xlu0 %3367, %v3358
    %v3369 = vpop.permute.xlu0 %3368
    %3372 = vset.pattern.permute.xlu0 0
    %3373 = vperm.xlu0 %3372, %v3359
    %v3374 = vpop.permute.xlu0 %3373
    %3377 = vset.pattern.permute.xlu0 0
    %3378 = vperm.xlu0 %3377, %v3360
    %v3379 = vpop.permute.xlu0 %3378
    %v3385 = vunpack.c.l.b16 %v3352
    %v3386 = vunpack.c.l.b16 %v3353
    %v3387 = vunpack.c.l.b16 %v3354
    %v3388 = vunpack.c.l.b16 %v3355
    %v3389 = vpack.c.b16 %v3386, %v3385
    %v3390 = vpack.c.b16 %v3388, %v3387
    %v3392 = vsel %vm1686, %v3389, 0
    %v3395 = vsel %vm1686, %v3390, 0
    %3397 = vmatprep.subr.bf16.mxu0 %v3336
    %3398 = vmatpush1.bf16.msra.mxu0 %v3335
    %3399 = vmatprep.subr.bf16.mxu0 %v3344
    %3400 = vmatpush1.bf16.msra.mxu0 %v3343
    %3401 = vmatprep.subr.bf16.mxu0 0
    %3402 = vmatpush1.bf16.msra.mxu0 0
    %3403 = vmatprep.subr.bf16.mxu0 0
    %3404 = vmatpush1.bf16.msra.mxu0 0
    %3405 = vmatprep.subr.bf16.mxu0 0
    %3406 = vmatpush1.bf16.msra.mxu0 0
    %3407 = vmatprep.subr.bf16.mxu0 0
    %3408 = vmatpush1.bf16.msra.mxu0 0
    %3409 = vmatprep.subr.bf16.mxu0 0
    %3410 = vmatpush1.bf16.msra.mxu0 0
    %3411 = vmatprep.subr.bf16.mxu0 0
    %3412 = vmatpush1.bf16.msra.mxu0 0
    %3413 = vmatprep.subr.bf16.mxu0 0
    %3414 = vmatpush1.bf16.msra.mxu0 0
    %3415 = vmatprep.subr.bf16.mxu0 0
    %3416 = vmatpush1.bf16.msra.mxu0 0
    %3417 = vmatprep.subr.bf16.mxu0 0
    %3418 = vmatpush1.bf16.msra.mxu0 0
    %3419 = vmatprep.subr.bf16.mxu0 0
    %3420 = vmatpush1.bf16.msra.mxu0 0
    %3421 = vmatprep.subr.bf16.mxu0 0
    %3422 = vmatpush1.bf16.msra.mxu0 0
    %3423 = vmatprep.subr.bf16.mxu0 0
    %3424 = vmatpush1.bf16.msra.mxu0 0
    %3425 = vmatprep.subr.bf16.mxu0 0
    %3426 = vmatpush1.bf16.msra.mxu0 0
    %3427 = vmatprep.subr.bf16.mxu0 0
    %3428 = vmatpush1.bf16.msra.mxu0 0
    %3429 = vmatprep.mubr.bf16.mxu0 0
    %3430 = vmatmul.mubr.bf16.gmra.mrb[0].mxu0 %v3392
    %v3431 = vpop.f32.mrb[0].mxu0
    %v3432 = vadd.f32 %v3364, %v3431
    %v3433 = vpop.f32.mrb[0].mxu0
    %v3434 = vadd.f32 %v3364, %v3433
    %v3435 = vpop.f32.mrb[0].mxu0
    %v3436 = vadd.f32 %v3369, %v3435
    %v3437 = vpop.f32.mrb[0].mxu0
    %v3438 = vadd.f32 %v3369, %v3437
    %3439 = vmatprep.mubr.bf16.mxu0 0
    %3440 = vmatmul.mubr.bf16.gmra.mrb[0].mxu0 %v3395
    %v3441 = vpop.f32.mrb[0].mxu0
    %v3442 = vadd.f32 %v3374, %v3441
    %v3443 = vpop.f32.mrb[0].mxu0
    %v3444 = vadd.f32 %v3374, %v3443
    %v3445 = vpop.f32.mrb[0].mxu0
    %v3446 = vadd.f32 %v3379, %v3445
    %v3447 = vpop.f32.mrb[0].mxu0
    %v3448 = vadd.f32 %v3379, %v3447
    %3449 = vdwg.mxu0
    %3450 = vmatprep.subr.bf16.mxu0 %v3338
    %3451 = vmatpush1.bf16.msra.mxu0 %v3337
    %3452 = vmatprep.subr.bf16.mxu0 %v3346
    %3453 = vmatpush1.bf16.msra.mxu0 %v3345
    %3454 = vmatprep.subr.bf16.mxu0 0
    %3455 = vmatpush1.bf16.msra.mxu0 0
    %3456 = vmatprep.subr.bf16.mxu0 0
    %3457 = vmatpush1.bf16.msra.mxu0 0
    %3458 = vmatprep.subr.bf16.mxu0 0
    %3459 = vmatpush1.bf16.msra.mxu0 0
    %3460 = vmatprep.subr.bf16.mxu0 0
    %3461 = vmatpush1.bf16.msra.mxu0 0
    %3462 = vmatprep.subr.bf16.mxu0 0
    %3463 = vmatpush1.bf16.msra.mxu0 0
    %3464 = vmatprep.subr.bf16.mxu0 0
    %3465 = vmatpush1.bf16.msra.mxu0 0
    %3466 = vmatprep.subr.bf16.mxu0 0
    %3467 = vmatpush1.bf16.msra.mxu0 0
    %3468 = vmatprep.subr.bf16.mxu0 0
    %3469 = vmatpush1.bf16.msra.mxu0 0
    %3470 = vmatprep.subr.bf16.mxu0 0
    %3471 = vmatpush1.bf16.msra.mxu0 0
    %3472 = vmatprep.subr.bf16.mxu0 0
    %3473 = vmatpush1.bf16.msra.mxu0 0
    %3474 = vmatprep.subr.bf16.mxu0 0
    %3475 = vmatpush1.bf16.msra.mxu0 0
    %3476 = vmatprep.subr.bf16.mxu0 0
    %3477 = vmatpush1.bf16.msra.mxu0 0
    %3478 = vmatprep.subr.bf16.mxu0 0
    %3479 = vmatpush1.bf16.msra.mxu0 0
    %3480 = vmatprep.subr.bf16.mxu0 0
    %3481 = vmatpush1.bf16.msra.mxu0 0
    %3482 = vmatprep.mubr.bf16.mxu0 0
    %3483 = vmatmul.mubr.bf16.gmra.mrb[0].mxu0 %v3392
    %v3484 = vpop.f32.mrb[0].mxu0
    %v3485 = vadd.f32 %v3364, %v3484
    %v3486 = vpop.f32.mrb[0].mxu0
    %v3487 = vadd.f32 %v3364, %v3486
    %v3488 = vpop.f32.mrb[0].mxu0
    %v3489 = vadd.f32 %v3369, %v3488
    %v3490 = vpop.f32.mrb[0].mxu0
    %v3491 = vadd.f32 %v3369, %v3490
    %3492 = vmatprep.mubr.bf16.mxu0 0
    %3493 = vmatmul.mubr.bf16.gmra.mrb[0].mxu0 %v3395
    %v3494 = vpop.f32.mrb[0].mxu0
    %v3495 = vadd.f32 %v3374, %v3494
    %v3496 = vpop.f32.mrb[0].mxu0
    %v3497 = vadd.f32 %v3374, %v3496
    %v3498 = vpop.f32.mrb[0].mxu0
    %v3499 = vadd.f32 %v3379, %v3498
    %v3500 = vpop.f32.mrb[0].mxu0
    %v3501 = vadd.f32 %v3379, %v3500
    %3502 = vdwg.mxu0
    %3503 = vmatprep.subr.bf16.mxu0 %v3340
    %3504 = vmatpush1.bf16.msra.mxu0 %v3339
    %3505 = vmatprep.subr.bf16.mxu0 %v3348
    %3506 = vmatpush1.bf16.msra.mxu0 %v3347
    %3507 = vmatprep.subr.bf16.mxu0 0
    %3508 = vmatpush1.bf16.msra.mxu0 0
    %3509 = vmatprep.subr.bf16.mxu0 0
    %3510 = vmatpush1.bf16.msra.mxu0 0
    %3511 = vmatprep.subr.bf16.mxu0 0
    %3512 = vmatpush1.bf16.msra.mxu0 0
    %3513 = vmatprep.subr.bf16.mxu0 0
    %3514 = vmatpush1.bf16.msra.mxu0 0
    %3515 = vmatprep.subr.bf16.mxu0 0
    %3516 = vmatpush1.bf16.msra.mxu0 0
    %3517 = vmatprep.subr.bf16.mxu0 0
    %3518 = vmatpush1.bf16.msra.mxu0 0
    %3519 = vmatprep.subr.bf16.mxu0 0
    %3520 = vmatpush1.bf16.msra.mxu0 0
    %3521 = vmatprep.subr.bf16.mxu0 0
    %3522 = vmatpush1.bf16.msra.mxu0 0
    %3523 = vmatprep.subr.bf16.mxu0 0
    %3524 = vmatpush1.bf16.msra.mxu0 0
    %3525 = vmatprep.subr.bf16.mxu0 0
    %3526 = vmatpush1.bf16.msra.mxu0 0
    %3527 = vmatprep.subr.bf16.mxu0 0
    %3528 = vmatpush1.bf16.msra.mxu0 0
    %3529 = vmatprep.subr.bf16.mxu0 0
    %3530 = vmatpush1.bf16.msra.mxu0 0
    %3531 = vmatprep.subr.bf16.mxu0 0
    %3532 = vmatpush1.bf16.msra.mxu0 0
    %3533 = vmatprep.subr.bf16.mxu0 0
    %3534 = vmatpush1.bf16.msra.mxu0 0
    %3535 = vmatprep.mubr.bf16.mxu0 0
    %3536 = vmatmul.mubr.bf16.gmra.mrb[0].mxu0 %v3392
    %v3537 = vpop.f32.mrb[0].mxu0
    %v3538 = vadd.f32 %v3364, %v3537
    %v3539 = vpop.f32.mrb[0].mxu0
    %v3540 = vadd.f32 %v3364, %v3539
    %v3541 = vpop.f32.mrb[0].mxu0
    %v3542 = vadd.f32 %v3369, %v3541
    %v3543 = vpop.f32.mrb[0].mxu0
    %v3544 = vadd.f32 %v3369, %v3543
    %3545 = vmatprep.mubr.bf16.mxu0 0
    %3546 = vmatmul.mubr.bf16.gmra.mrb[0].mxu0 %v3395
    %v3547 = vpop.f32.mrb[0].mxu0
    %v3548 = vadd.f32 %v3374, %v3547
    %v3549 = vpop.f32.mrb[0].mxu0
    %v3550 = vadd.f32 %v3374, %v3549
    %v3551 = vpop.f32.mrb[0].mxu0
    %v3552 = vadd.f32 %v3379, %v3551
    %v3553 = vpop.f32.mrb[0].mxu0
    %v3554 = vadd.f32 %v3379, %v3553
    %3555 = vdwg.mxu0
    %3556 = vmatprep.subr.bf16.mxu0 %v3342
    %3557 = vmatpush1.bf16.msra.mxu0 %v3341
    %3558 = vmatprep.subr.bf16.mxu0 %v3350
    %3559 = vmatpush1.bf16.msra.mxu0 %v3349
    %3560 = vmatprep.subr.bf16.mxu0 0
    %3561 = vmatpush1.bf16.msra.mxu0 0
    %3562 = vmatprep.subr.bf16.mxu0 0
    %3563 = vmatpush1.bf16.msra.mxu0 0
    %3564 = vmatprep.subr.bf16.mxu0 0
    %3565 = vmatpush1.bf16.msra.mxu0 0
    %3566 = vmatprep.subr.bf16.mxu0 0
    %3567 = vmatpush1.bf16.msra.mxu0 0
    %3568 = vmatprep.subr.bf16.mxu0 0
    %3569 = vmatpush1.bf16.msra.mxu0 0
    %3570 = vmatprep.subr.bf16.mxu0 0
    %3571 = vmatpush1.bf16.msra.mxu0 0
    %3572 = vmatprep.subr.bf16.mxu0 0
    %3573 = vmatpush1.bf16.msra.mxu0 0
    %3574 = vmatprep.subr.bf16.mxu0 0
    %3575 = vmatpush1.bf16.msra.mxu0 0
    %3576 = vmatprep.subr.bf16.mxu0 0
    %3577 = vmatpush1.bf16.msra.mxu0 0
    %3578 = vmatprep.subr.bf16.mxu0 0
    %3579 = vmatpush1.bf16.msra.mxu0 0
    %3580 = vmatprep.subr.bf16.mxu0 0
    %3581 = vmatpush1.bf16.msra.mxu0 0
    %3582 = vmatprep.subr.bf16.mxu0 0
    %3583 = vmatpush1.bf16.msra.mxu0 0
    %3584 = vmatprep.subr.bf16.mxu0 0
    %3585 = vmatpush1.bf16.msra.mxu0 0
    %3586 = vmatprep.subr.bf16.mxu0 0
    %3587 = vmatpush1.bf16.msra.mxu0 0
    %3588 = vmatprep.mubr.bf16.mxu0 0
    %3589 = vmatmul.mubr.bf16.gmra.mrb[0].mxu0 %v3392
    %v3590 = vpop.f32.mrb[0].mxu0
    %v3591 = vadd.f32 %v3364, %v3590
    %v3592 = vpop.f32.mrb[0].mxu0
    %v3593 = vadd.f32 %v3364, %v3592
    %v3594 = vpop.f32.mrb[0].mxu0
    %v3595 = vadd.f32 %v3369, %v3594
    %v3596 = vpop.f32.mrb[0].mxu0
    %v3597 = vadd.f32 %v3369, %v3596
    %3598 = vmatprep.mubr.bf16.mxu0 0
    %3599 = vmatmul.mubr.bf16.gmra.mrb[0].mxu0 %v3395
    %v3600 = vpop.f32.mrb[0].mxu0
    %v3601 = vadd.f32 %v3374, %v3600
    %v3602 = vpop.f32.mrb[0].mxu0
    %v3603 = vadd.f32 %v3374, %v3602
    %v3604 = vpop.f32.mrb[0].mxu0
    %v3605 = vadd.f32 %v3379, %v3604
    %v3606 = vpop.f32.mrb[0].mxu0
    %v3607 = vadd.f32 %v3379, %v3606
    %3608 = vdwg.mxu0
    %v3609 = vpack.c.bf16 %v3436, %v3432
    %v3610 = vpack.c.bf16 %v3438, %v3434
    %v3611 = vpack.c.bf16 %v3489, %v3485
    %v3612 = vpack.c.bf16 %v3491, %v3487
    %v3613 = vpack.c.bf16 %v3542, %v3538
    %v3614 = vpack.c.bf16 %v3544, %v3540
    %v3615 = vpack.c.bf16 %v3595, %v3591
    %v3616 = vpack.c.bf16 %v3597, %v3593
    %v3617 = vpack.c.bf16 %v3446, %v3442
    %v3618 = vpack.c.bf16 %v3448, %v3444
    %v3619 = vpack.c.bf16 %v3499, %v3495
    %v3620 = vpack.c.bf16 %v3501, %v3497
    %v3621 = vpack.c.bf16 %v3552, %v3548
    %v3622 = vpack.c.bf16 %v3554, %v3550
    %v3623 = vpack.c.bf16 %v3605, %v3601
    %v3624 = vpack.c.bf16 %v3607, %v3603
    %v3625 = vmul.bf16 %v3609, 1056980736
    %v3626 = vmul.bf16 %v3610, 1056980736
    %v3627 = vmul.bf16 %v3611, 1056980736
    %v3628 = vmul.bf16 %v3612, 1056980736
    %v3629 = vmul.bf16 %v3613, 1056980736
    %v3630 = vmul.bf16 %v3614, 1056980736
    %v3631 = vmul.bf16 %v3615, 1056980736
    %v3632 = vmul.bf16 %v3616, 1056980736
    %v3633 = vmul.bf16 %v3617, 1056980736
    %v3634 = vmul.bf16 %v3618, 1056980736
    %v3635 = vmul.bf16 %v3619, 1056980736
    %v3636 = vmul.bf16 %v3620, 1056980736
    %v3637 = vmul.bf16 %v3621, 1056980736
    %v3638 = vmul.bf16 %v3622, 1056980736
    %v3639 = vmul.bf16 %v3623, 1056980736
    %v3640 = vmul.bf16 %v3624, 1056980736
    %v3641 = vmul.bf16 %v3609, 1027030327
    %v3642 = vmul.bf16 %v3610, 1027030327
    %v3643 = vmul.bf16 %v3611, 1027030327
    %v3644 = vmul.bf16 %v3612, 1027030327
    %v3645 = vmul.bf16 %v3613, 1027030327
    %v3646 = vmul.bf16 %v3614, 1027030327
    %v3647 = vmul.bf16 %v3615, 1027030327
    %v3648 = vmul.bf16 %v3616, 1027030327
    %v3649 = vmul.bf16 %v3617, 1027030327
    %v3650 = vmul.bf16 %v3618, 1027030327
    %v3651 = vmul.bf16 %v3619, 1027030327
    %v3652 = vmul.bf16 %v3620, 1027030327
    %v3653 = vmul.bf16 %v3621, 1027030327
    %v3654 = vmul.bf16 %v3622, 1027030327
    %v3655 = vmul.bf16 %v3623, 1027030327
    %v3656 = vmul.bf16 %v3624, 1027030327
    %v3657 = vmul.bf16 %v3641, %v3609
    %v3658 = vmul.bf16 %v3642, %v3610
    %v3659 = vmul.bf16 %v3643, %v3611
    %v3660 = vmul.bf16 %v3644, %v3612
    %v3661 = vmul.bf16 %v3645, %v3613
    %v3662 = vmul.bf16 %v3646, %v3614
    %v3663 = vmul.bf16 %v3647, %v3615
    %v3664 = vmul.bf16 %v3648, %v3616
    %v3665 = vmul.bf16 %v3649, %v3617
    %v3666 = vmul.bf16 %v3650, %v3618
    %v3667 = vmul.bf16 %v3651, %v3619
    %v3668 = vmul.bf16 %v3652, %v3620
    %v3669 = vmul.bf16 %v3653, %v3621
    %v3670 = vmul.bf16 %v3654, %v3622
    %v3671 = vmul.bf16 %v3655, %v3623
    %v3672 = vmul.bf16 %v3656, %v3624
    %v3673 = vmul.bf16 %v3657, %v3609
    %v3674 = vmul.bf16 %v3658, %v3610
    %v3675 = vmul.bf16 %v3659, %v3611
    %v3676 = vmul.bf16 %v3660, %v3612
    %v3677 = vmul.bf16 %v3661, %v3613
    %v3678 = vmul.bf16 %v3662, %v3614
    %v3679 = vmul.bf16 %v3663, %v3615
    %v3680 = vmul.bf16 %v3664, %v3616
    %v3681 = vmul.bf16 %v3665, %v3617
    %v3682 = vmul.bf16 %v3666, %v3618
    %v3683 = vmul.bf16 %v3667, %v3619
    %v3684 = vmul.bf16 %v3668, %v3620
    %v3685 = vmul.bf16 %v3669, %v3621
    %v3686 = vmul.bf16 %v3670, %v3622
    %v3687 = vmul.bf16 %v3671, %v3623
    %v3688 = vmul.bf16 %v3672, %v3624
    %v3689 = vadd.bf16 %v3609, %v3673
    %v3690 = vadd.bf16 %v3610, %v3674
    %v3691 = vadd.bf16 %v3611, %v3675
    %v3692 = vadd.bf16 %v3612, %v3676
    %v3693 = vadd.bf16 %v3613, %v3677
    %v3694 = vadd.bf16 %v3614, %v3678
    %v3695 = vadd.bf16 %v3615, %v3679
    %v3696 = vadd.bf16 %v3616, %v3680
    %v3697 = vadd.bf16 %v3617, %v3681
    %v3698 = vadd.bf16 %v3618, %v3682
    %v3699 = vadd.bf16 %v3619, %v3683
    %v3700 = vadd.bf16 %v3620, %v3684
    %v3701 = vadd.bf16 %v3621, %v3685
    %v3702 = vadd.bf16 %v3622, %v3686
    %v3703 = vadd.bf16 %v3623, %v3687
    %v3704 = vadd.bf16 %v3624, %v3688
    %v3705 = vmul.bf16 %v3689, 1061961548
    %v3706 = vmul.bf16 %v3690, 1061961548
    %v3707 = vmul.bf16 %v3691, 1061961548
    %v3708 = vmul.bf16 %v3692, 1061961548
    %v3709 = vmul.bf16 %v3693, 1061961548
    %v3710 = vmul.bf16 %v3694, 1061961548
    %v3711 = vmul.bf16 %v3695, 1061961548
    %v3712 = vmul.bf16 %v3696, 1061961548
    %v3713 = vmul.bf16 %v3697, 1061961548
    %v3714 = vmul.bf16 %v3698, 1061961548
    %v3715 = vmul.bf16 %v3699, 1061961548
    %v3716 = vmul.bf16 %v3700, 1061961548
    %v3717 = vmul.bf16 %v3701, 1061961548
    %v3718 = vmul.bf16 %v3702, 1061961548
    %v3719 = vmul.bf16 %v3703, 1061961548
    %v3720 = vmul.bf16 %v3704, 1061961548
    %v3721 = vtanh.bf16.pop %v3705
    %v3722 = vtanh.bf16.pop %v3706
    %v3723 = vtanh.bf16.pop %v3707
    %v3724 = vtanh.bf16.pop %v3708
    %v3725 = vtanh.bf16.pop %v3709
    %v3726 = vtanh.bf16.pop %v3710
    %v3727 = vtanh.bf16.pop %v3711
    %v3728 = vtanh.bf16.pop %v3712
    %v3729 = vtanh.bf16.pop %v3713
    %v3730 = vtanh.bf16.pop %v3714
    %v3731 = vtanh.bf16.pop %v3715
    %v3732 = vtanh.bf16.pop %v3716
    %v3733 = vtanh.bf16.pop %v3717
    %v3734 = vtanh.bf16.pop %v3718
    %v3735 = vtanh.bf16.pop %v3719
    %v3736 = vtanh.bf16.pop %v3720
    %v3737 = vadd.bf16 %v3721, 1065369472
    %v3738 = vadd.bf16 %v3722, 1065369472
    %v3739 = vadd.bf16 %v3723, 1065369472
    %v3740 = vadd.bf16 %v3724, 1065369472
    %v3741 = vadd.bf16 %v3725, 1065369472
    %v3742 = vadd.bf16 %v3726, 1065369472
    %v3743 = vadd.bf16 %v3727, 1065369472
    %v3744 = vadd.bf16 %v3728, 1065369472
    %v3745 = vadd.bf16 %v3729, 1065369472
    %v3746 = vadd.bf16 %v3730, 1065369472
    %v3747 = vadd.bf16 %v3731, 1065369472
    %v3748 = vadd.bf16 %v3732, 1065369472
    %v3749 = vadd.bf16 %v3733, 1065369472
    %v3750 = vadd.bf16 %v3734, 1065369472
    %v3751 = vadd.bf16 %v3735, 1065369472
    %v3752 = vadd.bf16 %v3736, 1065369472
    %v3753 = vmul.bf16 %v3625, %v3737
    %v3754 = vmul.bf16 %v3626, %v3738
    %v3755 = vmul.bf16 %v3627, %v3739
    %v3756 = vmul.bf16 %v3628, %v3740
    %v3757 = vmul.bf16 %v3629, %v3741
    %v3758 = vmul.bf16 %v3630, %v3742
    %v3759 = vmul.bf16 %v3631, %v3743
    %v3760 = vmul.bf16 %v3632, %v3744
    %v3761 = vmul.bf16 %v3633, %v3745
    %v3762 = vmul.bf16 %v3634, %v3746
    %v3763 = vmul.bf16 %v3635, %v3747
    %v3764 = vmul.bf16 %v3636, %v3748
    %v3765 = vmul.bf16 %v3637, %v3749
    %v3766 = vmul.bf16 %v3638, %v3750
    %v3767 = vmul.bf16 %v3639, %v3751
    %v3768 = vmul.bf16 %v3640, %v3752
    %s3769 = scalar_lea.vmem %s3, 80
    %v3770 = vld [vmem:[%s3769] sm:$0xf]
    %v3771 = vld [vmem:[%s3769 + $0x4] sm:$0xf]
    %v3772 = vld [vmem:[%s3769 + $0x8] sm:$0xf]
    %v3773 = vld [vmem:[%s3769 + $0xc] sm:$0xf]
    %s3774 = scalar_lea.vmem %s4, 160
    %v3775 = vld [vmem:[%s3774] sm:$0xff]
    %v3776 = vld [vmem:[%s3774 + $0x8] sm:$0xff]
    %v3777 = vld [vmem:[%s3774 + $0x10] sm:$0xff]
    %v3778 = vld [vmem:[%s3774 + $0x18] sm:$0xff]
    %3780 = vset.pattern.permute.xlu0 0
    %3781 = vperm.xlu0 %3780, %v3775
    %v3782 = vpop.permute.xlu0 %3781
    %3785 = vset.pattern.permute.xlu0 0
    %3786 = vperm.xlu0 %3785, %v3776
    %v3787 = vpop.permute.xlu0 %3786
    %3790 = vset.pattern.permute.xlu0 0
    %3791 = vperm.xlu0 %3790, %v3777
    %v3792 = vpop.permute.xlu0 %3791
    %3795 = vset.pattern.permute.xlu0 0
    %3796 = vperm.xlu0 %3795, %v3778
    %v3797 = vpop.permute.xlu0 %3796
    %v3803 = vunpack.c.l.b16 %v3770
    %v3804 = vunpack.c.l.b16 %v3771
    %v3805 = vunpack.c.l.b16 %v3772
    %v3806 = vunpack.c.l.b16 %v3773
    %v3807 = vpack.c.b16 %v3804, %v3803
    %v3808 = vpack.c.b16 %v3806, %v3805
    %v3810 = vsel %vm1686, %v3807, 0
    %v3813 = vsel %vm1686, %v3808, 0
    %3815 = vmatprep.subr.bf16.mxu0 %v3754
    %3816 = vmatpush1.bf16.msra.mxu0 %v3753
    %3817 = vmatprep.subr.bf16.mxu0 %v3762
    %3818 = vmatpush1.bf16.msra.mxu0 %v3761
    %3819 = vmatprep.subr.bf16.mxu0 0
    %3820 = vmatpush1.bf16.msra.mxu0 0
    %3821 = vmatprep.subr.bf16.mxu0 0
    %3822 = vmatpush1.bf16.msra.mxu0 0
    %3823 = vmatprep.subr.bf16.mxu0 0
    %3824 = vmatpush1.bf16.msra.mxu0 0
    %3825 = vmatprep.subr.bf16.mxu0 0
    %3826 = vmatpush1.bf16.msra.mxu0 0
    %3827 = vmatprep.subr.bf16.mxu0 0
    %3828 = vmatpush1.bf16.msra.mxu0 0
    %3829 = vmatprep.subr.bf16.mxu0 0
    %3830 = vmatpush1.bf16.msra.mxu0 0
    %3831 = vmatprep.subr.bf16.mxu0 0
    %3832 = vmatpush1.bf16.msra.mxu0 0
    %3833 = vmatprep.subr.bf16.mxu0 0
    %3834 = vmatpush1.bf16.msra.mxu0 0
    %3835 = vmatprep.subr.bf16.mxu0 0
    %3836 = vmatpush1.bf16.msra.mxu0 0
    %3837 = vmatprep.subr.bf16.mxu0 0
    %3838 = vmatpush1.bf16.msra.mxu0 0
    %3839 = vmatprep.subr.bf16.mxu0 0
    %3840 = vmatpush1.bf16.msra.mxu0 0
    %3841 = vmatprep.subr.bf16.mxu0 0
    %3842 = vmatpush1.bf16.msra.mxu0 0
    %3843 = vmatprep.subr.bf16.mxu0 0
    %3844 = vmatpush1.bf16.msra.mxu0 0
    %3845 = vmatprep.subr.bf16.mxu0 0
    %3846 = vmatpush1.bf16.msra.mxu0 0
    %3847 = vmatprep.mubr.bf16.mxu0 0
    %3848 = vmatmul.mubr.bf16.gmra.mrb[0].mxu0 %v3810
    %v3849 = vpop.f32.mrb[0].mxu0
    %v3850 = vadd.f32 %v3782, %v3849
    %v3851 = vpop.f32.mrb[0].mxu0
    %v3852 = vadd.f32 %v3782, %v3851
    %v3853 = vpop.f32.mrb[0].mxu0
    %v3854 = vadd.f32 %v3787, %v3853
    %v3855 = vpop.f32.mrb[0].mxu0
    %v3856 = vadd.f32 %v3787, %v3855
    %3857 = vmatprep.mubr.bf16.mxu0 0
    %3858 = vmatmul.mubr.bf16.gmra.mrb[0].mxu0 %v3813
    %v3859 = vpop.f32.mrb[0].mxu0
    %v3860 = vadd.f32 %v3792, %v3859
    %v3861 = vpop.f32.mrb[0].mxu0
    %v3862 = vadd.f32 %v3792, %v3861
    %v3863 = vpop.f32.mrb[0].mxu0
    %v3864 = vadd.f32 %v3797, %v3863
    %v3865 = vpop.f32.mrb[0].mxu0
    %v3866 = vadd.f32 %v3797, %v3865
    %3867 = vdwg.mxu0
    %3868 = vmatprep.subr.bf16.mxu0 %v3756
    %3869 = vmatpush1.bf16.msra.mxu0 %v3755
    %3870 = vmatprep.subr.bf16.mxu0 %v3764
    %3871 = vmatpush1.bf16.msra.mxu0 %v3763
    %3872 = vmatprep.subr.bf16.mxu0 0
    %3873 = vmatpush1.bf16.msra.mxu0 0
    %3874 = vmatprep.subr.bf16.mxu0 0
    %3875 = vmatpush1.bf16.msra.mxu0 0
    %3876 = vmatprep.subr.bf16.mxu0 0
    %3877 = vmatpush1.bf16.msra.mxu0 0
    %3878 = vmatprep.subr.bf16.mxu0 0
    %3879 = vmatpush1.bf16.msra.mxu0 0
    %3880 = vmatprep.subr.bf16.mxu0 0
    %3881 = vmatpush1.bf16.msra.mxu0 0
    %3882 = vmatprep.subr.bf16.mxu0 0
    %3883 = vmatpush1.bf16.msra.mxu0 0
    %3884 = vmatprep.subr.bf16.mxu0 0
    %3885 = vmatpush1.bf16.msra.mxu0 0
    %3886 = vmatprep.subr.bf16.mxu0 0
    %3887 = vmatpush1.bf16.msra.mxu0 0
    %3888 = vmatprep.subr.bf16.mxu0 0
    %3889 = vmatpush1.bf16.msra.mxu0 0
    %3890 = vmatprep.subr.bf16.mxu0 0
    %3891 = vmatpush1.bf16.msra.mxu0 0
    %3892 = vmatprep.subr.bf16.mxu0 0
    %3893 = vmatpush1.bf16.msra.mxu0 0
    %3894 = vmatprep.subr.bf16.mxu0 0
    %3895 = vmatpush1.bf16.msra.mxu0 0
    %3896 = vmatprep.subr.bf16.mxu0 0
    %3897 = vmatpush1.bf16.msra.mxu0 0
    %3898 = vmatprep.subr.bf16.mxu0 0
    %3899 = vmatpush1.bf16.msra.mxu0 0
    %3900 = vmatprep.mubr.bf16.mxu0 0
    %3901 = vmatmul.mubr.bf16.gmra.mrb[0].mxu0 %v3810
    %v3902 = vpop.f32.mrb[0].mxu0
    %v3903 = vadd.f32 %v3782, %v3902
    %v3904 = vpop.f32.mrb[0].mxu0
    %v3905 = vadd.f32 %v3782, %v3904
    %v3906 = vpop.f32.mrb[0].mxu0
    %v3907 = vadd.f32 %v3787, %v3906
    %v3908 = vpop.f32.mrb[0].mxu0
    %v3909 = vadd.f32 %v3787, %v3908
    %3910 = vmatprep.mubr.bf16.mxu0 0
    %3911 = vmatmul.mubr.bf16.gmra.mrb[0].mxu0 %v3813
    %v3912 = vpop.f32.mrb[0].mxu0
    %v3913 = vadd.f32 %v3792, %v3912
    %v3914 = vpop.f32.mrb[0].mxu0
    %v3915 = vadd.f32 %v3792, %v3914
    %v3916 = vpop.f32.mrb[0].mxu0
    %v3917 = vadd.f32 %v3797, %v3916
    %v3918 = vpop.f32.mrb[0].mxu0
    %v3919 = vadd.f32 %v3797, %v3918
    %3920 = vdwg.mxu0
    %3921 = vmatprep.subr.bf16.mxu0 %v3758
    %3922 = vmatpush1.bf16.msra.mxu0 %v3757
    %3923 = vmatprep.subr.bf16.mxu0 %v3766
    %3924 = vmatpush1.bf16.msra.mxu0 %v3765
    %3925 = vmatprep.subr.bf16.mxu0 0
    %3926 = vmatpush1.bf16.msra.mxu0 0
    %3927 = vmatprep.subr.bf16.mxu0 0
    %3928 = vmatpush1.bf16.msra.mxu0 0
    %3929 = vmatprep.subr.bf16.mxu0 0
    %3930 = vmatpush1.bf16.msra.mxu0 0
    %3931 = vmatprep.subr.bf16.mxu0 0
    %3932 = vmatpush1.bf16.msra.mxu0 0
    %3933 = vmatprep.subr.bf16.mxu0 0
    %3934 = vmatpush1.bf16.msra.mxu0 0
    %3935 = vmatprep.subr.bf16.mxu0 0
    %3936 = vmatpush1.bf16.msra.mxu0 0
    %3937 = vmatprep.subr.bf16.mxu0 0
    %3938 = vmatpush1.bf16.msra.mxu0 0
    %3939 = vmatprep.subr.bf16.mxu0 0
    %3940 = vmatpush1.bf16.msra.mxu0 0
    %3941 = vmatprep.subr.bf16.mxu0 0
    %3942 = vmatpush1.bf16.msra.mxu0 0
    %3943 = vmatprep.subr.bf16.mxu0 0
    %3944 = vmatpush1.bf16.msra.mxu0 0
    %3945 = vmatprep.subr.bf16.mxu0 0
    %3946 = vmatpush1.bf16.msra.mxu0 0
    %3947 = vmatprep.subr.bf16.mxu0 0
    %3948 = vmatpush1.bf16.msra.mxu0 0
    %3949 = vmatprep.subr.bf16.mxu0 0
    %3950 = vmatpush1.bf16.msra.mxu0 0
    %3951 = vmatprep.subr.bf16.mxu0 0
    %3952 = vmatpush1.bf16.msra.mxu0 0
    %3953 = vmatprep.mubr.bf16.mxu0 0
    %3954 = vmatmul.mubr.bf16.gmra.mrb[0].mxu0 %v3810
    %v3955 = vpop.f32.mrb[0].mxu0
    %v3956 = vadd.f32 %v3782, %v3955
    %v3957 = vpop.f32.mrb[0].mxu0
    %v3958 = vadd.f32 %v3782, %v3957
    %v3959 = vpop.f32.mrb[0].mxu0
    %v3960 = vadd.f32 %v3787, %v3959
    %v3961 = vpop.f32.mrb[0].mxu0
    %v3962 = vadd.f32 %v3787, %v3961
    %3963 = vmatprep.mubr.bf16.mxu0 0
    %3964 = vmatmul.mubr.bf16.gmra.mrb[0].mxu0 %v3813
    %v3965 = vpop.f32.mrb[0].mxu0
    %v3966 = vadd.f32 %v3792, %v3965
    %v3967 = vpop.f32.mrb[0].mxu0
    %v3968 = vadd.f32 %v3792, %v3967
    %v3969 = vpop.f32.mrb[0].mxu0
    %v3970 = vadd.f32 %v3797, %v3969
    %v3971 = vpop.f32.mrb[0].mxu0
    %v3972 = vadd.f32 %v3797, %v3971
    %3973 = vdwg.mxu0
    %3974 = vmatprep.subr.bf16.mxu0 %v3760
    %3975 = vmatpush1.bf16.msra.mxu0 %v3759
    %3976 = vmatprep.subr.bf16.mxu0 %v3768
    %3977 = vmatpush1.bf16.msra.mxu0 %v3767
    %3978 = vmatprep.subr.bf16.mxu0 0
    %3979 = vmatpush1.bf16.msra.mxu0 0
    %3980 = vmatprep.subr.bf16.mxu0 0
    %3981 = vmatpush1.bf16.msra.mxu0 0
    %3982 = vmatprep.subr.bf16.mxu0 0
    %3983 = vmatpush1.bf16.msra.mxu0 0
    %3984 = vmatprep.subr.bf16.mxu0 0
    %3985 = vmatpush1.bf16.msra.mxu0 0
    %3986 = vmatprep.subr.bf16.mxu0 0
    %3987 = vmatpush1.bf16.msra.mxu0 0
    %3988 = vmatprep.subr.bf16.mxu0 0
    %3989 = vmatpush1.bf16.msra.mxu0 0
    %3990 = vmatprep.subr.bf16.mxu0 0
    %3991 = vmatpush1.bf16.msra.mxu0 0
    %3992 = vmatprep.subr.bf16.mxu0 0
    %3993 = vmatpush1.bf16.msra.mxu0 0
    %3994 = vmatprep.subr.bf16.mxu0 0
    %3995 = vmatpush1.bf16.msra.mxu0 0
    %3996 = vmatprep.subr.bf16.mxu0 0
    %3997 = vmatpush1.bf16.msra.mxu0 0
    %3998 = vmatprep.subr.bf16.mxu0 0
    %3999 = vmatpush1.bf16.msra.mxu0 0
    %4000 = vmatprep.subr.bf16.mxu0 0
    %4001 = vmatpush1.bf16.msra.mxu0 0
    %4002 = vmatprep.subr.bf16.mxu0 0
    %4003 = vmatpush1.bf16.msra.mxu0 0
    %4004 = vmatprep.subr.bf16.mxu0 0
    %4005 = vmatpush1.bf16.msra.mxu0 0
    %4006 = vmatprep.mubr.bf16.mxu0 0
    %4007 = vmatmul.mubr.bf16.gmra.mrb[0].mxu0 %v3810
    %v4008 = vpop.f32.mrb[0].mxu0
    %v4009 = vadd.f32 %v3782, %v4008
    %v4010 = vpop.f32.mrb[0].mxu0
    %v4011 = vadd.f32 %v3782, %v4010
    %v4012 = vpop.f32.mrb[0].mxu0
    %v4013 = vadd.f32 %v3787, %v4012
    %v4014 = vpop.f32.mrb[0].mxu0
    %v4015 = vadd.f32 %v3787, %v4014
    %4016 = vmatprep.mubr.bf16.mxu0 0
    %4017 = vmatmul.mubr.bf16.gmra.mrb[0].mxu0 %v3813
    %v4018 = vpop.f32.mrb[0].mxu0
    %v4019 = vadd.f32 %v3792, %v4018
    %v4020 = vpop.f32.mrb[0].mxu0
    %v4021 = vadd.f32 %v3792, %v4020
    %v4022 = vpop.f32.mrb[0].mxu0
    %v4023 = vadd.f32 %v3797, %v4022
    %v4024 = vpop.f32.mrb[0].mxu0
    %v4025 = vadd.f32 %v3797, %v4024
    %4026 = vdwg.mxu0
    %v4027 = vpack.c.bf16 %v3854, %v3850
    %v4028 = vpack.c.bf16 %v3856, %v3852
    %v4029 = vpack.c.bf16 %v3907, %v3903
    %v4030 = vpack.c.bf16 %v3909, %v3905
    %v4031 = vpack.c.bf16 %v3960, %v3956
    %v4032 = vpack.c.bf16 %v3962, %v3958
    %v4033 = vpack.c.bf16 %v4013, %v4009
    %v4034 = vpack.c.bf16 %v4015, %v4011
    %v4035 = vpack.c.bf16 %v3864, %v3860
    %v4036 = vpack.c.bf16 %v3866, %v3862
    %v4037 = vpack.c.bf16 %v3917, %v3913
    %v4038 = vpack.c.bf16 %v3919, %v3915
    %v4039 = vpack.c.bf16 %v3970, %v3966
    %v4040 = vpack.c.bf16 %v3972, %v3968
    %v4041 = vpack.c.bf16 %v4023, %v4019
    %v4042 = vpack.c.bf16 %v4025, %v4021
    %v4043 = vadd.bf16 %v3335, %v4027
    %v4044 = vadd.bf16 %v3336, %v4028
    %v4045 = vadd.bf16 %v3337, %v4029
    %v4046 = vadd.bf16 %v3338, %v4030
    %v4047 = vadd.bf16 %v3339, %v4031
    %v4048 = vadd.bf16 %v3340, %v4032
    %v4049 = vadd.bf16 %v3341, %v4033
    %v4050 = vadd.bf16 %v3342, %v4034
    %v4051 = vadd.bf16 %v3343, %v4035
    %v4052 = vadd.bf16 %v3344, %v4036
    %v4053 = vadd.bf16 %v3345, %v4037
    %v4054 = vadd.bf16 %v3346, %v4038
    %v4055 = vadd.bf16 %v3347, %v4039
    %v4056 = vadd.bf16 %v3348, %v4040
    %v4057 = vadd.bf16 %v3349, %v4041
    %v4058 = vadd.bf16 %v3350, %v4042
    %v4059 = vmul.bf16 %v4043, 1056980736
    %v4060 = vmul.bf16 %v4044, 1056980736
    %v4061 = vmul.bf16 %v4045, 1056980736
    %v4062 = vmul.bf16 %v4046, 1056980736
    %v4063 = vmul.bf16 %v4047, 1056980736
    %v4064 = vmul.bf16 %v4048, 1056980736
    %v4065 = vmul.bf16 %v4049, 1056980736
    %v4066 = vmul.bf16 %v4050, 1056980736
    %v4067 = vmul.bf16 %v4051, 1056980736
    %v4068 = vmul.bf16 %v4052, 1056980736
    %v4069 = vmul.bf16 %v4053, 1056980736
    %v4070 = vmul.bf16 %v4054, 1056980736
    %v4071 = vmul.bf16 %v4055, 1056980736
    %v4072 = vmul.bf16 %v4056, 1056980736
    %v4073 = vmul.bf16 %v4057, 1056980736
    %v4074 = vmul.bf16 %v4058, 1056980736
    %v4075 = vmul.bf16 %v4043, 1027030327
    %v4076 = vmul.bf16 %v4044, 1027030327
    %v4077 = vmul.bf16 %v4045, 1027030327
    %v4078 = vmul.bf16 %v4046, 1027030327
    %v4079 = vmul.bf16 %v4047, 1027030327
    %v4080 = vmul.bf16 %v4048, 1027030327
    %v4081 = vmul.bf16 %v4049, 1027030327
    %v4082 = vmul.bf16 %v4050, 1027030327
    %v4083 = vmul.bf16 %v4051, 1027030327
    %v4084 = vmul.bf16 %v4052, 1027030327
    %v4085 = vmul.bf16 %v4053, 1027030327
    %v4086 = vmul.bf16 %v4054, 1027030327
    %v4087 = vmul.bf16 %v4055, 1027030327
    %v4088 = vmul.bf16 %v4056, 1027030327
    %v4089 = vmul.bf16 %v4057, 1027030327
    %v4090 = vmul.bf16 %v4058, 1027030327
    %v4091 = vmul.bf16 %v4075, %v4043
    %v4092 = vmul.bf16 %v4076, %v4044
    %v4093 = vmul.bf16 %v4077, %v4045
    %v4094 = vmul.bf16 %v4078, %v4046
    %v4095 = vmul.bf16 %v4079, %v4047
    %v4096 = vmul.bf16 %v4080, %v4048
    %v4097 = vmul.bf16 %v4081, %v4049
    %v4098 = vmul.bf16 %v4082, %v4050
    %v4099 = vmul.bf16 %v4083, %v4051
    %v4100 = vmul.bf16 %v4084, %v4052
    %v4101 = vmul.bf16 %v4085, %v4053
    %v4102 = vmul.bf16 %v4086, %v4054
    %v4103 = vmul.bf16 %v4087, %v4055
    %v4104 = vmul.bf16 %v4088, %v4056
    %v4105 = vmul.bf16 %v4089, %v4057
    %v4106 = vmul.bf16 %v4090, %v4058
    %v4107 = vmul.bf16 %v4091, %v4043
    %v4108 = vmul.bf16 %v4092, %v4044
    %v4109 = vmul.bf16 %v4093, %v4045
    %v4110 = vmul.bf16 %v4094, %v4046
    %v4111 = vmul.bf16 %v4095, %v4047
    %v4112 = vmul.bf16 %v4096, %v4048
    %v4113 = vmul.bf16 %v4097, %v4049
    %v4114 = vmul.bf16 %v4098, %v4050
    %v4115 = vmul.bf16 %v4099, %v4051
    %v4116 = vmul.bf16 %v4100, %v4052
    %v4117 = vmul.bf16 %v4101, %v4053
    %v4118 = vmul.bf16 %v4102, %v4054
    %v4119 = vmul.bf16 %v4103, %v4055
    %v4120 = vmul.bf16 %v4104, %v4056
    %v4121 = vmul.bf16 %v4105, %v4057
    %v4122 = vmul.bf16 %v4106, %v4058
    %v4123 = vadd.bf16 %v4043, %v4107
    %v4124 = vadd.bf16 %v4044, %v4108
    %v4125 = vadd.bf16 %v4045, %v4109
    %v4126 = vadd.bf16 %v4046, %v4110
    %v4127 = vadd.bf16 %v4047, %v4111
    %v4128 = vadd.bf16 %v4048, %v4112
    %v4129 = vadd.bf16 %v4049, %v4113
    %v4130 = vadd.bf16 %v4050, %v4114
    %v4131 = vadd.bf16 %v4051, %v4115
    %v4132 = vadd.bf16 %v4052, %v4116
    %v4133 = vadd.bf16 %v4053, %v4117
    %v4134 = vadd.bf16 %v4054, %v4118
    %v4135 = vadd.bf16 %v4055, %v4119
    %v4136 = vadd.bf16 %v4056, %v4120
    %v4137 = vadd.bf16 %v4057, %v4121
    %v4138 = vadd.bf16 %v4058, %v4122
    %v4139 = vmul.bf16 %v4123, 1061961548
    %v4140 = vmul.bf16 %v4124, 1061961548
    %v4141 = vmul.bf16 %v4125, 1061961548
    %v4142 = vmul.bf16 %v4126, 1061961548
    %v4143 = vmul.bf16 %v4127, 1061961548
    %v4144 = vmul.bf16 %v4128, 1061961548
    %v4145 = vmul.bf16 %v4129, 1061961548
    %v4146 = vmul.bf16 %v4130, 1061961548
    %v4147 = vmul.bf16 %v4131, 1061961548
    %v4148 = vmul.bf16 %v4132, 1061961548
    %v4149 = vmul.bf16 %v4133, 1061961548
    %v4150 = vmul.bf16 %v4134, 1061961548
    %v4151 = vmul.bf16 %v4135, 1061961548
    %v4152 = vmul.bf16 %v4136, 1061961548
    %v4153 = vmul.bf16 %v4137, 1061961548
    %v4154 = vmul.bf16 %v4138, 1061961548
    %v4155 = vtanh.bf16.pop %v4139
    %v4156 = vtanh.bf16.pop %v4140
    %v4157 = vtanh.bf16.pop %v4141
    %v4158 = vtanh.bf16.pop %v4142
    %v4159 = vtanh.bf16.pop %v4143
    %v4160 = vtanh.bf16.pop %v4144
    %v4161 = vtanh.bf16.pop %v4145
    %v4162 = vtanh.bf16.pop %v4146
    %v4163 = vtanh.bf16.pop %v4147
    %v4164 = vtanh.bf16.pop %v4148
    %v4165 = vtanh.bf16.pop %v4149
    %v4166 = vtanh.bf16.pop %v4150
    %v4167 = vtanh.bf16.pop %v4151
    %v4168 = vtanh.bf16.pop %v4152
    %v4169 = vtanh.bf16.pop %v4153
    %v4170 = vtanh.bf16.pop %v4154
    %v4171 = vadd.bf16 %v4155, 1065369472
    %v4172 = vadd.bf16 %v4156, 1065369472
    %v4173 = vadd.bf16 %v4157, 1065369472
    %v4174 = vadd.bf16 %v4158, 1065369472
    %v4175 = vadd.bf16 %v4159, 1065369472
    %v4176 = vadd.bf16 %v4160, 1065369472
    %v4177 = vadd.bf16 %v4161, 1065369472
    %v4178 = vadd.bf16 %v4162, 1065369472
    %v4179 = vadd.bf16 %v4163, 1065369472
    %v4180 = vadd.bf16 %v4164, 1065369472
    %v4181 = vadd.bf16 %v4165, 1065369472
    %v4182 = vadd.bf16 %v4166, 1065369472
    %v4183 = vadd.bf16 %v4167, 1065369472
    %v4184 = vadd.bf16 %v4168, 1065369472
    %v4185 = vadd.bf16 %v4169, 1065369472
    %v4186 = vadd.bf16 %v4170, 1065369472
    %v4187 = vmul.bf16 %v4059, %v4171
    %v4188 = vmul.bf16 %v4060, %v4172
    %v4189 = vmul.bf16 %v4061, %v4173
    %v4190 = vmul.bf16 %v4062, %v4174
    %v4191 = vmul.bf16 %v4063, %v4175
    %v4192 = vmul.bf16 %v4064, %v4176
    %v4193 = vmul.bf16 %v4065, %v4177
    %v4194 = vmul.bf16 %v4066, %v4178
    %v4195 = vmul.bf16 %v4067, %v4179
    %v4196 = vmul.bf16 %v4068, %v4180
    %v4197 = vmul.bf16 %v4069, %v4181
    %v4198 = vmul.bf16 %v4070, %v4182
    %v4199 = vmul.bf16 %v4071, %v4183
    %v4200 = vmul.bf16 %v4072, %v4184
    %v4201 = vmul.bf16 %v4073, %v4185
    %v4202 = vmul.bf16 %v4074, %v4186
    %s4203 = scalar_lea.vmem %s3, 96
    %v4204 = vld [vmem:[%s4203] sm:$0xf]
    %v4205 = vld [vmem:[%s4203 + $0x4] sm:$0xf]
    %v4206 = vld [vmem:[%s4203 + $0x8] sm:$0xf]
    %v4207 = vld [vmem:[%s4203 + $0xc] sm:$0xf]
    %s4208 = scalar_lea.vmem %s4, 192
    %v4209 = vld [vmem:[%s4208] sm:$0xff]
    %v4210 = vld [vmem:[%s4208 + $0x8] sm:$0xff]
    %v4211 = vld [vmem:[%s4208 + $0x10] sm:$0xff]
    %v4212 = vld [vmem:[%s4208 + $0x18] sm:$0xff]
    %4214 = vset.pattern.permute.xlu0 0
    %4215 = vperm.xlu0 %4214, %v4209
    %v4216 = vpop.permute.xlu0 %4215
    %4219 = vset.pattern.permute.xlu0 0
    %4220 = vperm.xlu0 %4219, %v4210
    %v4221 = vpop.permute.xlu0 %4220
    %4224 = vset.pattern.permute.xlu0 0
    %4225 = vperm.xlu0 %4224, %v4211
    %v4226 = vpop.permute.xlu0 %4225
    %4229 = vset.pattern.permute.xlu0 0
    %4230 = vperm.xlu0 %4229, %v4212
    %v4231 = vpop.permute.xlu0 %4230
    %v4237 = vunpack.c.l.b16 %v4204
    %v4238 = vunpack.c.l.b16 %v4205
    %v4239 = vunpack.c.l.b16 %v4206
    %v4240 = vunpack.c.l.b16 %v4207
    %v4241 = vpack.c.b16 %v4238, %v4237
    %v4242 = vpack.c.b16 %v4240, %v4239
    %v4244 = vsel %vm1686, %v4241, 0
    %v4247 = vsel %vm1686, %v4242, 0
    %4249 = vmatprep.subr.bf16.mxu0 %v4188
    %4250 = vmatpush1.bf16.msra.mxu0 %v4187
    %4251 = vmatprep.subr.bf16.mxu0 %v4196
    %4252 = vmatpush1.bf16.msra.mxu0 %v4195
    %4253 = vmatprep.subr.bf16.mxu0 0
    %4254 = vmatpush1.bf16.msra.mxu0 0
    %4255 = vmatprep.subr.bf16.mxu0 0
    %4256 = vmatpush1.bf16.msra.mxu0 0
    %4257 = vmatprep.subr.bf16.mxu0 0
    %4258 = vmatpush1.bf16.msra.mxu0 0
    %4259 = vmatprep.subr.bf16.mxu0 0
    %4260 = vmatpush1.bf16.msra.mxu0 0
    %4261 = vmatprep.subr.bf16.mxu0 0
    %4262 = vmatpush1.bf16.msra.mxu0 0
    %4263 = vmatprep.subr.bf16.mxu0 0
    %4264 = vmatpush1.bf16.msra.mxu0 0
    %4265 = vmatprep.subr.bf16.mxu0 0
    %4266 = vmatpush1.bf16.msra.mxu0 0
    %4267 = vmatprep.subr.bf16.mxu0 0
    %4268 = vmatpush1.bf16.msra.mxu0 0
    %4269 = vmatprep.subr.bf16.mxu0 0
    %4270 = vmatpush1.bf16.msra.mxu0 0
    %4271 = vmatprep.subr.bf16.mxu0 0
    %4272 = vmatpush1.bf16.msra.mxu0 0
    %4273 = vmatprep.subr.bf16.mxu0 0
    %4274 = vmatpush1.bf16.msra.mxu0 0
    %4275 = vmatprep.subr.bf16.mxu0 0
    %4276 = vmatpush1.bf16.msra.mxu0 0
    %4277 = vmatprep.subr.bf16.mxu0 0
    %4278 = vmatpush1.bf16.msra.mxu0 0
    %4279 = vmatprep.subr.bf16.mxu0 0
    %4280 = vmatpush1.bf16.msra.mxu0 0
    %4281 = vmatprep.mubr.bf16.mxu0 0
    %4282 = vmatmul.mubr.bf16.gmra.mrb[0].mxu0 %v4244
    %v4283 = vpop.f32.mrb[0].mxu0
    %v4284 = vadd.f32 %v4216, %v4283
    %v4285 = vpop.f32.mrb[0].mxu0
    %v4286 = vadd.f32 %v4216, %v4285
    %v4287 = vpop.f32.mrb[0].mxu0
    %v4288 = vadd.f32 %v4221, %v4287
    %v4289 = vpop.f32.mrb[0].mxu0
    %v4290 = vadd.f32 %v4221, %v4289
    %4291 = vmatprep.mubr.bf16.mxu0 0
    %4292 = vmatmul.mubr.bf16.gmra.mrb[0].mxu0 %v4247
    %v4293 = vpop.f32.mrb[0].mxu0
    %v4294 = vadd.f32 %v4226, %v4293
    %v4295 = vpop.f32.mrb[0].mxu0
    %v4296 = vadd.f32 %v4226, %v4295
    %v4297 = vpop.f32.mrb[0].mxu0
    %v4298 = vadd.f32 %v4231, %v4297
    %v4299 = vpop.f32.mrb[0].mxu0
    %v4300 = vadd.f32 %v4231, %v4299
    %4301 = vdwg.mxu0
    %4302 = vmatprep.subr.bf16.mxu0 %v4190
    %4303 = vmatpush1.bf16.msra.mxu0 %v4189
    %4304 = vmatprep.subr.bf16.mxu0 %v4198
    %4305 = vmatpush1.bf16.msra.mxu0 %v4197
    %4306 = vmatprep.subr.bf16.mxu0 0
    %4307 = vmatpush1.bf16.msra.mxu0 0
    %4308 = vmatprep.subr.bf16.mxu0 0
    %4309 = vmatpush1.bf16.msra.mxu0 0
    %4310 = vmatprep.subr.bf16.mxu0 0
    %4311 = vmatpush1.bf16.msra.mxu0 0
    %4312 = vmatprep.subr.bf16.mxu0 0
    %4313 = vmatpush1.bf16.msra.mxu0 0
    %4314 = vmatprep.subr.bf16.mxu0 0
    %4315 = vmatpush1.bf16.msra.mxu0 0
    %4316 = vmatprep.subr.bf16.mxu0 0
    %4317 = vmatpush1.bf16.msra.mxu0 0
    %4318 = vmatprep.subr.bf16.mxu0 0
    %4319 = vmatpush1.bf16.msra.mxu0 0
    %4320 = vmatprep.subr.bf16.mxu0 0
    %4321 = vmatpush1.bf16.msra.mxu0 0
    %4322 = vmatprep.subr.bf16.mxu0 0
    %4323 = vmatpush1.bf16.msra.mxu0 0
    %4324 = vmatprep.subr.bf16.mxu0 0
    %4325 = vmatpush1.bf16.msra.mxu0 0
    %4326 = vmatprep.subr.bf16.mxu0 0
    %4327 = vmatpush1.bf16.msra.mxu0 0
    %4328 = vmatprep.subr.bf16.mxu0 0
    %4329 = vmatpush1.bf16.msra.mxu0 0
    %4330 = vmatprep.subr.bf16.mxu0 0
    %4331 = vmatpush1.bf16.msra.mxu0 0
    %4332 = vmatprep.subr.bf16.mxu0 0
    %4333 = vmatpush1.bf16.msra.mxu0 0
    %4334 = vmatprep.mubr.bf16.mxu0 0
    %4335 = vmatmul.mubr.bf16.gmra.mrb[0].mxu0 %v4244
    %v4336 = vpop.f32.mrb[0].mxu0
    %v4337 = vadd.f32 %v4216, %v4336
    %v4338 = vpop.f32.mrb[0].mxu0
    %v4339 = vadd.f32 %v4216, %v4338
    %v4340 = vpop.f32.mrb[0].mxu0
    %v4341 = vadd.f32 %v4221, %v4340
    %v4342 = vpop.f32.mrb[0].mxu0
    %v4343 = vadd.f32 %v4221, %v4342
    %4344 = vmatprep.mubr.bf16.mxu0 0
    %4345 = vmatmul.mubr.bf16.gmra.mrb[0].mxu0 %v4247
    %v4346 = vpop.f32.mrb[0].mxu0
    %v4347 = vadd.f32 %v4226, %v4346
    %v4348 = vpop.f32.mrb[0].mxu0
    %v4349 = vadd.f32 %v4226, %v4348
    %v4350 = vpop.f32.mrb[0].mxu0
    %v4351 = vadd.f32 %v4231, %v4350
    %v4352 = vpop.f32.mrb[0].mxu0
    %v4353 = vadd.f32 %v4231, %v4352
    %4354 = vdwg.mxu0
    %4355 = vmatprep.subr.bf16.mxu0 %v4192
    %4356 = vmatpush1.bf16.msra.mxu0 %v4191
    %4357 = vmatprep.subr.bf16.mxu0 %v4200
    %4358 = vmatpush1.bf16.msra.mxu0 %v4199
    %4359 = vmatprep.subr.bf16.mxu0 0
    %4360 = vmatpush1.bf16.msra.mxu0 0
    %4361 = vmatprep.subr.bf16.mxu0 0
    %4362 = vmatpush1.bf16.msra.mxu0 0
    %4363 = vmatprep.subr.bf16.mxu0 0
    %4364 = vmatpush1.bf16.msra.mxu0 0
    %4365 = vmatprep.subr.bf16.mxu0 0
    %4366 = vmatpush1.bf16.msra.mxu0 0
    %4367 = vmatprep.subr.bf16.mxu0 0
    %4368 = vmatpush1.bf16.msra.mxu0 0
    %4369 = vmatprep.subr.bf16.mxu0 0
    %4370 = vmatpush1.bf16.msra.mxu0 0
    %4371 = vmatprep.subr.bf16.mxu0 0
    %4372 = vmatpush1.bf16.msra.mxu0 0
    %4373 = vmatprep.subr.bf16.mxu0 0
    %4374 = vmatpush1.bf16.msra.mxu0 0
    %4375 = vmatprep.subr.bf16.mxu0 0
    %4376 = vmatpush1.bf16.msra.mxu0 0
    %4377 = vmatprep.subr.bf16.mxu0 0
    %4378 = vmatpush1.bf16.msra.mxu0 0
    %4379 = vmatprep.subr.bf16.mxu0 0
    %4380 = vmatpush1.bf16.msra.mxu0 0
    %4381 = vmatprep.subr.bf16.mxu0 0
    %4382 = vmatpush1.bf16.msra.mxu0 0
    %4383 = vmatprep.subr.bf16.mxu0 0
    %4384 = vmatpush1.bf16.msra.mxu0 0
    %4385 = vmatprep.subr.bf16.mxu0 0
    %4386 = vmatpush1.bf16.msra.mxu0 0
    %4387 = vmatprep.mubr.bf16.mxu0 0
    %4388 = vmatmul.mubr.bf16.gmra.mrb[0].mxu0 %v4244
    %v4389 = vpop.f32.mrb[0].mxu0
    %v4390 = vadd.f32 %v4216, %v4389
    %v4391 = vpop.f32.mrb[0].mxu0
    %v4392 = vadd.f32 %v4216, %v4391
    %v4393 = vpop.f32.mrb[0].mxu0
    %v4394 = vadd.f32 %v4221, %v4393
    %v4395 = vpop.f32.mrb[0].mxu0
    %v4396 = vadd.f32 %v4221, %v4395
    %4397 = vmatprep.mubr.bf16.mxu0 0
    %4398 = vmatmul.mubr.bf16.gmra.mrb[0].mxu0 %v4247
    %v4399 = vpop.f32.mrb[0].mxu0
    %v4400 = vadd.f32 %v4226, %v4399
    %v4401 = vpop.f32.mrb[0].mxu0
    %v4402 = vadd.f32 %v4226, %v4401
    %v4403 = vpop.f32.mrb[0].mxu0
    %v4404 = vadd.f32 %v4231, %v4403
    %v4405 = vpop.f32.mrb[0].mxu0
    %v4406 = vadd.f32 %v4231, %v4405
    %4407 = vdwg.mxu0
    %4408 = vmatprep.subr.bf16.mxu0 %v4194
    %4409 = vmatpush1.bf16.msra.mxu0 %v4193
    %4410 = vmatprep.subr.bf16.mxu0 %v4202
    %4411 = vmatpush1.bf16.msra.mxu0 %v4201
    %4412 = vmatprep.subr.bf16.mxu0 0
    %4413 = vmatpush1.bf16.msra.mxu0 0
    %4414 = vmatprep.subr.bf16.mxu0 0
    %4415 = vmatpush1.bf16.msra.mxu0 0
    %4416 = vmatprep.subr.bf16.mxu0 0
    %4417 = vmatpush1.bf16.msra.mxu0 0
    %4418 = vmatprep.subr.bf16.mxu0 0
    %4419 = vmatpush1.bf16.msra.mxu0 0
    %4420 = vmatprep.subr.bf16.mxu0 0
    %4421 = vmatpush1.bf16.msra.mxu0 0
    %4422 = vmatprep.subr.bf16.mxu0 0
    %4423 = vmatpush1.bf16.msra.mxu0 0
    %4424 = vmatprep.subr.bf16.mxu0 0
    %4425 = vmatpush1.bf16.msra.mxu0 0
    %4426 = vmatprep.subr.bf16.mxu0 0
    %4427 = vmatpush1.bf16.msra.mxu0 0
    %4428 = vmatprep.subr.bf16.mxu0 0
    %4429 = vmatpush1.bf16.msra.mxu0 0
    %4430 = vmatprep.subr.bf16.mxu0 0
    %4431 = vmatpush1.bf16.msra.mxu0 0
    %4432 = vmatprep.subr.bf16.mxu0 0
    %4433 = vmatpush1.bf16.msra.mxu0 0
    %4434 = vmatprep.subr.bf16.mxu0 0
    %4435 = vmatpush1.bf16.msra.mxu0 0
    %4436 = vmatprep.subr.bf16.mxu0 0
    %4437 = vmatpush1.bf16.msra.mxu0 0
    %4438 = vmatprep.subr.bf16.mxu0 0
    %4439 = vmatpush1.bf16.msra.mxu0 0
    %4440 = vmatprep.mubr.bf16.mxu0 0
    %4441 = vmatmul.mubr.bf16.gmra.mrb[0].mxu0 %v4244
    %v4442 = vpop.f32.mrb[0].mxu0
    %v4443 = vadd.f32 %v4216, %v4442
    %v4444 = vpop.f32.mrb[0].mxu0
    %v4445 = vadd.f32 %v4216, %v4444
    %v4446 = vpop.f32.mrb[0].mxu0
    %v4447 = vadd.f32 %v4221, %v4446
    %v4448 = vpop.f32.mrb[0].mxu0
    %v4449 = vadd.f32 %v4221, %v4448
    %4450 = vmatprep.mubr.bf16.mxu0 0
    %4451 = vmatmul.mubr.bf16.gmra.mrb[0].mxu0 %v4247
    %v4452 = vpop.f32.mrb[0].mxu0
    %v4453 = vadd.f32 %v4226, %v4452
    %v4454 = vpop.f32.mrb[0].mxu0
    %v4455 = vadd.f32 %v4226, %v4454
    %v4456 = vpop.f32.mrb[0].mxu0
    %v4457 = vadd.f32 %v4231, %v4456
    %v4458 = vpop.f32.mrb[0].mxu0
    %v4459 = vadd.f32 %v4231, %v4458
    %4460 = vdwg.mxu0
    %v4461 = vpack.c.bf16 %v4288, %v4284
    %v4462 = vpack.c.bf16 %v4290, %v4286
    %v4463 = vpack.c.bf16 %v4341, %v4337
    %v4464 = vpack.c.bf16 %v4343, %v4339
    %v4465 = vpack.c.bf16 %v4394, %v4390
    %v4466 = vpack.c.bf16 %v4396, %v4392
    %v4467 = vpack.c.bf16 %v4447, %v4443
    %v4468 = vpack.c.bf16 %v4449, %v4445
    %v4469 = vpack.c.bf16 %v4298, %v4294
    %v4470 = vpack.c.bf16 %v4300, %v4296
    %v4471 = vpack.c.bf16 %v4351, %v4347
    %v4472 = vpack.c.bf16 %v4353, %v4349
    %v4473 = vpack.c.bf16 %v4404, %v4400
    %v4474 = vpack.c.bf16 %v4406, %v4402
    %v4475 = vpack.c.bf16 %v4457, %v4453
    %v4476 = vpack.c.bf16 %v4459, %v4455
    %v4477 = vmul.bf16 %v4461, 1056980736
    %v4478 = vmul.bf16 %v4462, 1056980736
    %v4479 = vmul.bf16 %v4463, 1056980736
    %v4480 = vmul.bf16 %v4464, 1056980736
    %v4481 = vmul.bf16 %v4465, 1056980736
    %v4482 = vmul.bf16 %v4466, 1056980736
    %v4483 = vmul.bf16 %v4467, 1056980736
    %v4484 = vmul.bf16 %v4468, 1056980736
    %v4485 = vmul.bf16 %v4469, 1056980736
    %v4486 = vmul.bf16 %v4470, 1056980736
    %v4487 = vmul.bf16 %v4471, 1056980736
    %v4488 = vmul.bf16 %v4472, 1056980736
    %v4489 = vmul.bf16 %v4473, 1056980736
    %v4490 = vmul.bf16 %v4474, 1056980736
    %v4491 = vmul.bf16 %v4475, 1056980736
    %v4492 = vmul.bf16 %v4476, 1056980736
    %v4493 = vmul.bf16 %v4461, 1027030327
    %v4494 = vmul.bf16 %v4462, 1027030327
    %v4495 = vmul.bf16 %v4463, 1027030327
    %v4496 = vmul.bf16 %v4464, 1027030327
    %v4497 = vmul.bf16 %v4465, 1027030327
    %v4498 = vmul.bf16 %v4466, 1027030327
    %v4499 = vmul.bf16 %v4467, 1027030327
    %v4500 = vmul.bf16 %v4468, 1027030327
    %v4501 = vmul.bf16 %v4469, 1027030327
    %v4502 = vmul.bf16 %v4470, 1027030327
    %v4503 = vmul.bf16 %v4471, 1027030327
    %v4504 = vmul.bf16 %v4472, 1027030327
    %v4505 = vmul.bf16 %v4473, 1027030327
    %v4506 = vmul.bf16 %v4474, 1027030327
    %v4507 = vmul.bf16 %v4475, 1027030327
    %v4508 = vmul.bf16 %v4476, 1027030327
    %v4509 = vmul.bf16 %v4493, %v4461
    %v4510 = vmul.bf16 %v4494, %v4462
    %v4511 = vmul.bf16 %v4495, %v4463
    %v4512 = vmul.bf16 %v4496, %v4464
    %v4513 = vmul.bf16 %v4497, %v4465
    %v4514 = vmul.bf16 %v4498, %v4466
    %v4515 = vmul.bf16 %v4499, %v4467
    %v4516 = vmul.bf16 %v4500, %v4468
    %v4517 = vmul.bf16 %v4501, %v4469
    %v4518 = vmul.bf16 %v4502, %v4470
    %v4519 = vmul.bf16 %v4503, %v4471
    %v4520 = vmul.bf16 %v4504, %v4472
    %v4521 = vmul.bf16 %v4505, %v4473
    %v4522 = vmul.bf16 %v4506, %v4474
    %v4523 = vmul.bf16 %v4507, %v4475
    %v4524 = vmul.bf16 %v4508, %v4476
    %v4525 = vmul.bf16 %v4509, %v4461
    %v4526 = vmul.bf16 %v4510, %v4462
    %v4527 = vmul.bf16 %v4511, %v4463
    %v4528 = vmul.bf16 %v4512, %v4464
    %v4529 = vmul.bf16 %v4513, %v4465
    %v4530 = vmul.bf16 %v4514, %v4466
    %v4531 = vmul.bf16 %v4515, %v4467
    %v4532 = vmul.bf16 %v4516, %v4468
    %v4533 = vmul.bf16 %v4517, %v4469
    %v4534 = vmul.bf16 %v4518, %v4470
    %v4535 = vmul.bf16 %v4519, %v4471
    %v4536 = vmul.bf16 %v4520, %v4472
    %v4537 = vmul.bf16 %v4521, %v4473
    %v4538 = vmul.bf16 %v4522, %v4474
    %v4539 = vmul.bf16 %v4523, %v4475
    %v4540 = vmul.bf16 %v4524, %v4476
    %v4541 = vadd.bf16 %v4461, %v4525
    %v4542 = vadd.bf16 %v4462, %v4526
    %v4543 = vadd.bf16 %v4463, %v4527
    %v4544 = vadd.bf16 %v4464, %v4528
    %v4545 = vadd.bf16 %v4465, %v4529
    %v4546 = vadd.bf16 %v4466, %v4530
    %v4547 = vadd.bf16 %v4467, %v4531
    %v4548 = vadd.bf16 %v4468, %v4532
    %v4549 = vadd.bf16 %v4469, %v4533
    %v4550 = vadd.bf16 %v4470, %v4534
    %v4551 = vadd.bf16 %v4471, %v4535
    %v4552 = vadd.bf16 %v4472, %v4536
    %v4553 = vadd.bf16 %v4473, %v4537
    %v4554 = vadd.bf16 %v4474, %v4538
    %v4555 = vadd.bf16 %v4475, %v4539
    %v4556 = vadd.bf16 %v4476, %v4540
    %v4557 = vmul.bf16 %v4541, 1061961548
    %v4558 = vmul.bf16 %v4542, 1061961548
    %v4559 = vmul.bf16 %v4543, 1061961548
    %v4560 = vmul.bf16 %v4544, 1061961548
    %v4561 = vmul.bf16 %v4545, 1061961548
    %v4562 = vmul.bf16 %v4546, 1061961548
    %v4563 = vmul.bf16 %v4547, 1061961548
    %v4564 = vmul.bf16 %v4548, 1061961548
    %v4565 = vmul.bf16 %v4549, 1061961548
    %v4566 = vmul.bf16 %v4550, 1061961548
    %v4567 = vmul.bf16 %v4551, 1061961548
    %v4568 = vmul.bf16 %v4552, 1061961548
    %v4569 = vmul.bf16 %v4553, 1061961548
    %v4570 = vmul.bf16 %v4554, 1061961548
    %v4571 = vmul.bf16 %v4555, 1061961548
    %v4572 = vmul.bf16 %v4556, 1061961548
    %v4573 = vtanh.bf16.pop %v4557
    %v4574 = vtanh.bf16.pop %v4558
    %v4575 = vtanh.bf16.pop %v4559
    %v4576 = vtanh.bf16.pop %v4560
    %v4577 = vtanh.bf16.pop %v4561
    %v4578 = vtanh.bf16.pop %v4562
    %v4579 = vtanh.bf16.pop %v4563
    %v4580 = vtanh.bf16.pop %v4564
    %v4581 = vtanh.bf16.pop %v4565
    %v4582 = vtanh.bf16.pop %v4566
    %v4583 = vtanh.bf16.pop %v4567
    %v4584 = vtanh.bf16.pop %v4568
    %v4585 = vtanh.bf16.pop %v4569
    %v4586 = vtanh.bf16.pop %v4570
    %v4587 = vtanh.bf16.pop %v4571
    %v4588 = vtanh.bf16.pop %v4572
    %v4589 = vadd.bf16 %v4573, 1065369472
    %v4590 = vadd.bf16 %v4574, 1065369472
    %v4591 = vadd.bf16 %v4575, 1065369472
    %v4592 = vadd.bf16 %v4576, 1065369472
    %v4593 = vadd.bf16 %v4577, 1065369472
    %v4594 = vadd.bf16 %v4578, 1065369472
    %v4595 = vadd.bf16 %v4579, 1065369472
    %v4596 = vadd.bf16 %v4580, 1065369472
    %v4597 = vadd.bf16 %v4581, 1065369472
    %v4598 = vadd.bf16 %v4582, 1065369472
    %v4599 = vadd.bf16 %v4583, 1065369472
    %v4600 = vadd.bf16 %v4584, 1065369472
    %v4601 = vadd.bf16 %v4585, 1065369472
    %v4602 = vadd.bf16 %v4586, 1065369472
    %v4603 = vadd.bf16 %v4587, 1065369472
    %v4604 = vadd.bf16 %v4588, 1065369472
    %v4605 = vmul.bf16 %v4477, %v4589
    %v4606 = vmul.bf16 %v4478, %v4590
    %v4607 = vmul.bf16 %v4479, %v4591
    %v4608 = vmul.bf16 %v4480, %v4592
    %v4609 = vmul.bf16 %v4481, %v4593
    %v4610 = vmul.bf16 %v4482, %v4594
    %v4611 = vmul.bf16 %v4483, %v4595
    %v4612 = vmul.bf16 %v4484, %v4596
    %v4613 = vmul.bf16 %v4485, %v4597
    %v4614 = vmul.bf16 %v4486, %v4598
    %v4615 = vmul.bf16 %v4487, %v4599
    %v4616 = vmul.bf16 %v4488, %v4600
    %v4617 = vmul.bf16 %v4489, %v4601
    %v4618 = vmul.bf16 %v4490, %v4602
    %v4619 = vmul.bf16 %v4491, %v4603
    %v4620 = vmul.bf16 %v4492, %v4604
    %v4621 = vld [vmem:[%s5] sm:$0xf]
    %v4622 = vld [vmem:[%s6] sm:$0xff]
    %4624 = vset.pattern.permute.xlu0 0
    %4625 = vperm.xlu0 %4624, %v4622
    %v4626 = vpop.permute.xlu0 %4625
    %v4629 = vsel %vm1686, %v4621, 0
    %4631 = vmatprep.subr.bf16.mxu0 %v4606
    %4632 = vmatpush1.bf16.msra.mxu0 %v4605
    %4633 = vmatprep.subr.bf16.mxu0 %v4614
    %4634 = vmatpush1.bf16.msra.mxu0 %v4613
    %4635 = vmatprep.subr.bf16.mxu0 0
    %4636 = vmatpush1.bf16.msra.mxu0 0
    %4637 = vmatprep.subr.bf16.mxu0 0
    %4638 = vmatpush1.bf16.msra.mxu0 0
    %4639 = vmatprep.subr.bf16.mxu0 0
    %4640 = vmatpush1.bf16.msra.mxu0 0
    %4641 = vmatprep.subr.bf16.mxu0 0
    %4642 = vmatpush1.bf16.msra.mxu0 0
    %4643 = vmatprep.subr.bf16.mxu0 0
    %4644 = vmatpush1.bf16.msra.mxu0 0
    %4645 = vmatprep.subr.bf16.mxu0 0
    %4646 = vmatpush1.bf16.msra.mxu0 0
    %4647 = vmatprep.subr.bf16.mxu0 0
    %4648 = vmatpush1.bf16.msra.mxu0 0
    %4649 = vmatprep.subr.bf16.mxu0 0
    %4650 = vmatpush1.bf16.msra.mxu0 0
    %4651 = vmatprep.subr.bf16.mxu0 0
    %4652 = vmatpush1.bf16.msra.mxu0 0
    %4653 = vmatprep.subr.bf16.mxu0 0
    %4654 = vmatpush1.bf16.msra.mxu0 0
    %4655 = vmatprep.subr.bf16.mxu0 0
    %4656 = vmatpush1.bf16.msra.mxu0 0
    %4657 = vmatprep.subr.bf16.mxu0 0
    %4658 = vmatpush1.bf16.msra.mxu0 0
    %4659 = vmatprep.subr.bf16.mxu0 0
    %4660 = vmatpush1.bf16.msra.mxu0 0
    %4661 = vmatprep.subr.bf16.mxu0 0
    %4662 = vmatpush1.bf16.msra.mxu0 0
    %4663 = vmatprep.mubr.bf16.mxu0 0
    %4664 = vmatmul.mubr.bf16.gmra.mrb[0].mxu0 %v4629
    %v4665 = vpop.f32.mrb[0].mxu0
    %v4666 = vadd.f32 %v4626, %v4665
    %v4667 = vpop.f32.mrb[0].mxu0
    %v4668 = vadd.f32 %v4626, %v4667
    %v4669 = vpop.f32.mrb[0].mxu0
    %v4670 = vpop.f32.mrb[0].mxu0
    %4671 = vdwg.mxu0
    %4672 = vmatprep.subr.bf16.mxu0 %v4608
    %4673 = vmatpush1.bf16.msra.mxu0 %v4607
    %4674 = vmatprep.subr.bf16.mxu0 %v4616
    %4675 = vmatpush1.bf16.msra.mxu0 %v4615
    %4676 = vmatprep.subr.bf16.mxu0 0
    %4677 = vmatpush1.bf16.msra.mxu0 0
    %4678 = vmatprep.subr.bf16.mxu0 0
    %4679 = vmatpush1.bf16.msra.mxu0 0
    %4680 = vmatprep.subr.bf16.mxu0 0
    %4681 = vmatpush1.bf16.msra.mxu0 0
    %4682 = vmatprep.subr.bf16.mxu0 0
    %4683 = vmatpush1.bf16.msra.mxu0 0
    %4684 = vmatprep.subr.bf16.mxu0 0
    %4685 = vmatpush1.bf16.msra.mxu0 0
    %4686 = vmatprep.subr.bf16.mxu0 0
    %4687 = vmatpush1.bf16.msra.mxu0 0
    %4688 = vmatprep.subr.bf16.mxu0 0
    %4689 = vmatpush1.bf16.msra.mxu0 0
    %4690 = vmatprep.subr.bf16.mxu0 0
    %4691 = vmatpush1.bf16.msra.mxu0 0
    %4692 = vmatprep.subr.bf16.mxu0 0
    %4693 = vmatpush1.bf16.msra.mxu0 0
    %4694 = vmatprep.subr.bf16.mxu0 0
    %4695 = vmatpush1.bf16.msra.mxu0 0
    %4696 = vmatprep.subr.bf16.mxu0 0
    %4697 = vmatpush1.bf16.msra.mxu0 0
    %4698 = vmatprep.subr.bf16.mxu0 0
    %4699 = vmatpush1.bf16.msra.mxu0 0
    %4700 = vmatprep.subr.bf16.mxu0 0
    %4701 = vmatpush1.bf16.msra.mxu0 0
    %4702 = vmatprep.subr.bf16.mxu0 0
    %4703 = vmatpush1.bf16.msra.mxu0 0
    %4704 = vmatprep.mubr.bf16.mxu0 0
    %4705 = vmatmul.mubr.bf16.gmra.mrb[0].mxu0 %v4629
    %v4706 = vpop.f32.mrb[0].mxu0
    %v4707 = vadd.f32 %v4626, %v4706
    %v4708 = vpop.f32.mrb[0].mxu0
    %v4709 = vadd.f32 %v4626, %v4708
    %v4710 = vpop.f32.mrb[0].mxu0
    %v4711 = vpop.f32.mrb[0].mxu0
    %4712 = vdwg.mxu0
    %4713 = vmatprep.subr.bf16.mxu0 %v4610
    %4714 = vmatpush1.bf16.msra.mxu0 %v4609
    %4715 = vmatprep.subr.bf16.mxu0 %v4618
    %4716 = vmatpush1.bf16.msra.mxu0 %v4617
    %4717 = vmatprep.subr.bf16.mxu0 0
    %4718 = vmatpush1.bf16.msra.mxu0 0
    %4719 = vmatprep.subr.bf16.mxu0 0
    %4720 = vmatpush1.bf16.msra.mxu0 0
    %4721 = vmatprep.subr.bf16.mxu0 0
    %4722 = vmatpush1.bf16.msra.mxu0 0
    %4723 = vmatprep.subr.bf16.mxu0 0
    %4724 = vmatpush1.bf16.msra.mxu0 0
    %4725 = vmatprep.subr.bf16.mxu0 0
    %4726 = vmatpush1.bf16.msra.mxu0 0
    %4727 = vmatprep.subr.bf16.mxu0 0
    %4728 = vmatpush1.bf16.msra.mxu0 0
    %4729 = vmatprep.subr.bf16.mxu0 0
    %4730 = vmatpush1.bf16.msra.mxu0 0
    %4731 = vmatprep.subr.bf16.mxu0 0
    %4732 = vmatpush1.bf16.msra.mxu0 0
    %4733 = vmatprep.subr.bf16.mxu0 0
    %4734 = vmatpush1.bf16.msra.mxu0 0
    %4735 = vmatprep.subr.bf16.mxu0 0
    %4736 = vmatpush1.bf16.msra.mxu0 0
    %4737 = vmatprep.subr.bf16.mxu0 0
    %4738 = vmatpush1.bf16.msra.mxu0 0
    %4739 = vmatprep.subr.bf16.mxu0 0
    %4740 = vmatpush1.bf16.msra.mxu0 0
    %4741 = vmatprep.subr.bf16.mxu0 0
    %4742 = vmatpush1.bf16.msra.mxu0 0
    %4743 = vmatprep.subr.bf16.mxu0 0
    %4744 = vmatpush1.bf16.msra.mxu0 0
    %4745 = vmatprep.mubr.bf16.mxu0 0
    %4746 = vmatmul.mubr.bf16.gmra.mrb[0].mxu0 %v4629
    %v4747 = vpop.f32.mrb[0].mxu0
    %v4748 = vadd.f32 %v4626, %v4747
    %v4749 = vpop.f32.mrb[0].mxu0
    %v4750 = vadd.f32 %v4626, %v4749
    %v4751 = vpop.f32.mrb[0].mxu0
    %v4752 = vpop.f32.mrb[0].mxu0
    %4753 = vdwg.mxu0
    %4754 = vmatprep.subr.bf16.mxu0 %v4612
    %4755 = vmatpush1.bf16.msra.mxu0 %v4611
    %4756 = vmatprep.subr.bf16.mxu0 %v4620
    %4757 = vmatpush1.bf16.msra.mxu0 %v4619
    %4758 = vmatprep.subr.bf16.mxu0 0
    %4759 = vmatpush1.bf16.msra.mxu0 0
    %4760 = vmatprep.subr.bf16.mxu0 0
    %4761 = vmatpush1.bf16.msra.mxu0 0
    %4762 = vmatprep.subr.bf16.mxu0 0
    %4763 = vmatpush1.bf16.msra.mxu0 0
    %4764 = vmatprep.subr.bf16.mxu0 0
    %4765 = vmatpush1.bf16.msra.mxu0 0
    %4766 = vmatprep.subr.bf16.mxu0 0
    %4767 = vmatpush1.bf16.msra.mxu0 0
    %4768 = vmatprep.subr.bf16.mxu0 0
    %4769 = vmatpush1.bf16.msra.mxu0 0
    %4770 = vmatprep.subr.bf16.mxu0 0
    %4771 = vmatpush1.bf16.msra.mxu0 0
    %4772 = vmatprep.subr.bf16.mxu0 0
    %4773 = vmatpush1.bf16.msra.mxu0 0
    %4774 = vmatprep.subr.bf16.mxu0 0
    %4775 = vmatpush1.bf16.msra.mxu0 0
    %4776 = vmatprep.subr.bf16.mxu0 0
    %4777 = vmatpush1.bf16.msra.mxu0 0
    %4778 = vmatprep.subr.bf16.mxu0 0
    %4779 = vmatpush1.bf16.msra.mxu0 0
    %4780 = vmatprep.subr.bf16.mxu0 0
    %4781 = vmatpush1.bf16.msra.mxu0 0
    %4782 = vmatprep.subr.bf16.mxu0 0
    %4783 = vmatpush1.bf16.msra.mxu0 0
    %4784 = vmatprep.subr.bf16.mxu0 0
    %4785 = vmatpush1.bf16.msra.mxu0 0
    %4786 = vmatprep.mubr.bf16.mxu0 0
    %4787 = vmatmul.mubr.bf16.gmra.mrb[0].mxu0 %v4629
    %v4788 = vpop.f32.mrb[0].mxu0
    %v4789 = vadd.f32 %v4626, %v4788
    %v4790 = vpop.f32.mrb[0].mxu0
    %v4791 = vadd.f32 %v4626, %v4790
    %v4792 = vpop.f32.mrb[0].mxu0
    %v4793 = vpop.f32.mrb[0].mxu0
    %4794 = vdwg.mxu0
    %4795 = vst [vmem:[#allocation2] sm:$0xff] %v4666
    %4796 = vst [vmem:[#allocation2 + $0x8] sm:$0xff] %v4668
    %4797 = vst [vmem:[#allocation2 + $0x10] sm:$0xff] %v4707
    %4798 = vst [vmem:[#allocation2 + $0x18] sm:$0xff] %v4709
    %4799 = vst [vmem:[#allocation2 + $0x20] sm:$0xff] %v4748
    %4800 = vst [vmem:[#allocation2 + $0x28] sm:$0xff] %v4750
    %4801 = vst [vmem:[#allocation2 + $0x30] sm:$0xff] %v4789
    %4802 = vst [vmem:[#allocation2 + $0x38] sm:$0xff] %v4791
    // Predicated region
    $region30: #{tpu_custom_call.1} parent=1 // pred_check
      _
    $region31: #{tpu_custom_call.1} parent=1 // pred_check_branch
      %4804 = sbr.rel (0) target = $region33
    $region32: #{tpu_custom_call.1} parent=1 // pred_region
      %s4806 = ssub.s32 1024, 1024
      %4807 = vsyncadd [#allocation3], %s4806
      %s4809 = sshll.u32 [#allocation2], 4
      %s4810 = int_to_ptr.vmem [resolvable:$true] %s4809
      %4812 = dma.vmem_to_hbm [thread:$0]  %s4810, 1024, %s7, [#allocation3]
    $region33: #{tpu_custom_call.1} parent=1 // pred_fallthru
      _
    // Predicated region
    $region34: #{tpu_custom_call.1} parent=1 // pred_check
      _
    $region35: #{tpu_custom_call.1} parent=1 // pred_check_branch
      %4814 = sbr.rel (0) target = $region37
    $region36: #{tpu_custom_call.1} parent=1 // pred_region
      %4815 = dma.done [#allocation3], 1024
    $region37: #{tpu_custom_call.1} parent=1 // pred_fallthru
      _
    %4816 = vsyncpa [#allocation3], 1

</llo_original>
